<compile_context>
chip_gen: v6e
topology: v6e:2x2x1
jax: 0.10.0
libtpu: 0.0.40
codegen_flags: <defaults>
</compile_context>

<pallas_src>
import functools

import jax
import jax.numpy as jnp
from jax.experimental import pallas as pl
from jax.experimental.pallas import tpu as pltpu


# ------------------------------ Pallas kernel ------------------------------ #

def _deconv_matmul_kernel(w_ref, a_ref, b_ref, o_ref):
    # w_ref: (4*Cout, 4*K) bf16 block-diagonal per-phase weights
    # a_ref: (4*K, M)      bf16 stacked per-phase im2col patches
    # b_ref: (4*Cout, 1)   f32  bias, tiled per phase
    # o_ref: (4*Cout, M)   f32  rows p*Cout:(p+1)*Cout = phase p output
    acc = jnp.dot(w_ref[...], a_ref[...], preferred_element_type=jnp.float32)
    o_ref[...] = acc + b_ref[...]


def _deconv_matmul(w_blk, patches, bias_col):
    """Single-step, fully VMEM-resident (40,192)@(192,M) matmul + bias."""
    PC, K4 = w_blk.shape
    M = patches.shape[-1]
    flops = 2 * PC * K4 * M
    bytes_accessed = (w_blk.size * w_blk.dtype.itemsize
                      + patches.size * patches.dtype.itemsize
                      + bias_col.size * 4
                      + PC * M * 4)
    return pl.pallas_call(
        _deconv_matmul_kernel,
        out_shape=jax.ShapeDtypeStruct((PC, M), jnp.float32),
        in_specs=[
            pl.BlockSpec((PC, K4), lambda: (0, 0)),
            pl.BlockSpec((K4, M), lambda: (0, 0)),
            pl.BlockSpec((PC, 1), lambda: (0, 0)),
        ],
        out_specs=pl.BlockSpec((PC, M), lambda: (0, 0)),
        compiler_params=pltpu.CompilerParams(
            # Let XLA fuse the im2col producer into the patches operand (avoids
            # a separate HBM write+read of ~200 KB). Hint only; safe if ignored.
            allow_input_fusion=[False, True, False]),
        cost_estimate=pl.CostEstimate(
            flops=flops, transcendentals=0, bytes_accessed=bytes_accessed),
    )(w_blk, patches, bias_col)


# ------------------- one-time parameter preparation ------------------------ #

def prepare_deconv_params(weight, bias, *, stride=2, padding=3):
    """Hoisted weight prep (run once per parameter update, not per forward).

    weight: (Cin, Cout, KH, KW)  torch ConvTranspose2d layout
    bias:   (Cout,)
    Returns:
      w_blk    (stride^2*Cout, stride^2*K) bf16 block-diagonal phase weights
      bias_col (stride^2*Cout, 1)          f32
    """
    Cin, Cout, KH, KW = weight.shape
    assert stride == 2 and KH % 2 == 0 and KW % 2 == 0
    ph, pw = KH - 1 - padding, KW - 1 - padding
    assert ph >= 0 and pw >= 0 and ph % 2 == 0 and pw % 2 == 0
    KHh, KWh = KH // 2, KW // 2
    K = Cin * KHh * KWh

    w_flip = weight[:, :, ::-1, ::-1]                     # (Cin, Cout, KH, KW)
    w_list = []
    for r_h in range(2):
        for r_w in range(2):
            ws = w_flip[:, :, r_h::2, r_w::2]             # (Cin, Cout, KHh, KWh)
            w_list.append(ws.transpose(1, 0, 2, 3).reshape(Cout, K))
    w_blk = jax.scipy.linalg.block_diag(*w_list)          # (4*Cout, 4*K)
    bias_col = jnp.tile(bias, stride * stride).reshape(stride * stride * Cout, 1)
    return w_blk.astype(jnp.bfloat16), bias_col.astype(jnp.float32)


# --------------------------- forward (jitted) ------------------------------ #

def conv_transpose2d_forward(x, w_blk, bias_col, *, kh, kw, stride, padding):
    """PyTorch-equivalent ConvTranspose2d forward via stride-2 phase decomposition.

    x: (N, Cin, H, W) NCHW -> (N, Cout, OH, OW), OH = (H-1)*stride - 2*padding + kh
    """
    N, Cin, H, W = x.shape
    Cout = w_blk.shape[0] // (stride * stride)
    KHh, KWh = kh // stride, kw // stride
    K = Cin * KHh * KWh
    ph, pw = kh - 1 - padding, kw - 1 - padding

    OH = (H - 1) * stride - 2 * padding + kh
    OW = (W - 1) * stride - 2 * padding + kw
    OHh, OWh = OH // stride, OW // stride
    M = N * OHh * OWh

    # Pad so every phase/tap window is in bounds.
    pad_t, pad_l = ph // 2, pw // 2
    pad_b, pad_r = KHh - pad_t, KWh - pad_l
    x_pad = jnp.pad(x, ((0, 0), (0, 0), (pad_t, pad_b), (pad_l, pad_r)))
    # bf16 at the kernel boundary: halves patch DMA bytes; MXU accumulates in f32.
    x_pad = x_pad.astype(jnp.bfloat16)

    # Per-phase im2col, stacked along K -> (4*K, M). XLA layout glue (~10 KB src).
    patch_list = []
    for r_h in range(stride):
        for r_w in range(stride):
            taps = []
            for a in range(KHh):
                for b in range(KWh):
                    taps.append(
                        x_pad[:, :, r_h + a:r_h + a + OHh, r_w + b:r_w + b + OWh])
            t = jnp.stack(taps, axis=0)                   # (taps, N, Cin, OHh, OWh)
            t = t.transpose(2, 0, 1, 3, 4)                # (Cin, taps, N, OHh, OWh)
            patch_list.append(t.reshape(K, M))
    patches = jnp.concatenate(patch_list, axis=0)         # (4*K, M)

    # Single lane- and sublane-dense matmul + bias inside the Pallas kernel.
    out_t = _deconv_matmul(w_blk, patches, bias_col)      # (4*Cout, M) f32

    # Interleave the 4 phases back into NCHW.
    out = out_t.reshape(stride, stride, Cout, N, OHh, OWh)
    out = out.transpose(3, 2, 4, 0, 5, 1).reshape(N, Cout, OH, OW)
    return out


# ----------------------------------- main ---------------------------------- #

if __name__ == "__main__":
    key = jax.random.PRNGKey(0)
    kx, kw_key, kb_key = jax.random.split(key, 3)

    # Net(): nn.ConvTranspose2d(3, 10, 8, 2, 3)
    N, Cin, H, W = 2, 3, 16, 16
    Cout, KH, KW, stride, padding = 10, 8, 8, 2, 3

    x = jax.random.normal(kx, (N, Cin, H, W), dtype=jnp.float32)
    fan = Cin * KH * KW
    weight = jax.random.normal(kw_key, (Cin, Cout, KH, KW),
                               dtype=jnp.float32) / jnp.sqrt(fan)
    bias = jax.random.normal(kb_key, (Cout,), dtype=jnp.float32) * 0.1

    # One-time parameter preparation (hoisted out of the per-forward path).
    w_blk, bias_col = prepare_deconv_params(weight, bias,
                                            stride=stride, padding=padding)
    w_blk = jax.block_until_ready(w_blk)

    fwd = jax.jit(functools.partial(conv_transpose2d_forward,
                                    kh=KH, kw=KW, stride=stride, padding=padding))
    out = jax.block_until_ready(fwd(x, w_blk, bias_col))
    assert out.shape == (N, Cout, (H - 1) * stride - 2 * padding + KH,
                         (W - 1) * stride - 2 * padding + KW)

    # Cross-check against XLA's transposed-conv (lhs-dilated conv) reference.
    # Tolerance loosened for the bf16 operand cast (f32 accumulation retained).
    w_conv = weight[:, :, ::-1, ::-1].transpose(1, 0, 2, 3)  # (Cout, Cin, KH, KW)
    ref = jax.lax.conv_general_dilated(
        x, w_conv, window_strides=(1, 1),
        padding=[(KH - 1 - padding,) * 2, (KW - 1 - padding,) * 2],
        lhs_dilation=(stride, stride), rhs_dilation=(1, 1),
        dimension_numbers=("NCHW", "OIHW", "NCHW"),
    ) + bias.reshape(1, Cout, 1, 1)
    assert jnp.allclose(out, ref, atol=5e-2, rtol=5e-2), "mismatch vs reference"

    print("KERNEL_OK")
</pallas_src>

<mosaic_0001>
module attributes {stable_mosaic.version = 11 : i64} {
  func.func @_deconv_matmul_kernel(%arg0: memref<40x192xbf16, #tpu.memory_space<vmem>>, %arg1: memref<192x512xbf16, #tpu.memory_space<vmem>>, %arg2: memref<40x1xf32, #tpu.memory_space<vmem>>, %arg3: memref<40x512xf32, #tpu.memory_space<vmem>>) attributes {dimension_semantics = [], scalar_prefetch = 0 : i64, scratch_operands = 0 : i64, tpu.core_type = #tpu.core_type<tc>} {
    %c0 = arith.constant 0 : index
    %c0_0 = arith.constant 0 : index
    %0 = vector.load %arg0[%c0, %c0_0] : memref<40x192xbf16, #tpu.memory_space<vmem>>, vector<40x192xbf16>
    %c0_1 = arith.constant 0 : index
    %c0_2 = arith.constant 0 : index
    %1 = vector.load %arg1[%c0_1, %c0_2] : memref<192x512xbf16, #tpu.memory_space<vmem>>, vector<192x512xbf16>
    %cst = arith.constant dense<0.000000e+00> : vector<40x512xf32>
    %2 = tpu.matmul %0, %1, %cst {dimension_numbers = #tpu.dot_dimension_numbers<[1], [0], [0], [1], [0, 0, 1, 1], [], []>} : vector<40x192xbf16>, vector<192x512xbf16>, vector<40x512xf32> -> vector<40x512xf32>
    %c0_3 = arith.constant 0 : index
    %c0_4 = arith.constant 0 : index
    %3 = vector.load %arg2[%c0_3, %c0_4] : memref<40x1xf32, #tpu.memory_space<vmem>>, vector<40x1xf32>
    %4 = vector.broadcast %3 : vector<40x1xf32> to vector<40x512xf32>
    %5 = arith.addf %2, %4 : vector<40x512xf32>
    %c0_5 = arith.constant 0 : index
    %c0_6 = arith.constant 0 : index
    %6 = vector.load %arg3[%c0_5, %c0_6] : memref<40x512xf32, #tpu.memory_space<vmem>>, vector<40x512xf32>
    tpu.vector_store %arg3[%c0_5, %c0_6], %5 {strides = array<i32>} : memref<40x512xf32, #tpu.memory_space<vmem>>, vector<40x512xf32>,
    return
  }
}

</mosaic_0001>

<llo_original>
// kernel: conv_transpose2d_forward.2
$region0: #{conv_transpose2d_forward.2}
  #allocation0 [shape = 'u32[]', space=smem, size = 0x4, offset = 0x4, fixed_abs, tag = 'smem constant byte address 0x4 - core index']
  #allocation1 [shape = 'u32[144,128]{1,0:T(1,128)}', space=vmem, size = 0x12000, scoped, tag = 'internal scratch']
  #allocation2 [shape = 'u32[2048]{0}', space=vmem, size = 0x2000, scoped, tag = 'scoped memory for conv_transpose2d_forward.2']
  #allocation3 [shape = 'u32[2048]{0}', space=vmem, size = 0x2000, scoped, tag = 'scoped memory for conv_transpose2d_forward.2']
  #allocation4 [shape = 'u32[2048]{0}', space=vmem, size = 0x2000, scoped, tag = 'scoped memory for conv_transpose2d_forward.2']
  #allocation5 [shape = 'u32[2048]{0}', space=vmem, size = 0x2000, scoped, tag = 'scoped memory for conv_transpose2d_forward.2']
  #allocation6 [shape = 'u32[2048]{0}', space=vmem, size = 0x2000, scoped, tag = 'scoped memory for conv_transpose2d_forward.2']
  #allocation7 [shape = 'u32[2048]{0}', space=vmem, size = 0x2000, scoped, tag = 'scoped memory for conv_transpose2d_forward.2']
  #allocation8 [shape = 'u32[2048]{0}', space=vmem, size = 0x2000, scoped, tag = 'scoped memory for conv_transpose2d_forward.2']
  #allocation9 [shape = 'u32[2048]{0}', space=vmem, size = 0x2000, scoped, tag = 'scoped memory for conv_transpose2d_forward.2']
  #allocation10 [shape = 'u32[2048]{0}', space=vmem, size = 0x2000, scoped, tag = 'scoped memory for conv_transpose2d_forward.2']
  #allocation11 [shape = 'u32[2048]{0}', space=vmem, size = 0x2000, scoped, tag = 'scoped memory for conv_transpose2d_forward.2']
  #allocation12 [shape = 'u32[2048]{0}', space=vmem, size = 0x2000, scoped, tag = 'scoped memory for conv_transpose2d_forward.2']
  #allocation13 [shape = 'u32[2048]{0}', space=vmem, size = 0x2000, scoped, tag = 'scoped memory for conv_transpose2d_forward.2']
  #allocation14 [shape = 'u32[2048]{0}', space=vmem, size = 0x2000, scoped, tag = 'scoped memory for conv_transpose2d_forward.2']
  #allocation15 [shape = 'u32[2048]{0}', space=vmem, size = 0x2000, scoped, tag = 'scoped memory for conv_transpose2d_forward.2']
  #allocation16 [shape = 'u32[2048]{0}', space=vmem, size = 0x2000, scoped, tag = 'scoped memory for conv_transpose2d_forward.2']
  #allocation17 [shape = 'u32[2048]{0}', space=vmem, size = 0x2000, scoped, tag = 'scoped memory for conv_transpose2d_forward.2']
  #allocation18 [shape = 'u32[2048]{0}', space=vmem, size = 0x2000, scoped, tag = 'scoped memory for conv_transpose2d_forward.2']
  #allocation19 [shape = 'u32[2048]{0}', space=vmem, size = 0x2000, scoped, tag = 'scoped memory for conv_transpose2d_forward.2']
  #allocation20 [shape = 'u32[2048]{0}', space=vmem, size = 0x2000, scoped, tag = 'scoped memory for conv_transpose2d_forward.2']
  #allocation21 [shape = 'u32[2048]{0}', space=vmem, size = 0x2000, scoped, tag = 'scoped memory for conv_transpose2d_forward.2']
  %s0 = inlined_call_operand.vmem [shape: bf16[40,192], index: 0, kind: input, shape index: {}]
  %s1 = inlined_call_operand.vmem [shape: f32[40,1], index: 1, kind: input, shape index: {}]
  %s2 = inlined_call_operand.vmem [shape: bf16[48,512], index: 2, kind: input, shape index: {}]
  %s3 = inlined_call_operand.<no memory space> [shape: bf16[], index: 3, kind: input, shape index: {}]
  %s4 = inlined_call_operand.vmem [shape: bf16[48,512], index: 4, kind: input, shape index: {}]
  %s5 = inlined_call_operand.vmem [shape: bf16[48,512], index: 5, kind: input, shape index: {}]
  %s6 = inlined_call_operand.vmem [shape: bf16[48,512], index: 6, kind: input, shape index: {}]
  %s7 = inlined_call_operand.vmem [shape: f32[40,512], index: 7, kind: output, shape index: {}]
  %s8 = sld [smem:[#allocation0]]
  $region34: #{conv_transpose2d_forward.2} parent=0
    _
  %s10 = ssub.s32 1, %s8
  %s11 = scalar_select 0, %s10, %s8
  %v12 = vstv %s3
  %v13 = vunpack.i.l.bf16 %v12
  %v15 = vunpack.i.h.bf16 %v12
  %v17 = vstv %s3
  %v18 = vunpack.i.l.bf16 %v17
  %v20 = vunpack.i.h.bf16 %v17
  %v22 = vstv %s3
  %v23 = vunpack.i.l.bf16 %v22
  %v25 = vunpack.i.h.bf16 %v22
  %v27 = vstv %s3
  %v28 = vunpack.i.l.bf16 %v27
  %v30 = vunpack.i.h.bf16 %v27
  $region1: #{conv_transpose2d_forward.2} parent=0
    #allocation22 [shape = 'u8[196608]{0}', space=vmem, size = 0x30000, dematerialized = true, scoped, tag = 'FusionAdapter Buffer %fusion.1 = bf16[192,512]{1,0:T(8,128)(2,1)} fusion(%param_2.3, %param_3.2, %param_4.2, %param_5.3, %param_6.2), kind=kLoop, calls=%fused_computation.1.clone, metadata={op_name="jit(conv_transpose2d_forward)/concatenate" stack_frame_id=13}']
    // Predicated region
    $region2: #{conv_transpose2d_forward.2} parent=1 // pred_check
      _
    $region3: #{conv_transpose2d_forward.2} parent=1 // pred_check_branch
      %33 = sbr.rel (0) target = $region5
    $region4: #{conv_transpose2d_forward.2} parent=1 // pred_region
      _
    $region5: #{conv_transpose2d_forward.2} parent=1 // pred_fallthru
      _
    // Predicated region
    $region6: #{conv_transpose2d_forward.2} parent=1 // pred_check
      _
    $region7: #{conv_transpose2d_forward.2} parent=1 // pred_check_branch
      %35 = sbr.rel (0) target = $region9
    $region8: #{conv_transpose2d_forward.2} parent=1 // pred_region
      %s36 = scalar_lea.vmem %s2, 4294967008
    $region9: #{conv_transpose2d_forward.2} parent=1 // pred_fallthru
      _
    // Predicated region
    $region10: #{conv_transpose2d_forward.2} parent=1 // pred_check
      _
    $region11: #{conv_transpose2d_forward.2} parent=1 // pred_check_branch
      %38 = sbr.rel (0) target = $region13
    $region12: #{conv_transpose2d_forward.2} parent=1 // pred_region
      %s39 = scalar_lea.vmem %s4, 4294967104
    $region13: #{conv_transpose2d_forward.2} parent=1 // pred_fallthru
      _
    // Predicated region
    $region14: #{conv_transpose2d_forward.2} parent=1 // pred_check
      _
    $region15: #{conv_transpose2d_forward.2} parent=1 // pred_check_branch
      %41 = sbr.rel (0) target = $region17
    $region16: #{conv_transpose2d_forward.2} parent=1 // pred_region
      %s42 = scalar_lea.vmem %s5, 4294967200
    $region17: #{conv_transpose2d_forward.2} parent=1 // pred_fallthru
      _
    // Predicated region
    $region18: #{conv_transpose2d_forward.2} parent=1 // pred_check
      _
    $region19: #{conv_transpose2d_forward.2} parent=1 // pred_check_branch
      %44 = sbr.rel (0) target = $region21
    $region20: #{conv_transpose2d_forward.2} parent=1 // pred_region
      _
    $region21: #{conv_transpose2d_forward.2} parent=1 // pred_fallthru
      _
    // Predicated region
    $region22: #{conv_transpose2d_forward.2} parent=1 // pred_check
      _
    $region23: #{conv_transpose2d_forward.2} parent=1 // pred_check_branch
      %46 = sbr.rel (0) target = $region25
    $region24: #{conv_transpose2d_forward.2} parent=1 // pred_region
      _
    $region25: #{conv_transpose2d_forward.2} parent=1 // pred_fallthru
      _
    %s47 = scalar_lea.vmem %s2, 4294967008
    %s48 = scalar_lea.vmem %s4, 4294967104
    %s49 = scalar_lea.vmem %s5, 4294967200
    %s50 = scalar_lea.vmem %s2, 4294967008
    %s51 = scalar_lea.vmem %s4, 4294967104
    %s52 = scalar_lea.vmem %s5, 4294967200
    %s54 = sand.u32 0, 85
    %s55 = sshrl.u32 %s54, 1
    %s56 = sor.u32 %s54, %s55
    %s57 = sand.u32 51, %s56
    %s58 = sshrl.u32 %s57, 2
    %s59 = sor.u32 %s57, %s58
    %s60 = sand.u32 15, %s59
    %v61 = vld [vmem:[%s50] sm:%s60]
    %v62 = vunpack.c.l.bf16 %v61
    %v63 = vunpack.c.h.bf16 %v61
    %s65 = sand.u32 0, 85
    %s66 = sshrl.u32 %s65, 1
    %s67 = sor.u32 %s65, %s66
    %s68 = sand.u32 51, %s67
    %s69 = sshrl.u32 %s68, 2
    %s70 = sor.u32 %s68, %s69
    %s71 = sand.u32 15, %s70
    %v72 = vld [vmem:[%s51] sm:%s71]
    %v73 = vunpack.c.l.bf16 %v72
    %v74 = vunpack.c.h.bf16 %v72
    %s76 = sand.u32 0, 85
    %s77 = sshrl.u32 %s76, 1
    %s78 = sor.u32 %s76, %s77
    %s79 = sand.u32 51, %s78
    %s80 = sshrl.u32 %s79, 2
    %s81 = sor.u32 %s79, %s80
    %s82 = sand.u32 15, %s81
    %v83 = vld [vmem:[%s52] sm:%s82]
    %v84 = vunpack.c.l.bf16 %v83
    %v85 = vunpack.c.h.bf16 %v83
    %s87 = sor.u32 255, 127
    %s88 = sand.u32 %s87, 85
    %s89 = sshrl.u32 %s88, 1
    %s90 = sor.u32 %s88, %s89
    %s91 = sand.u32 51, %s90
    %s92 = sshrl.u32 %s91, 2
    %s93 = sor.u32 %s91, %s92
    %s94 = sand.u32 15, %s93
    %v95 = vld [vmem:[%s6] sm:%s94]
    %v96 = vunpack.c.l.bf16 %v95
    %v97 = vunpack.c.h.bf16 %v95
    %98 = xla_tuple %v96, %v23
    %99 = xla_tuple %98
    %v100 = vmax.f32 %v96, %v23
    %101 = xla_tuple %v100
    %102 = xla_tuple %v100, %v18
    %103 = xla_tuple %102
    %v104 = vmax.f32 %v100, %v18
    %105 = xla_tuple %v104
    %106 = xla_tuple %v104, %v13
    %107 = xla_tuple %106
    %v108 = vmax.f32 %v104, %v13
    %109 = xla_tuple %v108
    %v110 = vpack.c.bf16 0.0, %v108
    %s112 = ssub.s32 16, 1
    %113 = vst [vmem:[#allocation22] sm:%s112] %v110
    %s114 = scalar_lea.vmem %s50, 4
    %s116 = sand.u32 0, 85
    %s117 = sshrl.u32 %s116, 1
    %s118 = sor.u32 %s116, %s117
    %s119 = sand.u32 51, %s118
    %s120 = sshrl.u32 %s119, 2
    %s121 = sor.u32 %s119, %s120
    %s122 = sand.u32 15, %s121
    %v123 = vld [vmem:[%s114] sm:%s122]
    %v124 = vunpack.c.l.bf16 %v123
    %v125 = vunpack.c.h.bf16 %v123
    %s126 = scalar_lea.vmem %s51, 4
    %s128 = sand.u32 0, 85
    %s129 = sshrl.u32 %s128, 1
    %s130 = sor.u32 %s128, %s129
    %s131 = sand.u32 51, %s130
    %s132 = sshrl.u32 %s131, 2
    %s133 = sor.u32 %s131, %s132
    %s134 = sand.u32 15, %s133
    %v135 = vld [vmem:[%s126] sm:%s134]
    %v136 = vunpack.c.l.bf16 %v135
    %v137 = vunpack.c.h.bf16 %v135
    %s138 = scalar_lea.vmem %s52, 4
    %s140 = sand.u32 0, 85
    %s141 = sshrl.u32 %s140, 1
    %s142 = sor.u32 %s140, %s141
    %s143 = sand.u32 51, %s142
    %s144 = sshrl.u32 %s143, 2
    %s145 = sor.u32 %s143, %s144
    %s146 = sand.u32 15, %s145
    %v147 = vld [vmem:[%s138] sm:%s146]
    %v148 = vunpack.c.l.bf16 %v147
    %v149 = vunpack.c.h.bf16 %v147
    %s150 = scalar_lea.vmem %s6, 4
    %s152 = sor.u32 255, 127
    %s153 = sand.u32 %s152, 85
    %s154 = sshrl.u32 %s153, 1
    %s155 = sor.u32 %s153, %s154
    %s156 = sand.u32 51, %s155
    %s157 = sshrl.u32 %s156, 2
    %s158 = sor.u32 %s156, %s157
    %s159 = sand.u32 15, %s158
    %v160 = vld [vmem:[%s150] sm:%s159]
    %v161 = vunpack.c.l.bf16 %v160
    %v162 = vunpack.c.h.bf16 %v160
    %163 = xla_tuple %v161, %v23
    %164 = xla_tuple %163
    %v165 = vmax.f32 %v161, %v23
    %166 = xla_tuple %v165
    %167 = xla_tuple %v165, %v18
    %168 = xla_tuple %167
    %v169 = vmax.f32 %v165, %v18
    %170 = xla_tuple %v169
    %171 = xla_tuple %v169, %v13
    %172 = xla_tuple %171
    %v173 = vmax.f32 %v169, %v13
    %174 = xla_tuple %v173
    %s175 = scalar_lea.vmem [#allocation22], 4
    %v176 = vpack.c.bf16 0.0, %v173
    %s178 = ssub.s32 16, 1
    %179 = vst [vmem:[%s175] sm:%s178] %v176
    %s180 = scalar_lea.vmem %s50, 8
    %s182 = sand.u32 0, 85
    %s183 = sshrl.u32 %s182, 1
    %s184 = sor.u32 %s182, %s183
    %s185 = sand.u32 51, %s184
    %s186 = sshrl.u32 %s185, 2
    %s187 = sor.u32 %s185, %s186
    %s188 = sand.u32 15, %s187
    %v189 = vld [vmem:[%s180] sm:%s188]
    %v190 = vunpack.c.l.bf16 %v189
    %v191 = vunpack.c.h.bf16 %v189
    %s192 = scalar_lea.vmem %s51, 8
    %s194 = sand.u32 0, 85
    %s195 = sshrl.u32 %s194, 1
    %s196 = sor.u32 %s194, %s195
    %s197 = sand.u32 51, %s196
    %s198 = sshrl.u32 %s197, 2
    %s199 = sor.u32 %s197, %s198
    %s200 = sand.u32 15, %s199
    %v201 = vld [vmem:[%s192] sm:%s200]
    %v202 = vunpack.c.l.bf16 %v201
    %v203 = vunpack.c.h.bf16 %v201
    %s204 = scalar_lea.vmem %s52, 8
    %s206 = sand.u32 0, 85
    %s207 = sshrl.u32 %s206, 1
    %s208 = sor.u32 %s206, %s207
    %s209 = sand.u32 51, %s208
    %s210 = sshrl.u32 %s209, 2
    %s211 = sor.u32 %s209, %s210
    %s212 = sand.u32 15, %s211
    %v213 = vld [vmem:[%s204] sm:%s212]
    %v214 = vunpack.c.l.bf16 %v213
    %v215 = vunpack.c.h.bf16 %v213
    %s216 = scalar_lea.vmem %s6, 8
    %s218 = sor.u32 255, 127
    %s219 = sand.u32 %s218, 85
    %s220 = sshrl.u32 %s219, 1
    %s221 = sor.u32 %s219, %s220
    %s222 = sand.u32 51, %s221
    %s223 = sshrl.u32 %s222, 2
    %s224 = sor.u32 %s222, %s223
    %s225 = sand.u32 15, %s224
    %v226 = vld [vmem:[%s216] sm:%s225]
    %v227 = vunpack.c.l.bf16 %v226
    %v228 = vunpack.c.h.bf16 %v226
    %229 = xla_tuple %v227, %v23
    %230 = xla_tuple %229
    %v231 = vmax.f32 %v227, %v23
    %232 = xla_tuple %v231
    %233 = xla_tuple %v231, %v18
    %234 = xla_tuple %233
    %v235 = vmax.f32 %v231, %v18
    %236 = xla_tuple %v235
    %237 = xla_tuple %v235, %v13
    %238 = xla_tuple %237
    %v239 = vmax.f32 %v235, %v13
    %240 = xla_tuple %v239
    %s241 = scalar_lea.vmem [#allocation22], 8
    %v242 = vpack.c.bf16 0.0, %v239
    %s244 = ssub.s32 16, 1
    %245 = vst [vmem:[%s241] sm:%s244] %v242
    %s246 = scalar_lea.vmem %s50, 12
    %s248 = sand.u32 0, 85
    %s249 = sshrl.u32 %s248, 1
    %s250 = sor.u32 %s248, %s249
    %s251 = sand.u32 51, %s250
    %s252 = sshrl.u32 %s251, 2
    %s253 = sor.u32 %s251, %s252
    %s254 = sand.u32 15, %s253
    %v255 = vld [vmem:[%s246] sm:%s254]
    %v256 = vunpack.c.l.bf16 %v255
    %v257 = vunpack.c.h.bf16 %v255
    %s258 = scalar_lea.vmem %s51, 12
    %s260 = sand.u32 0, 85
    %s261 = sshrl.u32 %s260, 1
    %s262 = sor.u32 %s260, %s261
    %s263 = sand.u32 51, %s262
    %s264 = sshrl.u32 %s263, 2
    %s265 = sor.u32 %s263, %s264
    %s266 = sand.u32 15, %s265
    %v267 = vld [vmem:[%s258] sm:%s266]
    %v268 = vunpack.c.l.bf16 %v267
    %v269 = vunpack.c.h.bf16 %v267
    %s270 = scalar_lea.vmem %s52, 12
    %s272 = sand.u32 0, 85
    %s273 = sshrl.u32 %s272, 1
    %s274 = sor.u32 %s272, %s273
    %s275 = sand.u32 51, %s274
    %s276 = sshrl.u32 %s275, 2
    %s277 = sor.u32 %s275, %s276
    %s278 = sand.u32 15, %s277
    %v279 = vld [vmem:[%s270] sm:%s278]
    %v280 = vunpack.c.l.bf16 %v279
    %v281 = vunpack.c.h.bf16 %v279
    %s282 = scalar_lea.vmem %s6, 12
    %s284 = sor.u32 255, 127
    %s285 = sand.u32 %s284, 85
    %s286 = sshrl.u32 %s285, 1
    %s287 = sor.u32 %s285, %s286
    %s288 = sand.u32 51, %s287
    %s289 = sshrl.u32 %s288, 2
    %s290 = sor.u32 %s288, %s289
    %s291 = sand.u32 15, %s290
    %v292 = vld [vmem:[%s282] sm:%s291]
    %v293 = vunpack.c.l.bf16 %v292
    %v294 = vunpack.c.h.bf16 %v292
    %295 = xla_tuple %v293, %v23
    %296 = xla_tuple %295
    %v297 = vmax.f32 %v293, %v23
    %298 = xla_tuple %v297
    %299 = xla_tuple %v297, %v18
    %300 = xla_tuple %299
    %v301 = vmax.f32 %v297, %v18
    %302 = xla_tuple %v301
    %303 = xla_tuple %v301, %v13
    %304 = xla_tuple %303
    %v305 = vmax.f32 %v301, %v13
    %306 = xla_tuple %v305
    %s307 = scalar_lea.vmem [#allocation22], 12
    %v308 = vpack.c.bf16 0.0, %v305
    %s310 = ssub.s32 16, 1
    %311 = vst [vmem:[%s307] sm:%s310] %v308
    %s312 = scalar_lea.vmem %s50, 16
    %s314 = sand.u32 0, 85
    %s315 = sshrl.u32 %s314, 1
    %s316 = sor.u32 %s314, %s315
    %s317 = sand.u32 51, %s316
    %s318 = sshrl.u32 %s317, 2
    %s319 = sor.u32 %s317, %s318
    %s320 = sand.u32 15, %s319
    %v321 = vld [vmem:[%s312] sm:%s320]
    %v322 = vunpack.c.l.bf16 %v321
    %v323 = vunpack.c.h.bf16 %v321
    %s324 = scalar_lea.vmem %s51, 16
    %s326 = sand.u32 0, 85
    %s327 = sshrl.u32 %s326, 1
    %s328 = sor.u32 %s326, %s327
    %s329 = sand.u32 51, %s328
    %s330 = sshrl.u32 %s329, 2
    %s331 = sor.u32 %s329, %s330
    %s332 = sand.u32 15, %s331
    %v333 = vld [vmem:[%s324] sm:%s332]
    %v334 = vunpack.c.l.bf16 %v333
    %v335 = vunpack.c.h.bf16 %v333
    %s336 = scalar_lea.vmem %s52, 16
    %s338 = sand.u32 0, 85
    %s339 = sshrl.u32 %s338, 1
    %s340 = sor.u32 %s338, %s339
    %s341 = sand.u32 51, %s340
    %s342 = sshrl.u32 %s341, 2
    %s343 = sor.u32 %s341, %s342
    %s344 = sand.u32 15, %s343
    %v345 = vld [vmem:[%s336] sm:%s344]
    %v346 = vunpack.c.l.bf16 %v345
    %v347 = vunpack.c.h.bf16 %v345
    %s348 = scalar_lea.vmem %s6, 16
    %s350 = sor.u32 255, 127
    %s351 = sand.u32 %s350, 85
    %s352 = sshrl.u32 %s351, 1
    %s353 = sor.u32 %s351, %s352
    %s354 = sand.u32 51, %s353
    %s355 = sshrl.u32 %s354, 2
    %s356 = sor.u32 %s354, %s355
    %s357 = sand.u32 15, %s356
    %v358 = vld [vmem:[%s348] sm:%s357]
    %v359 = vunpack.c.l.bf16 %v358
    %v360 = vunpack.c.h.bf16 %v358
    %361 = xla_tuple %v359, %v23
    %362 = xla_tuple %361
    %v363 = vmax.f32 %v359, %v23
    %364 = xla_tuple %v363
    %365 = xla_tuple %v363, %v18
    %366 = xla_tuple %365
    %v367 = vmax.f32 %v363, %v18
    %368 = xla_tuple %v367
    %369 = xla_tuple %v367, %v13
    %370 = xla_tuple %369
    %v371 = vmax.f32 %v367, %v13
    %372 = xla_tuple %v371
    %s373 = scalar_lea.vmem [#allocation22], 16
    %v374 = vpack.c.bf16 0.0, %v371
    %s376 = ssub.s32 16, 1
    %377 = vst [vmem:[%s373] sm:%s376] %v374
    %s378 = scalar_lea.vmem %s50, 20
    %s380 = sand.u32 0, 85
    %s381 = sshrl.u32 %s380, 1
    %s382 = sor.u32 %s380, %s381
    %s383 = sand.u32 51, %s382
    %s384 = sshrl.u32 %s383, 2
    %s385 = sor.u32 %s383, %s384
    %s386 = sand.u32 15, %s385
    %v387 = vld [vmem:[%s378] sm:%s386]
    %v388 = vunpack.c.l.bf16 %v387
    %v389 = vunpack.c.h.bf16 %v387
    %s390 = scalar_lea.vmem %s51, 20
    %s392 = sand.u32 0, 85
    %s393 = sshrl.u32 %s392, 1
    %s394 = sor.u32 %s392, %s393
    %s395 = sand.u32 51, %s394
    %s396 = sshrl.u32 %s395, 2
    %s397 = sor.u32 %s395, %s396
    %s398 = sand.u32 15, %s397
    %v399 = vld [vmem:[%s390] sm:%s398]
    %v400 = vunpack.c.l.bf16 %v399
    %v401 = vunpack.c.h.bf16 %v399
    %s402 = scalar_lea.vmem %s52, 20
    %s404 = sand.u32 0, 85
    %s405 = sshrl.u32 %s404, 1
    %s406 = sor.u32 %s404, %s405
    %s407 = sand.u32 51, %s406
    %s408 = sshrl.u32 %s407, 2
    %s409 = sor.u32 %s407, %s408
    %s410 = sand.u32 15, %s409
    %v411 = vld [vmem:[%s402] sm:%s410]
    %v412 = vunpack.c.l.bf16 %v411
    %v413 = vunpack.c.h.bf16 %v411
    %s414 = scalar_lea.vmem %s6, 20
    %s416 = sor.u32 255, 127
    %s417 = sand.u32 %s416, 85
    %s418 = sshrl.u32 %s417, 1
    %s419 = sor.u32 %s417, %s418
    %s420 = sand.u32 51, %s419
    %s421 = sshrl.u32 %s420, 2
    %s422 = sor.u32 %s420, %s421
    %s423 = sand.u32 15, %s422
    %v424 = vld [vmem:[%s414] sm:%s423]
    %v425 = vunpack.c.l.bf16 %v424
    %v426 = vunpack.c.h.bf16 %v424
    %427 = xla_tuple %v425, %v23
    %428 = xla_tuple %427
    %v429 = vmax.f32 %v425, %v23
    %430 = xla_tuple %v429
    %431 = xla_tuple %v429, %v18
    %432 = xla_tuple %431
    %v433 = vmax.f32 %v429, %v18
    %434 = xla_tuple %v433
    %435 = xla_tuple %v433, %v13
    %436 = xla_tuple %435
    %v437 = vmax.f32 %v433, %v13
    %438 = xla_tuple %v437
    %s439 = scalar_lea.vmem [#allocation22], 20
    %v440 = vpack.c.bf16 0.0, %v437
    %s442 = ssub.s32 16, 1
    %443 = vst [vmem:[%s439] sm:%s442] %v440
    %s444 = scalar_lea.vmem %s50, 24
    %s446 = sand.u32 0, 85
    %s447 = sshrl.u32 %s446, 1
    %s448 = sor.u32 %s446, %s447
    %s449 = sand.u32 51, %s448
    %s450 = sshrl.u32 %s449, 2
    %s451 = sor.u32 %s449, %s450
    %s452 = sand.u32 15, %s451
    %v453 = vld [vmem:[%s444] sm:%s452]
    %v454 = vunpack.c.l.bf16 %v453
    %v455 = vunpack.c.h.bf16 %v453
    %s456 = scalar_lea.vmem %s51, 24
    %s458 = sand.u32 0, 85
    %s459 = sshrl.u32 %s458, 1
    %s460 = sor.u32 %s458, %s459
    %s461 = sand.u32 51, %s460
    %s462 = sshrl.u32 %s461, 2
    %s463 = sor.u32 %s461, %s462
    %s464 = sand.u32 15, %s463
    %v465 = vld [vmem:[%s456] sm:%s464]
    %v466 = vunpack.c.l.bf16 %v465
    %v467 = vunpack.c.h.bf16 %v465
    %s468 = scalar_lea.vmem %s52, 24
    %s470 = sand.u32 0, 85
    %s471 = sshrl.u32 %s470, 1
    %s472 = sor.u32 %s470, %s471
    %s473 = sand.u32 51, %s472
    %s474 = sshrl.u32 %s473, 2
    %s475 = sor.u32 %s473, %s474
    %s476 = sand.u32 15, %s475
    %v477 = vld [vmem:[%s468] sm:%s476]
    %v478 = vunpack.c.l.bf16 %v477
    %v479 = vunpack.c.h.bf16 %v477
    %s480 = scalar_lea.vmem %s6, 24
    %s482 = sor.u32 255, 127
    %s483 = sand.u32 %s482, 85
    %s484 = sshrl.u32 %s483, 1
    %s485 = sor.u32 %s483, %s484
    %s486 = sand.u32 51, %s485
    %s487 = sshrl.u32 %s486, 2
    %s488 = sor.u32 %s486, %s487
    %s489 = sand.u32 15, %s488
    %v490 = vld [vmem:[%s480] sm:%s489]
    %v491 = vunpack.c.l.bf16 %v490
    %v492 = vunpack.c.h.bf16 %v490
    %493 = xla_tuple %v491, %v23
    %494 = xla_tuple %493
    %v495 = vmax.f32 %v491, %v23
    %496 = xla_tuple %v495
    %497 = xla_tuple %v495, %v18
    %498 = xla_tuple %497
    %v499 = vmax.f32 %v495, %v18
    %500 = xla_tuple %v499
    %501 = xla_tuple %v499, %v13
    %502 = xla_tuple %501
    %v503 = vmax.f32 %v499, %v13
    %504 = xla_tuple %v503
    %s505 = scalar_lea.vmem [#allocation22], 24
    %v506 = vpack.c.bf16 0.0, %v503
    %s508 = ssub.s32 16, 1
    %509 = vst [vmem:[%s505] sm:%s508] %v506
    %s510 = scalar_lea.vmem %s50, 28
    %s512 = sand.u32 0, 85
    %s513 = sshrl.u32 %s512, 1
    %s514 = sor.u32 %s512, %s513
    %s515 = sand.u32 51, %s514
    %s516 = sshrl.u32 %s515, 2
    %s517 = sor.u32 %s515, %s516
    %s518 = sand.u32 15, %s517
    %v519 = vld [vmem:[%s510] sm:%s518]
    %v520 = vunpack.c.l.bf16 %v519
    %v521 = vunpack.c.h.bf16 %v519
    %s522 = scalar_lea.vmem %s51, 28
    %s524 = sand.u32 0, 85
    %s525 = sshrl.u32 %s524, 1
    %s526 = sor.u32 %s524, %s525
    %s527 = sand.u32 51, %s526
    %s528 = sshrl.u32 %s527, 2
    %s529 = sor.u32 %s527, %s528
    %s530 = sand.u32 15, %s529
    %v531 = vld [vmem:[%s522] sm:%s530]
    %v532 = vunpack.c.l.bf16 %v531
    %v533 = vunpack.c.h.bf16 %v531
    %s534 = scalar_lea.vmem %s52, 28
    %s536 = sand.u32 0, 85
    %s537 = sshrl.u32 %s536, 1
    %s538 = sor.u32 %s536, %s537
    %s539 = sand.u32 51, %s538
    %s540 = sshrl.u32 %s539, 2
    %s541 = sor.u32 %s539, %s540
    %s542 = sand.u32 15, %s541
    %v543 = vld [vmem:[%s534] sm:%s542]
    %v544 = vunpack.c.l.bf16 %v543
    %v545 = vunpack.c.h.bf16 %v543
    %s546 = scalar_lea.vmem %s6, 28
    %s548 = sor.u32 255, 127
    %s549 = sand.u32 %s548, 85
    %s550 = sshrl.u32 %s549, 1
    %s551 = sor.u32 %s549, %s550
    %s552 = sand.u32 51, %s551
    %s553 = sshrl.u32 %s552, 2
    %s554 = sor.u32 %s552, %s553
    %s555 = sand.u32 15, %s554
    %v556 = vld [vmem:[%s546] sm:%s555]
    %v557 = vunpack.c.l.bf16 %v556
    %v558 = vunpack.c.h.bf16 %v556
    %559 = xla_tuple %v557, %v23
    %560 = xla_tuple %559
    %v561 = vmax.f32 %v557, %v23
    %562 = xla_tuple %v561
    %563 = xla_tuple %v561, %v18
    %564 = xla_tuple %563
    %v565 = vmax.f32 %v561, %v18
    %566 = xla_tuple %v565
    %567 = xla_tuple %v565, %v13
    %568 = xla_tuple %567
    %v569 = vmax.f32 %v565, %v13
    %570 = xla_tuple %v569
    %s571 = scalar_lea.vmem [#allocation22], 28
    %v572 = vpack.c.bf16 0.0, %v569
    %s574 = ssub.s32 16, 1
    %575 = vst [vmem:[%s571] sm:%s574] %v572
    %s576 = scalar_lea.vmem %s50, 32
    %s578 = sand.u32 0, 85
    %s579 = sshrl.u32 %s578, 1
    %s580 = sor.u32 %s578, %s579
    %s581 = sand.u32 51, %s580
    %s582 = sshrl.u32 %s581, 2
    %s583 = sor.u32 %s581, %s582
    %s584 = sand.u32 15, %s583
    %v585 = vld [vmem:[%s576] sm:%s584]
    %v586 = vunpack.c.l.bf16 %v585
    %v587 = vunpack.c.h.bf16 %v585
    %s588 = scalar_lea.vmem %s51, 32
    %s590 = sand.u32 0, 85
    %s591 = sshrl.u32 %s590, 1
    %s592 = sor.u32 %s590, %s591
    %s593 = sand.u32 51, %s592
    %s594 = sshrl.u32 %s593, 2
    %s595 = sor.u32 %s593, %s594
    %s596 = sand.u32 15, %s595
    %v597 = vld [vmem:[%s588] sm:%s596]
    %v598 = vunpack.c.l.bf16 %v597
    %v599 = vunpack.c.h.bf16 %v597
    %s600 = scalar_lea.vmem %s52, 32
    %s602 = sand.u32 0, 85
    %s603 = sshrl.u32 %s602, 1
    %s604 = sor.u32 %s602, %s603
    %s605 = sand.u32 51, %s604
    %s606 = sshrl.u32 %s605, 2
    %s607 = sor.u32 %s605, %s606
    %s608 = sand.u32 15, %s607
    %v609 = vld [vmem:[%s600] sm:%s608]
    %v610 = vunpack.c.l.bf16 %v609
    %v611 = vunpack.c.h.bf16 %v609
    %s612 = scalar_lea.vmem %s6, 32
    %s614 = sor.u32 255, 127
    %s615 = sand.u32 %s614, 85
    %s616 = sshrl.u32 %s615, 1
    %s617 = sor.u32 %s615, %s616
    %s618 = sand.u32 51, %s617
    %s619 = sshrl.u32 %s618, 2
    %s620 = sor.u32 %s618, %s619
    %s621 = sand.u32 15, %s620
    %v622 = vld [vmem:[%s612] sm:%s621]
    %v623 = vunpack.c.l.bf16 %v622
    %v624 = vunpack.c.h.bf16 %v622
    %625 = xla_tuple %v623, %v23
    %626 = xla_tuple %625
    %v627 = vmax.f32 %v623, %v23
    %628 = xla_tuple %v627
    %629 = xla_tuple %v627, %v18
    %630 = xla_tuple %629
    %v631 = vmax.f32 %v627, %v18
    %632 = xla_tuple %v631
    %633 = xla_tuple %v631, %v13
    %634 = xla_tuple %633
    %v635 = vmax.f32 %v631, %v13
    %636 = xla_tuple %v635
    %s637 = scalar_lea.vmem [#allocation22], 32
    %v638 = vpack.c.bf16 0.0, %v635
    %s640 = ssub.s32 16, 1
    %641 = vst [vmem:[%s637] sm:%s640] %v638
    %s642 = scalar_lea.vmem %s50, 36
    %s644 = sand.u32 0, 85
    %s645 = sshrl.u32 %s644, 1
    %s646 = sor.u32 %s644, %s645
    %s647 = sand.u32 51, %s646
    %s648 = sshrl.u32 %s647, 2
    %s649 = sor.u32 %s647, %s648
    %s650 = sand.u32 15, %s649
    %v651 = vld [vmem:[%s642] sm:%s650]
    %v652 = vunpack.c.l.bf16 %v651
    %v653 = vunpack.c.h.bf16 %v651
    %s654 = scalar_lea.vmem %s51, 36
    %s656 = sand.u32 0, 85
    %s657 = sshrl.u32 %s656, 1
    %s658 = sor.u32 %s656, %s657
    %s659 = sand.u32 51, %s658
    %s660 = sshrl.u32 %s659, 2
    %s661 = sor.u32 %s659, %s660
    %s662 = sand.u32 15, %s661
    %v663 = vld [vmem:[%s654] sm:%s662]
    %v664 = vunpack.c.l.bf16 %v663
    %v665 = vunpack.c.h.bf16 %v663
    %s666 = scalar_lea.vmem %s52, 36
    %s668 = sand.u32 0, 85
    %s669 = sshrl.u32 %s668, 1
    %s670 = sor.u32 %s668, %s669
    %s671 = sand.u32 51, %s670
    %s672 = sshrl.u32 %s671, 2
    %s673 = sor.u32 %s671, %s672
    %s674 = sand.u32 15, %s673
    %v675 = vld [vmem:[%s666] sm:%s674]
    %v676 = vunpack.c.l.bf16 %v675
    %v677 = vunpack.c.h.bf16 %v675
    %s678 = scalar_lea.vmem %s6, 36
    %s680 = sor.u32 255, 127
    %s681 = sand.u32 %s680, 85
    %s682 = sshrl.u32 %s681, 1
    %s683 = sor.u32 %s681, %s682
    %s684 = sand.u32 51, %s683
    %s685 = sshrl.u32 %s684, 2
    %s686 = sor.u32 %s684, %s685
    %s687 = sand.u32 15, %s686
    %v688 = vld [vmem:[%s678] sm:%s687]
    %v689 = vunpack.c.l.bf16 %v688
    %v690 = vunpack.c.h.bf16 %v688
    %691 = xla_tuple %v689, %v23
    %692 = xla_tuple %691
    %v693 = vmax.f32 %v689, %v23
    %694 = xla_tuple %v693
    %695 = xla_tuple %v693, %v18
    %696 = xla_tuple %695
    %v697 = vmax.f32 %v693, %v18
    %698 = xla_tuple %v697
    %699 = xla_tuple %v697, %v13
    %700 = xla_tuple %699
    %v701 = vmax.f32 %v697, %v13
    %702 = xla_tuple %v701
    %s703 = scalar_lea.vmem [#allocation22], 36
    %v704 = vpack.c.bf16 0.0, %v701
    %s706 = ssub.s32 16, 1
    %707 = vst [vmem:[%s703] sm:%s706] %v704
    %s708 = scalar_lea.vmem %s50, 40
    %s710 = sand.u32 0, 85
    %s711 = sshrl.u32 %s710, 1
    %s712 = sor.u32 %s710, %s711
    %s713 = sand.u32 51, %s712
    %s714 = sshrl.u32 %s713, 2
    %s715 = sor.u32 %s713, %s714
    %s716 = sand.u32 15, %s715
    %v717 = vld [vmem:[%s708] sm:%s716]
    %v718 = vunpack.c.l.bf16 %v717
    %v719 = vunpack.c.h.bf16 %v717
    %s720 = scalar_lea.vmem %s51, 40
    %s722 = sand.u32 0, 85
    %s723 = sshrl.u32 %s722, 1
    %s724 = sor.u32 %s722, %s723
    %s725 = sand.u32 51, %s724
    %s726 = sshrl.u32 %s725, 2
    %s727 = sor.u32 %s725, %s726
    %s728 = sand.u32 15, %s727
    %v729 = vld [vmem:[%s720] sm:%s728]
    %v730 = vunpack.c.l.bf16 %v729
    %v731 = vunpack.c.h.bf16 %v729
    %s732 = scalar_lea.vmem %s52, 40
    %s734 = sand.u32 0, 85
    %s735 = sshrl.u32 %s734, 1
    %s736 = sor.u32 %s734, %s735
    %s737 = sand.u32 51, %s736
    %s738 = sshrl.u32 %s737, 2
    %s739 = sor.u32 %s737, %s738
    %s740 = sand.u32 15, %s739
    %v741 = vld [vmem:[%s732] sm:%s740]
    %v742 = vunpack.c.l.bf16 %v741
    %v743 = vunpack.c.h.bf16 %v741
    %s744 = scalar_lea.vmem %s6, 40
    %s746 = sor.u32 255, 127
    %s747 = sand.u32 %s746, 85
    %s748 = sshrl.u32 %s747, 1
    %s749 = sor.u32 %s747, %s748
    %s750 = sand.u32 51, %s749
    %s751 = sshrl.u32 %s750, 2
    %s752 = sor.u32 %s750, %s751
    %s753 = sand.u32 15, %s752
    %v754 = vld [vmem:[%s744] sm:%s753]
    %v755 = vunpack.c.l.bf16 %v754
    %v756 = vunpack.c.h.bf16 %v754
    %757 = xla_tuple %v755, %v23
    %758 = xla_tuple %757
    %v759 = vmax.f32 %v755, %v23
    %760 = xla_tuple %v759
    %761 = xla_tuple %v759, %v18
    %762 = xla_tuple %761
    %v763 = vmax.f32 %v759, %v18
    %764 = xla_tuple %v763
    %765 = xla_tuple %v763, %v13
    %766 = xla_tuple %765
    %v767 = vmax.f32 %v763, %v13
    %768 = xla_tuple %v767
    %s769 = scalar_lea.vmem [#allocation22], 40
    %v770 = vpack.c.bf16 0.0, %v767
    %s772 = ssub.s32 16, 1
    %773 = vst [vmem:[%s769] sm:%s772] %v770
    %s774 = scalar_lea.vmem %s50, 44
    %s776 = sand.u32 0, 85
    %s777 = sshrl.u32 %s776, 1
    %s778 = sor.u32 %s776, %s777
    %s779 = sand.u32 51, %s778
    %s780 = sshrl.u32 %s779, 2
    %s781 = sor.u32 %s779, %s780
    %s782 = sand.u32 15, %s781
    %v783 = vld [vmem:[%s774] sm:%s782]
    %v784 = vunpack.c.l.bf16 %v783
    %v785 = vunpack.c.h.bf16 %v783
    %s786 = scalar_lea.vmem %s51, 44
    %s788 = sand.u32 0, 85
    %s789 = sshrl.u32 %s788, 1
    %s790 = sor.u32 %s788, %s789
    %s791 = sand.u32 51, %s790
    %s792 = sshrl.u32 %s791, 2
    %s793 = sor.u32 %s791, %s792
    %s794 = sand.u32 15, %s793
    %v795 = vld [vmem:[%s786] sm:%s794]
    %v796 = vunpack.c.l.bf16 %v795
    %v797 = vunpack.c.h.bf16 %v795
    %s798 = scalar_lea.vmem %s52, 44
    %s800 = sand.u32 0, 85
    %s801 = sshrl.u32 %s800, 1
    %s802 = sor.u32 %s800, %s801
    %s803 = sand.u32 51, %s802
    %s804 = sshrl.u32 %s803, 2
    %s805 = sor.u32 %s803, %s804
    %s806 = sand.u32 15, %s805
    %v807 = vld [vmem:[%s798] sm:%s806]
    %v808 = vunpack.c.l.bf16 %v807
    %v809 = vunpack.c.h.bf16 %v807
    %s810 = scalar_lea.vmem %s6, 44
    %s812 = sor.u32 255, 127
    %s813 = sand.u32 %s812, 85
    %s814 = sshrl.u32 %s813, 1
    %s815 = sor.u32 %s813, %s814
    %s816 = sand.u32 51, %s815
    %s817 = sshrl.u32 %s816, 2
    %s818 = sor.u32 %s816, %s817
    %s819 = sand.u32 15, %s818
    %v820 = vld [vmem:[%s810] sm:%s819]
    %v821 = vunpack.c.l.bf16 %v820
    %v822 = vunpack.c.h.bf16 %v820
    %823 = xla_tuple %v821, %v23
    %824 = xla_tuple %823
    %v825 = vmax.f32 %v821, %v23
    %826 = xla_tuple %v825
    %827 = xla_tuple %v825, %v18
    %828 = xla_tuple %827
    %v829 = vmax.f32 %v825, %v18
    %830 = xla_tuple %v829
    %831 = xla_tuple %v829, %v13
    %832 = xla_tuple %831
    %v833 = vmax.f32 %v829, %v13
    %834 = xla_tuple %v833
    %s835 = scalar_lea.vmem [#allocation22], 44
    %v836 = vpack.c.bf16 0.0, %v833
    %s838 = ssub.s32 16, 1
    %839 = vst [vmem:[%s835] sm:%s838] %v836
    %s840 = scalar_lea.vmem %s50, 48
    %s842 = sand.u32 0, 85
    %s843 = sshrl.u32 %s842, 1
    %s844 = sor.u32 %s842, %s843
    %s845 = sand.u32 51, %s844
    %s846 = sshrl.u32 %s845, 2
    %s847 = sor.u32 %s845, %s846
    %s848 = sand.u32 15, %s847
    %v849 = vld [vmem:[%s840] sm:%s848]
    %v850 = vunpack.c.l.bf16 %v849
    %v851 = vunpack.c.h.bf16 %v849
    %s852 = scalar_lea.vmem %s51, 48
    %s854 = sand.u32 0, 85
    %s855 = sshrl.u32 %s854, 1
    %s856 = sor.u32 %s854, %s855
    %s857 = sand.u32 51, %s856
    %s858 = sshrl.u32 %s857, 2
    %s859 = sor.u32 %s857, %s858
    %s860 = sand.u32 15, %s859
    %v861 = vld [vmem:[%s852] sm:%s860]
    %v862 = vunpack.c.l.bf16 %v861
    %v863 = vunpack.c.h.bf16 %v861
    %s864 = scalar_lea.vmem %s52, 48
    %s866 = sand.u32 0, 85
    %s867 = sshrl.u32 %s866, 1
    %s868 = sor.u32 %s866, %s867
    %s869 = sand.u32 51, %s868
    %s870 = sshrl.u32 %s869, 2
    %s871 = sor.u32 %s869, %s870
    %s872 = sand.u32 15, %s871
    %v873 = vld [vmem:[%s864] sm:%s872]
    %v874 = vunpack.c.l.bf16 %v873
    %v875 = vunpack.c.h.bf16 %v873
    %s876 = scalar_lea.vmem %s6, 48
    %s878 = sor.u32 255, 127
    %s879 = sand.u32 %s878, 85
    %s880 = sshrl.u32 %s879, 1
    %s881 = sor.u32 %s879, %s880
    %s882 = sand.u32 51, %s881
    %s883 = sshrl.u32 %s882, 2
    %s884 = sor.u32 %s882, %s883
    %s885 = sand.u32 15, %s884
    %v886 = vld [vmem:[%s876] sm:%s885]
    %v887 = vunpack.c.l.bf16 %v886
    %v888 = vunpack.c.h.bf16 %v886
    %889 = xla_tuple %v887, %v23
    %890 = xla_tuple %889
    %v891 = vmax.f32 %v887, %v23
    %892 = xla_tuple %v891
    %893 = xla_tuple %v891, %v18
    %894 = xla_tuple %893
    %v895 = vmax.f32 %v891, %v18
    %896 = xla_tuple %v895
    %897 = xla_tuple %v895, %v13
    %898 = xla_tuple %897
    %v899 = vmax.f32 %v895, %v13
    %900 = xla_tuple %v899
    %s901 = scalar_lea.vmem [#allocation22], 48
    %v902 = vpack.c.bf16 0.0, %v899
    %s904 = ssub.s32 16, 1
    %905 = vst [vmem:[%s901] sm:%s904] %v902
    %s906 = scalar_lea.vmem %s50, 52
    %s908 = sand.u32 0, 85
    %s909 = sshrl.u32 %s908, 1
    %s910 = sor.u32 %s908, %s909
    %s911 = sand.u32 51, %s910
    %s912 = sshrl.u32 %s911, 2
    %s913 = sor.u32 %s911, %s912
    %s914 = sand.u32 15, %s913
    %v915 = vld [vmem:[%s906] sm:%s914]
    %v916 = vunpack.c.l.bf16 %v915
    %v917 = vunpack.c.h.bf16 %v915
    %s918 = scalar_lea.vmem %s51, 52
    %s920 = sand.u32 0, 85
    %s921 = sshrl.u32 %s920, 1
    %s922 = sor.u32 %s920, %s921
    %s923 = sand.u32 51, %s922
    %s924 = sshrl.u32 %s923, 2
    %s925 = sor.u32 %s923, %s924
    %s926 = sand.u32 15, %s925
    %v927 = vld [vmem:[%s918] sm:%s926]
    %v928 = vunpack.c.l.bf16 %v927
    %v929 = vunpack.c.h.bf16 %v927
    %s930 = scalar_lea.vmem %s52, 52
    %s932 = sand.u32 0, 85
    %s933 = sshrl.u32 %s932, 1
    %s934 = sor.u32 %s932, %s933
    %s935 = sand.u32 51, %s934
    %s936 = sshrl.u32 %s935, 2
    %s937 = sor.u32 %s935, %s936
    %s938 = sand.u32 15, %s937
    %v939 = vld [vmem:[%s930] sm:%s938]
    %v940 = vunpack.c.l.bf16 %v939
    %v941 = vunpack.c.h.bf16 %v939
    %s942 = scalar_lea.vmem %s6, 52
    %s944 = sor.u32 255, 127
    %s945 = sand.u32 %s944, 85
    %s946 = sshrl.u32 %s945, 1
    %s947 = sor.u32 %s945, %s946
    %s948 = sand.u32 51, %s947
    %s949 = sshrl.u32 %s948, 2
    %s950 = sor.u32 %s948, %s949
    %s951 = sand.u32 15, %s950
    %v952 = vld [vmem:[%s942] sm:%s951]
    %v953 = vunpack.c.l.bf16 %v952
    %v954 = vunpack.c.h.bf16 %v952
    %955 = xla_tuple %v953, %v23
    %956 = xla_tuple %955
    %v957 = vmax.f32 %v953, %v23
    %958 = xla_tuple %v957
    %959 = xla_tuple %v957, %v18
    %960 = xla_tuple %959
    %v961 = vmax.f32 %v957, %v18
    %962 = xla_tuple %v961
    %963 = xla_tuple %v961, %v13
    %964 = xla_tuple %963
    %v965 = vmax.f32 %v961, %v13
    %966 = xla_tuple %v965
    %s967 = scalar_lea.vmem [#allocation22], 52
    %v968 = vpack.c.bf16 0.0, %v965
    %s970 = ssub.s32 16, 1
    %971 = vst [vmem:[%s967] sm:%s970] %v968
    %s972 = scalar_lea.vmem %s50, 56
    %s974 = sand.u32 0, 85
    %s975 = sshrl.u32 %s974, 1
    %s976 = sor.u32 %s974, %s975
    %s977 = sand.u32 51, %s976
    %s978 = sshrl.u32 %s977, 2
    %s979 = sor.u32 %s977, %s978
    %s980 = sand.u32 15, %s979
    %v981 = vld [vmem:[%s972] sm:%s980]
    %v982 = vunpack.c.l.bf16 %v981
    %v983 = vunpack.c.h.bf16 %v981
    %s984 = scalar_lea.vmem %s51, 56
    %s986 = sand.u32 0, 85
    %s987 = sshrl.u32 %s986, 1
    %s988 = sor.u32 %s986, %s987
    %s989 = sand.u32 51, %s988
    %s990 = sshrl.u32 %s989, 2
    %s991 = sor.u32 %s989, %s990
    %s992 = sand.u32 15, %s991
    %v993 = vld [vmem:[%s984] sm:%s992]
    %v994 = vunpack.c.l.bf16 %v993
    %v995 = vunpack.c.h.bf16 %v993
    %s996 = scalar_lea.vmem %s52, 56
    %s998 = sand.u32 0, 85
    %s999 = sshrl.u32 %s998, 1
    %s1000 = sor.u32 %s998, %s999
    %s1001 = sand.u32 51, %s1000
    %s1002 = sshrl.u32 %s1001, 2
    %s1003 = sor.u32 %s1001, %s1002
    %s1004 = sand.u32 15, %s1003
    %v1005 = vld [vmem:[%s996] sm:%s1004]
    %v1006 = vunpack.c.l.bf16 %v1005
    %v1007 = vunpack.c.h.bf16 %v1005
    %s1008 = scalar_lea.vmem %s6, 56
    %s1010 = sor.u32 255, 127
    %s1011 = sand.u32 %s1010, 85
    %s1012 = sshrl.u32 %s1011, 1
    %s1013 = sor.u32 %s1011, %s1012
    %s1014 = sand.u32 51, %s1013
    %s1015 = sshrl.u32 %s1014, 2
    %s1016 = sor.u32 %s1014, %s1015
    %s1017 = sand.u32 15, %s1016
    %v1018 = vld [vmem:[%s1008] sm:%s1017]
    %v1019 = vunpack.c.l.bf16 %v1018
    %v1020 = vunpack.c.h.bf16 %v1018
    %1021 = xla_tuple %v1019, %v23
    %1022 = xla_tuple %1021
    %v1023 = vmax.f32 %v1019, %v23
    %1024 = xla_tuple %v1023
    %1025 = xla_tuple %v1023, %v18
    %1026 = xla_tuple %1025
    %v1027 = vmax.f32 %v1023, %v18
    %1028 = xla_tuple %v1027
    %1029 = xla_tuple %v1027, %v13
    %1030 = xla_tuple %1029
    %v1031 = vmax.f32 %v1027, %v13
    %1032 = xla_tuple %v1031
    %s1033 = scalar_lea.vmem [#allocation22], 56
    %v1034 = vpack.c.bf16 0.0, %v1031
    %s1036 = ssub.s32 16, 1
    %1037 = vst [vmem:[%s1033] sm:%s1036] %v1034
    %s1038 = scalar_lea.vmem %s50, 60
    %s1040 = sand.u32 0, 85
    %s1041 = sshrl.u32 %s1040, 1
    %s1042 = sor.u32 %s1040, %s1041
    %s1043 = sand.u32 51, %s1042
    %s1044 = sshrl.u32 %s1043, 2
    %s1045 = sor.u32 %s1043, %s1044
    %s1046 = sand.u32 15, %s1045
    %v1047 = vld [vmem:[%s1038] sm:%s1046]
    %v1048 = vunpack.c.l.bf16 %v1047
    %v1049 = vunpack.c.h.bf16 %v1047
    %s1050 = scalar_lea.vmem %s51, 60
    %s1052 = sand.u32 0, 85
    %s1053 = sshrl.u32 %s1052, 1
    %s1054 = sor.u32 %s1052, %s1053
    %s1055 = sand.u32 51, %s1054
    %s1056 = sshrl.u32 %s1055, 2
    %s1057 = sor.u32 %s1055, %s1056
    %s1058 = sand.u32 15, %s1057
    %v1059 = vld [vmem:[%s1050] sm:%s1058]
    %v1060 = vunpack.c.l.bf16 %v1059
    %v1061 = vunpack.c.h.bf16 %v1059
    %s1062 = scalar_lea.vmem %s52, 60
    %s1064 = sand.u32 0, 85
    %s1065 = sshrl.u32 %s1064, 1
    %s1066 = sor.u32 %s1064, %s1065
    %s1067 = sand.u32 51, %s1066
    %s1068 = sshrl.u32 %s1067, 2
    %s1069 = sor.u32 %s1067, %s1068
    %s1070 = sand.u32 15, %s1069
    %v1071 = vld [vmem:[%s1062] sm:%s1070]
    %v1072 = vunpack.c.l.bf16 %v1071
    %v1073 = vunpack.c.h.bf16 %v1071
    %s1074 = scalar_lea.vmem %s6, 60
    %s1076 = sor.u32 255, 127
    %s1077 = sand.u32 %s1076, 85
    %s1078 = sshrl.u32 %s1077, 1
    %s1079 = sor.u32 %s1077, %s1078
    %s1080 = sand.u32 51, %s1079
    %s1081 = sshrl.u32 %s1080, 2
    %s1082 = sor.u32 %s1080, %s1081
    %s1083 = sand.u32 15, %s1082
    %v1084 = vld [vmem:[%s1074] sm:%s1083]
    %v1085 = vunpack.c.l.bf16 %v1084
    %v1086 = vunpack.c.h.bf16 %v1084
    %1087 = xla_tuple %v1085, %v23
    %1088 = xla_tuple %1087
    %v1089 = vmax.f32 %v1085, %v23
    %1090 = xla_tuple %v1089
    %1091 = xla_tuple %v1089, %v18
    %1092 = xla_tuple %1091
    %v1093 = vmax.f32 %v1089, %v18
    %1094 = xla_tuple %v1093
    %1095 = xla_tuple %v1093, %v13
    %1096 = xla_tuple %1095
    %v1097 = vmax.f32 %v1093, %v13
    %1098 = xla_tuple %v1097
    %s1099 = scalar_lea.vmem [#allocation22], 60
    %v1100 = vpack.c.bf16 0.0, %v1097
    %s1102 = ssub.s32 16, 1
    %1103 = vst [vmem:[%s1099] sm:%s1102] %v1100
    %s1104 = scalar_lea.vmem %s50, 64
    %s1106 = sand.u32 0, 85
    %s1107 = sshrl.u32 %s1106, 1
    %s1108 = sor.u32 %s1106, %s1107
    %s1109 = sand.u32 51, %s1108
    %s1110 = sshrl.u32 %s1109, 2
    %s1111 = sor.u32 %s1109, %s1110
    %s1112 = sand.u32 15, %s1111
    %v1113 = vld [vmem:[%s1104] sm:%s1112]
    %v1114 = vunpack.c.l.bf16 %v1113
    %v1115 = vunpack.c.h.bf16 %v1113
    %s1116 = scalar_lea.vmem %s51, 64
    %s1118 = sand.u32 0, 85
    %s1119 = sshrl.u32 %s1118, 1
    %s1120 = sor.u32 %s1118, %s1119
    %s1121 = sand.u32 51, %s1120
    %s1122 = sshrl.u32 %s1121, 2
    %s1123 = sor.u32 %s1121, %s1122
    %s1124 = sand.u32 15, %s1123
    %v1125 = vld [vmem:[%s1116] sm:%s1124]
    %v1126 = vunpack.c.l.bf16 %v1125
    %v1127 = vunpack.c.h.bf16 %v1125
    %s1128 = scalar_lea.vmem %s52, 64
    %s1130 = sand.u32 0, 85
    %s1131 = sshrl.u32 %s1130, 1
    %s1132 = sor.u32 %s1130, %s1131
    %s1133 = sand.u32 51, %s1132
    %s1134 = sshrl.u32 %s1133, 2
    %s1135 = sor.u32 %s1133, %s1134
    %s1136 = sand.u32 15, %s1135
    %v1137 = vld [vmem:[%s1128] sm:%s1136]
    %v1138 = vunpack.c.l.bf16 %v1137
    %v1139 = vunpack.c.h.bf16 %v1137
    %s1140 = scalar_lea.vmem %s6, 64
    %s1142 = sor.u32 255, 127
    %s1143 = sand.u32 %s1142, 85
    %s1144 = sshrl.u32 %s1143, 1
    %s1145 = sor.u32 %s1143, %s1144
    %s1146 = sand.u32 51, %s1145
    %s1147 = sshrl.u32 %s1146, 2
    %s1148 = sor.u32 %s1146, %s1147
    %s1149 = sand.u32 15, %s1148
    %v1150 = vld [vmem:[%s1140] sm:%s1149]
    %v1151 = vunpack.c.l.bf16 %v1150
    %v1152 = vunpack.c.h.bf16 %v1150
    %1153 = xla_tuple %v1151, %v23
    %1154 = xla_tuple %1153
    %v1155 = vmax.f32 %v1151, %v23
    %1156 = xla_tuple %v1155
    %1157 = xla_tuple %v1155, %v18
    %1158 = xla_tuple %1157
    %v1159 = vmax.f32 %v1155, %v18
    %1160 = xla_tuple %v1159
    %1161 = xla_tuple %v1159, %v13
    %1162 = xla_tuple %1161
    %v1163 = vmax.f32 %v1159, %v13
    %1164 = xla_tuple %v1163
    %s1165 = scalar_lea.vmem [#allocation22], 64
    %v1166 = vpack.c.bf16 0.0, %v1163
    %s1168 = ssub.s32 16, 1
    %1169 = vst [vmem:[%s1165] sm:%s1168] %v1166
    %s1170 = scalar_lea.vmem %s50, 68
    %s1172 = sand.u32 0, 85
    %s1173 = sshrl.u32 %s1172, 1
    %s1174 = sor.u32 %s1172, %s1173
    %s1175 = sand.u32 51, %s1174
    %s1176 = sshrl.u32 %s1175, 2
    %s1177 = sor.u32 %s1175, %s1176
    %s1178 = sand.u32 15, %s1177
    %v1179 = vld [vmem:[%s1170] sm:%s1178]
    %v1180 = vunpack.c.l.bf16 %v1179
    %v1181 = vunpack.c.h.bf16 %v1179
    %s1182 = scalar_lea.vmem %s51, 68
    %s1184 = sand.u32 0, 85
    %s1185 = sshrl.u32 %s1184, 1
    %s1186 = sor.u32 %s1184, %s1185
    %s1187 = sand.u32 51, %s1186
    %s1188 = sshrl.u32 %s1187, 2
    %s1189 = sor.u32 %s1187, %s1188
    %s1190 = sand.u32 15, %s1189
    %v1191 = vld [vmem:[%s1182] sm:%s1190]
    %v1192 = vunpack.c.l.bf16 %v1191
    %v1193 = vunpack.c.h.bf16 %v1191
    %s1194 = scalar_lea.vmem %s52, 68
    %s1196 = sand.u32 0, 85
    %s1197 = sshrl.u32 %s1196, 1
    %s1198 = sor.u32 %s1196, %s1197
    %s1199 = sand.u32 51, %s1198
    %s1200 = sshrl.u32 %s1199, 2
    %s1201 = sor.u32 %s1199, %s1200
    %s1202 = sand.u32 15, %s1201
    %v1203 = vld [vmem:[%s1194] sm:%s1202]
    %v1204 = vunpack.c.l.bf16 %v1203
    %v1205 = vunpack.c.h.bf16 %v1203
    %s1206 = scalar_lea.vmem %s6, 68
    %s1208 = sor.u32 255, 127
    %s1209 = sand.u32 %s1208, 85
    %s1210 = sshrl.u32 %s1209, 1
    %s1211 = sor.u32 %s1209, %s1210
    %s1212 = sand.u32 51, %s1211
    %s1213 = sshrl.u32 %s1212, 2
    %s1214 = sor.u32 %s1212, %s1213
    %s1215 = sand.u32 15, %s1214
    %v1216 = vld [vmem:[%s1206] sm:%s1215]
    %v1217 = vunpack.c.l.bf16 %v1216
    %v1218 = vunpack.c.h.bf16 %v1216
    %1219 = xla_tuple %v1217, %v23
    %1220 = xla_tuple %1219
    %v1221 = vmax.f32 %v1217, %v23
    %1222 = xla_tuple %v1221
    %1223 = xla_tuple %v1221, %v18
    %1224 = xla_tuple %1223
    %v1225 = vmax.f32 %v1221, %v18
    %1226 = xla_tuple %v1225
    %1227 = xla_tuple %v1225, %v13
    %1228 = xla_tuple %1227
    %v1229 = vmax.f32 %v1225, %v13
    %1230 = xla_tuple %v1229
    %s1231 = scalar_lea.vmem [#allocation22], 68
    %v1232 = vpack.c.bf16 0.0, %v1229
    %s1234 = ssub.s32 16, 1
    %1235 = vst [vmem:[%s1231] sm:%s1234] %v1232
    %s1236 = scalar_lea.vmem %s50, 72
    %s1238 = sand.u32 0, 85
    %s1239 = sshrl.u32 %s1238, 1
    %s1240 = sor.u32 %s1238, %s1239
    %s1241 = sand.u32 51, %s1240
    %s1242 = sshrl.u32 %s1241, 2
    %s1243 = sor.u32 %s1241, %s1242
    %s1244 = sand.u32 15, %s1243
    %v1245 = vld [vmem:[%s1236] sm:%s1244]
    %v1246 = vunpack.c.l.bf16 %v1245
    %v1247 = vunpack.c.h.bf16 %v1245
    %s1248 = scalar_lea.vmem %s51, 72
    %s1250 = sand.u32 0, 85
    %s1251 = sshrl.u32 %s1250, 1
    %s1252 = sor.u32 %s1250, %s1251
    %s1253 = sand.u32 51, %s1252
    %s1254 = sshrl.u32 %s1253, 2
    %s1255 = sor.u32 %s1253, %s1254
    %s1256 = sand.u32 15, %s1255
    %v1257 = vld [vmem:[%s1248] sm:%s1256]
    %v1258 = vunpack.c.l.bf16 %v1257
    %v1259 = vunpack.c.h.bf16 %v1257
    %s1260 = scalar_lea.vmem %s52, 72
    %s1262 = sand.u32 0, 85
    %s1263 = sshrl.u32 %s1262, 1
    %s1264 = sor.u32 %s1262, %s1263
    %s1265 = sand.u32 51, %s1264
    %s1266 = sshrl.u32 %s1265, 2
    %s1267 = sor.u32 %s1265, %s1266
    %s1268 = sand.u32 15, %s1267
    %v1269 = vld [vmem:[%s1260] sm:%s1268]
    %v1270 = vunpack.c.l.bf16 %v1269
    %v1271 = vunpack.c.h.bf16 %v1269
    %s1272 = scalar_lea.vmem %s6, 72
    %s1274 = sor.u32 255, 127
    %s1275 = sand.u32 %s1274, 85
    %s1276 = sshrl.u32 %s1275, 1
    %s1277 = sor.u32 %s1275, %s1276
    %s1278 = sand.u32 51, %s1277
    %s1279 = sshrl.u32 %s1278, 2
    %s1280 = sor.u32 %s1278, %s1279
    %s1281 = sand.u32 15, %s1280
    %v1282 = vld [vmem:[%s1272] sm:%s1281]
    %v1283 = vunpack.c.l.bf16 %v1282
    %v1284 = vunpack.c.h.bf16 %v1282
    %1285 = xla_tuple %v1283, %v23
    %1286 = xla_tuple %1285
    %v1287 = vmax.f32 %v1283, %v23
    %1288 = xla_tuple %v1287
    %1289 = xla_tuple %v1287, %v18
    %1290 = xla_tuple %1289
    %v1291 = vmax.f32 %v1287, %v18
    %1292 = xla_tuple %v1291
    %1293 = xla_tuple %v1291, %v13
    %1294 = xla_tuple %1293
    %v1295 = vmax.f32 %v1291, %v13
    %1296 = xla_tuple %v1295
    %s1297 = scalar_lea.vmem [#allocation22], 72
    %v1298 = vpack.c.bf16 0.0, %v1295
    %s1300 = ssub.s32 16, 1
    %1301 = vst [vmem:[%s1297] sm:%s1300] %v1298
    %s1302 = scalar_lea.vmem %s50, 76
    %s1304 = sand.u32 0, 85
    %s1305 = sshrl.u32 %s1304, 1
    %s1306 = sor.u32 %s1304, %s1305
    %s1307 = sand.u32 51, %s1306
    %s1308 = sshrl.u32 %s1307, 2
    %s1309 = sor.u32 %s1307, %s1308
    %s1310 = sand.u32 15, %s1309
    %v1311 = vld [vmem:[%s1302] sm:%s1310]
    %v1312 = vunpack.c.l.bf16 %v1311
    %v1313 = vunpack.c.h.bf16 %v1311
    %s1314 = scalar_lea.vmem %s51, 76
    %s1316 = sand.u32 0, 85
    %s1317 = sshrl.u32 %s1316, 1
    %s1318 = sor.u32 %s1316, %s1317
    %s1319 = sand.u32 51, %s1318
    %s1320 = sshrl.u32 %s1319, 2
    %s1321 = sor.u32 %s1319, %s1320
    %s1322 = sand.u32 15, %s1321
    %v1323 = vld [vmem:[%s1314] sm:%s1322]
    %v1324 = vunpack.c.l.bf16 %v1323
    %v1325 = vunpack.c.h.bf16 %v1323
    %s1326 = scalar_lea.vmem %s52, 76
    %s1328 = sand.u32 0, 85
    %s1329 = sshrl.u32 %s1328, 1
    %s1330 = sor.u32 %s1328, %s1329
    %s1331 = sand.u32 51, %s1330
    %s1332 = sshrl.u32 %s1331, 2
    %s1333 = sor.u32 %s1331, %s1332
    %s1334 = sand.u32 15, %s1333
    %v1335 = vld [vmem:[%s1326] sm:%s1334]
    %v1336 = vunpack.c.l.bf16 %v1335
    %v1337 = vunpack.c.h.bf16 %v1335
    %s1338 = scalar_lea.vmem %s6, 76
    %s1340 = sor.u32 255, 127
    %s1341 = sand.u32 %s1340, 85
    %s1342 = sshrl.u32 %s1341, 1
    %s1343 = sor.u32 %s1341, %s1342
    %s1344 = sand.u32 51, %s1343
    %s1345 = sshrl.u32 %s1344, 2
    %s1346 = sor.u32 %s1344, %s1345
    %s1347 = sand.u32 15, %s1346
    %v1348 = vld [vmem:[%s1338] sm:%s1347]
    %v1349 = vunpack.c.l.bf16 %v1348
    %v1350 = vunpack.c.h.bf16 %v1348
    %1351 = xla_tuple %v1349, %v23
    %1352 = xla_tuple %1351
    %v1353 = vmax.f32 %v1349, %v23
    %1354 = xla_tuple %v1353
    %1355 = xla_tuple %v1353, %v18
    %1356 = xla_tuple %1355
    %v1357 = vmax.f32 %v1353, %v18
    %1358 = xla_tuple %v1357
    %1359 = xla_tuple %v1357, %v13
    %1360 = xla_tuple %1359
    %v1361 = vmax.f32 %v1357, %v13
    %1362 = xla_tuple %v1361
    %s1363 = scalar_lea.vmem [#allocation22], 76
    %v1364 = vpack.c.bf16 0.0, %v1361
    %s1366 = ssub.s32 16, 1
    %1367 = vst [vmem:[%s1363] sm:%s1366] %v1364
    %s1368 = scalar_lea.vmem %s50, 80
    %s1370 = sand.u32 0, 85
    %s1371 = sshrl.u32 %s1370, 1
    %s1372 = sor.u32 %s1370, %s1371
    %s1373 = sand.u32 51, %s1372
    %s1374 = sshrl.u32 %s1373, 2
    %s1375 = sor.u32 %s1373, %s1374
    %s1376 = sand.u32 15, %s1375
    %v1377 = vld [vmem:[%s1368] sm:%s1376]
    %v1378 = vunpack.c.l.bf16 %v1377
    %v1379 = vunpack.c.h.bf16 %v1377
    %s1380 = scalar_lea.vmem %s51, 80
    %s1382 = sand.u32 0, 85
    %s1383 = sshrl.u32 %s1382, 1
    %s1384 = sor.u32 %s1382, %s1383
    %s1385 = sand.u32 51, %s1384
    %s1386 = sshrl.u32 %s1385, 2
    %s1387 = sor.u32 %s1385, %s1386
    %s1388 = sand.u32 15, %s1387
    %v1389 = vld [vmem:[%s1380] sm:%s1388]
    %v1390 = vunpack.c.l.bf16 %v1389
    %v1391 = vunpack.c.h.bf16 %v1389
    %s1392 = scalar_lea.vmem %s52, 80
    %s1394 = sand.u32 0, 85
    %s1395 = sshrl.u32 %s1394, 1
    %s1396 = sor.u32 %s1394, %s1395
    %s1397 = sand.u32 51, %s1396
    %s1398 = sshrl.u32 %s1397, 2
    %s1399 = sor.u32 %s1397, %s1398
    %s1400 = sand.u32 15, %s1399
    %v1401 = vld [vmem:[%s1392] sm:%s1400]
    %v1402 = vunpack.c.l.bf16 %v1401
    %v1403 = vunpack.c.h.bf16 %v1401
    %s1404 = scalar_lea.vmem %s6, 80
    %s1406 = sor.u32 255, 127
    %s1407 = sand.u32 %s1406, 85
    %s1408 = sshrl.u32 %s1407, 1
    %s1409 = sor.u32 %s1407, %s1408
    %s1410 = sand.u32 51, %s1409
    %s1411 = sshrl.u32 %s1410, 2
    %s1412 = sor.u32 %s1410, %s1411
    %s1413 = sand.u32 15, %s1412
    %v1414 = vld [vmem:[%s1404] sm:%s1413]
    %v1415 = vunpack.c.l.bf16 %v1414
    %v1416 = vunpack.c.h.bf16 %v1414
    %1417 = xla_tuple %v1415, %v23
    %1418 = xla_tuple %1417
    %v1419 = vmax.f32 %v1415, %v23
    %1420 = xla_tuple %v1419
    %1421 = xla_tuple %v1419, %v18
    %1422 = xla_tuple %1421
    %v1423 = vmax.f32 %v1419, %v18
    %1424 = xla_tuple %v1423
    %1425 = xla_tuple %v1423, %v13
    %1426 = xla_tuple %1425
    %v1427 = vmax.f32 %v1423, %v13
    %1428 = xla_tuple %v1427
    %s1429 = scalar_lea.vmem [#allocation22], 80
    %v1430 = vpack.c.bf16 0.0, %v1427
    %s1432 = ssub.s32 16, 1
    %1433 = vst [vmem:[%s1429] sm:%s1432] %v1430
    %s1434 = scalar_lea.vmem %s50, 84
    %s1436 = sand.u32 0, 85
    %s1437 = sshrl.u32 %s1436, 1
    %s1438 = sor.u32 %s1436, %s1437
    %s1439 = sand.u32 51, %s1438
    %s1440 = sshrl.u32 %s1439, 2
    %s1441 = sor.u32 %s1439, %s1440
    %s1442 = sand.u32 15, %s1441
    %v1443 = vld [vmem:[%s1434] sm:%s1442]
    %v1444 = vunpack.c.l.bf16 %v1443
    %v1445 = vunpack.c.h.bf16 %v1443
    %s1446 = scalar_lea.vmem %s51, 84
    %s1448 = sand.u32 0, 85
    %s1449 = sshrl.u32 %s1448, 1
    %s1450 = sor.u32 %s1448, %s1449
    %s1451 = sand.u32 51, %s1450
    %s1452 = sshrl.u32 %s1451, 2
    %s1453 = sor.u32 %s1451, %s1452
    %s1454 = sand.u32 15, %s1453
    %v1455 = vld [vmem:[%s1446] sm:%s1454]
    %v1456 = vunpack.c.l.bf16 %v1455
    %v1457 = vunpack.c.h.bf16 %v1455
    %s1458 = scalar_lea.vmem %s52, 84
    %s1460 = sand.u32 0, 85
    %s1461 = sshrl.u32 %s1460, 1
    %s1462 = sor.u32 %s1460, %s1461
    %s1463 = sand.u32 51, %s1462
    %s1464 = sshrl.u32 %s1463, 2
    %s1465 = sor.u32 %s1463, %s1464
    %s1466 = sand.u32 15, %s1465
    %v1467 = vld [vmem:[%s1458] sm:%s1466]
    %v1468 = vunpack.c.l.bf16 %v1467
    %v1469 = vunpack.c.h.bf16 %v1467
    %s1470 = scalar_lea.vmem %s6, 84
    %s1472 = sor.u32 255, 127
    %s1473 = sand.u32 %s1472, 85
    %s1474 = sshrl.u32 %s1473, 1
    %s1475 = sor.u32 %s1473, %s1474
    %s1476 = sand.u32 51, %s1475
    %s1477 = sshrl.u32 %s1476, 2
    %s1478 = sor.u32 %s1476, %s1477
    %s1479 = sand.u32 15, %s1478
    %v1480 = vld [vmem:[%s1470] sm:%s1479]
    %v1481 = vunpack.c.l.bf16 %v1480
    %v1482 = vunpack.c.h.bf16 %v1480
    %1483 = xla_tuple %v1481, %v23
    %1484 = xla_tuple %1483
    %v1485 = vmax.f32 %v1481, %v23
    %1486 = xla_tuple %v1485
    %1487 = xla_tuple %v1485, %v18
    %1488 = xla_tuple %1487
    %v1489 = vmax.f32 %v1485, %v18
    %1490 = xla_tuple %v1489
    %1491 = xla_tuple %v1489, %v13
    %1492 = xla_tuple %1491
    %v1493 = vmax.f32 %v1489, %v13
    %1494 = xla_tuple %v1493
    %s1495 = scalar_lea.vmem [#allocation22], 84
    %v1496 = vpack.c.bf16 0.0, %v1493
    %s1498 = ssub.s32 16, 1
    %1499 = vst [vmem:[%s1495] sm:%s1498] %v1496
    %s1500 = scalar_lea.vmem %s50, 88
    %s1502 = sand.u32 0, 85
    %s1503 = sshrl.u32 %s1502, 1
    %s1504 = sor.u32 %s1502, %s1503
    %s1505 = sand.u32 51, %s1504
    %s1506 = sshrl.u32 %s1505, 2
    %s1507 = sor.u32 %s1505, %s1506
    %s1508 = sand.u32 15, %s1507
    %v1509 = vld [vmem:[%s1500] sm:%s1508]
    %v1510 = vunpack.c.l.bf16 %v1509
    %v1511 = vunpack.c.h.bf16 %v1509
    %s1512 = scalar_lea.vmem %s51, 88
    %s1514 = sand.u32 0, 85
    %s1515 = sshrl.u32 %s1514, 1
    %s1516 = sor.u32 %s1514, %s1515
    %s1517 = sand.u32 51, %s1516
    %s1518 = sshrl.u32 %s1517, 2
    %s1519 = sor.u32 %s1517, %s1518
    %s1520 = sand.u32 15, %s1519
    %v1521 = vld [vmem:[%s1512] sm:%s1520]
    %v1522 = vunpack.c.l.bf16 %v1521
    %v1523 = vunpack.c.h.bf16 %v1521
    %s1524 = scalar_lea.vmem %s52, 88
    %s1526 = sand.u32 0, 85
    %s1527 = sshrl.u32 %s1526, 1
    %s1528 = sor.u32 %s1526, %s1527
    %s1529 = sand.u32 51, %s1528
    %s1530 = sshrl.u32 %s1529, 2
    %s1531 = sor.u32 %s1529, %s1530
    %s1532 = sand.u32 15, %s1531
    %v1533 = vld [vmem:[%s1524] sm:%s1532]
    %v1534 = vunpack.c.l.bf16 %v1533
    %v1535 = vunpack.c.h.bf16 %v1533
    %s1536 = scalar_lea.vmem %s6, 88
    %s1538 = sor.u32 255, 127
    %s1539 = sand.u32 %s1538, 85
    %s1540 = sshrl.u32 %s1539, 1
    %s1541 = sor.u32 %s1539, %s1540
    %s1542 = sand.u32 51, %s1541
    %s1543 = sshrl.u32 %s1542, 2
    %s1544 = sor.u32 %s1542, %s1543
    %s1545 = sand.u32 15, %s1544
    %v1546 = vld [vmem:[%s1536] sm:%s1545]
    %v1547 = vunpack.c.l.bf16 %v1546
    %v1548 = vunpack.c.h.bf16 %v1546
    %1549 = xla_tuple %v1547, %v23
    %1550 = xla_tuple %1549
    %v1551 = vmax.f32 %v1547, %v23
    %1552 = xla_tuple %v1551
    %1553 = xla_tuple %v1551, %v18
    %1554 = xla_tuple %1553
    %v1555 = vmax.f32 %v1551, %v18
    %1556 = xla_tuple %v1555
    %1557 = xla_tuple %v1555, %v13
    %1558 = xla_tuple %1557
    %v1559 = vmax.f32 %v1555, %v13
    %1560 = xla_tuple %v1559
    %s1561 = scalar_lea.vmem [#allocation22], 88
    %v1562 = vpack.c.bf16 0.0, %v1559
    %s1564 = ssub.s32 16, 1
    %1565 = vst [vmem:[%s1561] sm:%s1564] %v1562
    %s1566 = scalar_lea.vmem %s50, 92
    %s1568 = sand.u32 0, 85
    %s1569 = sshrl.u32 %s1568, 1
    %s1570 = sor.u32 %s1568, %s1569
    %s1571 = sand.u32 51, %s1570
    %s1572 = sshrl.u32 %s1571, 2
    %s1573 = sor.u32 %s1571, %s1572
    %s1574 = sand.u32 15, %s1573
    %v1575 = vld [vmem:[%s1566] sm:%s1574]
    %v1576 = vunpack.c.l.bf16 %v1575
    %v1577 = vunpack.c.h.bf16 %v1575
    %s1578 = scalar_lea.vmem %s51, 92
    %s1580 = sand.u32 0, 85
    %s1581 = sshrl.u32 %s1580, 1
    %s1582 = sor.u32 %s1580, %s1581
    %s1583 = sand.u32 51, %s1582
    %s1584 = sshrl.u32 %s1583, 2
    %s1585 = sor.u32 %s1583, %s1584
    %s1586 = sand.u32 15, %s1585
    %v1587 = vld [vmem:[%s1578] sm:%s1586]
    %v1588 = vunpack.c.l.bf16 %v1587
    %v1589 = vunpack.c.h.bf16 %v1587
    %s1590 = scalar_lea.vmem %s52, 92
    %s1592 = sand.u32 0, 85
    %s1593 = sshrl.u32 %s1592, 1
    %s1594 = sor.u32 %s1592, %s1593
    %s1595 = sand.u32 51, %s1594
    %s1596 = sshrl.u32 %s1595, 2
    %s1597 = sor.u32 %s1595, %s1596
    %s1598 = sand.u32 15, %s1597
    %v1599 = vld [vmem:[%s1590] sm:%s1598]
    %v1600 = vunpack.c.l.bf16 %v1599
    %v1601 = vunpack.c.h.bf16 %v1599
    %s1602 = scalar_lea.vmem %s6, 92
    %s1604 = sor.u32 255, 127
    %s1605 = sand.u32 %s1604, 85
    %s1606 = sshrl.u32 %s1605, 1
    %s1607 = sor.u32 %s1605, %s1606
    %s1608 = sand.u32 51, %s1607
    %s1609 = sshrl.u32 %s1608, 2
    %s1610 = sor.u32 %s1608, %s1609
    %s1611 = sand.u32 15, %s1610
    %v1612 = vld [vmem:[%s1602] sm:%s1611]
    %v1613 = vunpack.c.l.bf16 %v1612
    %v1614 = vunpack.c.h.bf16 %v1612
    %1615 = xla_tuple %v1613, %v23
    %1616 = xla_tuple %1615
    %v1617 = vmax.f32 %v1613, %v23
    %1618 = xla_tuple %v1617
    %1619 = xla_tuple %v1617, %v18
    %1620 = xla_tuple %1619
    %v1621 = vmax.f32 %v1617, %v18
    %1622 = xla_tuple %v1621
    %1623 = xla_tuple %v1621, %v13
    %1624 = xla_tuple %1623
    %v1625 = vmax.f32 %v1621, %v13
    %1626 = xla_tuple %v1625
    %s1627 = scalar_lea.vmem [#allocation22], 92
    %v1628 = vpack.c.bf16 0.0, %v1625
    %s1630 = ssub.s32 16, 1
    %1631 = vst [vmem:[%s1627] sm:%s1630] %v1628
    %s1632 = scalar_lea.vmem %s50, 96
    %s1634 = sand.u32 0, 85
    %s1635 = sshrl.u32 %s1634, 1
    %s1636 = sor.u32 %s1634, %s1635
    %s1637 = sand.u32 51, %s1636
    %s1638 = sshrl.u32 %s1637, 2
    %s1639 = sor.u32 %s1637, %s1638
    %s1640 = sand.u32 15, %s1639
    %v1641 = vld [vmem:[%s1632] sm:%s1640]
    %v1642 = vunpack.c.l.bf16 %v1641
    %v1643 = vunpack.c.h.bf16 %v1641
    %s1644 = scalar_lea.vmem %s51, 96
    %s1646 = sand.u32 0, 85
    %s1647 = sshrl.u32 %s1646, 1
    %s1648 = sor.u32 %s1646, %s1647
    %s1649 = sand.u32 51, %s1648
    %s1650 = sshrl.u32 %s1649, 2
    %s1651 = sor.u32 %s1649, %s1650
    %s1652 = sand.u32 15, %s1651
    %v1653 = vld [vmem:[%s1644] sm:%s1652]
    %v1654 = vunpack.c.l.bf16 %v1653
    %v1655 = vunpack.c.h.bf16 %v1653
    %s1656 = scalar_lea.vmem %s52, 96
    %s1658 = sor.u32 255, 127
    %s1659 = sand.u32 %s1658, 85
    %s1660 = sshrl.u32 %s1659, 1
    %s1661 = sor.u32 %s1659, %s1660
    %s1662 = sand.u32 51, %s1661
    %s1663 = sshrl.u32 %s1662, 2
    %s1664 = sor.u32 %s1662, %s1663
    %s1665 = sand.u32 15, %s1664
    %v1666 = vld [vmem:[%s1656] sm:%s1665]
    %v1667 = vunpack.c.l.bf16 %v1666
    %v1668 = vunpack.c.h.bf16 %v1666
    %1669 = xla_tuple %v28, %v1667
    %1670 = xla_tuple %1669
    %v1671 = vmax.f32 %v28, %v1667
    %1672 = xla_tuple %v1671
    %1673 = xla_tuple %v1671, %v18
    %1674 = xla_tuple %1673
    %v1675 = vmax.f32 %v1671, %v18
    %1676 = xla_tuple %v1675
    %1677 = xla_tuple %v1675, %v13
    %1678 = xla_tuple %1677
    %v1679 = vmax.f32 %v1675, %v13
    %1680 = xla_tuple %v1679
    %s1681 = scalar_lea.vmem [#allocation22], 96
    %v1682 = vpack.c.bf16 0.0, %v1679
    %s1684 = ssub.s32 16, 1
    %1685 = vst [vmem:[%s1681] sm:%s1684] %v1682
    %s1686 = scalar_lea.vmem %s50, 100
    %s1688 = sand.u32 0, 85
    %s1689 = sshrl.u32 %s1688, 1
    %s1690 = sor.u32 %s1688, %s1689
    %s1691 = sand.u32 51, %s1690
    %s1692 = sshrl.u32 %s1691, 2
    %s1693 = sor.u32 %s1691, %s1692
    %s1694 = sand.u32 15, %s1693
    %v1695 = vld [vmem:[%s1686] sm:%s1694]
    %v1696 = vunpack.c.l.bf16 %v1695
    %v1697 = vunpack.c.h.bf16 %v1695
    %s1698 = scalar_lea.vmem %s51, 100
    %s1700 = sand.u32 0, 85
    %s1701 = sshrl.u32 %s1700, 1
    %s1702 = sor.u32 %s1700, %s1701
    %s1703 = sand.u32 51, %s1702
    %s1704 = sshrl.u32 %s1703, 2
    %s1705 = sor.u32 %s1703, %s1704
    %s1706 = sand.u32 15, %s1705
    %v1707 = vld [vmem:[%s1698] sm:%s1706]
    %v1708 = vunpack.c.l.bf16 %v1707
    %v1709 = vunpack.c.h.bf16 %v1707
    %s1710 = scalar_lea.vmem %s52, 100
    %s1712 = sor.u32 255, 127
    %s1713 = sand.u32 %s1712, 85
    %s1714 = sshrl.u32 %s1713, 1
    %s1715 = sor.u32 %s1713, %s1714
    %s1716 = sand.u32 51, %s1715
    %s1717 = sshrl.u32 %s1716, 2
    %s1718 = sor.u32 %s1716, %s1717
    %s1719 = sand.u32 15, %s1718
    %v1720 = vld [vmem:[%s1710] sm:%s1719]
    %v1721 = vunpack.c.l.bf16 %v1720
    %v1722 = vunpack.c.h.bf16 %v1720
    %1723 = xla_tuple %v28, %v1721
    %1724 = xla_tuple %1723
    %v1725 = vmax.f32 %v28, %v1721
    %1726 = xla_tuple %v1725
    %1727 = xla_tuple %v1725, %v18
    %1728 = xla_tuple %1727
    %v1729 = vmax.f32 %v1725, %v18
    %1730 = xla_tuple %v1729
    %1731 = xla_tuple %v1729, %v13
    %1732 = xla_tuple %1731
    %v1733 = vmax.f32 %v1729, %v13
    %1734 = xla_tuple %v1733
    %s1735 = scalar_lea.vmem [#allocation22], 100
    %v1736 = vpack.c.bf16 0.0, %v1733
    %s1738 = ssub.s32 16, 1
    %1739 = vst [vmem:[%s1735] sm:%s1738] %v1736
    %s1740 = scalar_lea.vmem %s50, 104
    %s1742 = sand.u32 0, 85
    %s1743 = sshrl.u32 %s1742, 1
    %s1744 = sor.u32 %s1742, %s1743
    %s1745 = sand.u32 51, %s1744
    %s1746 = sshrl.u32 %s1745, 2
    %s1747 = sor.u32 %s1745, %s1746
    %s1748 = sand.u32 15, %s1747
    %v1749 = vld [vmem:[%s1740] sm:%s1748]
    %v1750 = vunpack.c.l.bf16 %v1749
    %v1751 = vunpack.c.h.bf16 %v1749
    %s1752 = scalar_lea.vmem %s51, 104
    %s1754 = sand.u32 0, 85
    %s1755 = sshrl.u32 %s1754, 1
    %s1756 = sor.u32 %s1754, %s1755
    %s1757 = sand.u32 51, %s1756
    %s1758 = sshrl.u32 %s1757, 2
    %s1759 = sor.u32 %s1757, %s1758
    %s1760 = sand.u32 15, %s1759
    %v1761 = vld [vmem:[%s1752] sm:%s1760]
    %v1762 = vunpack.c.l.bf16 %v1761
    %v1763 = vunpack.c.h.bf16 %v1761
    %s1764 = scalar_lea.vmem %s52, 104
    %s1766 = sor.u32 255, 127
    %s1767 = sand.u32 %s1766, 85
    %s1768 = sshrl.u32 %s1767, 1
    %s1769 = sor.u32 %s1767, %s1768
    %s1770 = sand.u32 51, %s1769
    %s1771 = sshrl.u32 %s1770, 2
    %s1772 = sor.u32 %s1770, %s1771
    %s1773 = sand.u32 15, %s1772
    %v1774 = vld [vmem:[%s1764] sm:%s1773]
    %v1775 = vunpack.c.l.bf16 %v1774
    %v1776 = vunpack.c.h.bf16 %v1774
    %1777 = xla_tuple %v28, %v1775
    %1778 = xla_tuple %1777
    %v1779 = vmax.f32 %v28, %v1775
    %1780 = xla_tuple %v1779
    %1781 = xla_tuple %v1779, %v18
    %1782 = xla_tuple %1781
    %v1783 = vmax.f32 %v1779, %v18
    %1784 = xla_tuple %v1783
    %1785 = xla_tuple %v1783, %v13
    %1786 = xla_tuple %1785
    %v1787 = vmax.f32 %v1783, %v13
    %1788 = xla_tuple %v1787
    %s1789 = scalar_lea.vmem [#allocation22], 104
    %v1790 = vpack.c.bf16 0.0, %v1787
    %s1792 = ssub.s32 16, 1
    %1793 = vst [vmem:[%s1789] sm:%s1792] %v1790
    %s1794 = scalar_lea.vmem %s50, 108
    %s1796 = sand.u32 0, 85
    %s1797 = sshrl.u32 %s1796, 1
    %s1798 = sor.u32 %s1796, %s1797
    %s1799 = sand.u32 51, %s1798
    %s1800 = sshrl.u32 %s1799, 2
    %s1801 = sor.u32 %s1799, %s1800
    %s1802 = sand.u32 15, %s1801
    %v1803 = vld [vmem:[%s1794] sm:%s1802]
    %v1804 = vunpack.c.l.bf16 %v1803
    %v1805 = vunpack.c.h.bf16 %v1803
    %s1806 = scalar_lea.vmem %s51, 108
    %s1808 = sand.u32 0, 85
    %s1809 = sshrl.u32 %s1808, 1
    %s1810 = sor.u32 %s1808, %s1809
    %s1811 = sand.u32 51, %s1810
    %s1812 = sshrl.u32 %s1811, 2
    %s1813 = sor.u32 %s1811, %s1812
    %s1814 = sand.u32 15, %s1813
    %v1815 = vld [vmem:[%s1806] sm:%s1814]
    %v1816 = vunpack.c.l.bf16 %v1815
    %v1817 = vunpack.c.h.bf16 %v1815
    %s1818 = scalar_lea.vmem %s52, 108
    %s1820 = sor.u32 255, 127
    %s1821 = sand.u32 %s1820, 85
    %s1822 = sshrl.u32 %s1821, 1
    %s1823 = sor.u32 %s1821, %s1822
    %s1824 = sand.u32 51, %s1823
    %s1825 = sshrl.u32 %s1824, 2
    %s1826 = sor.u32 %s1824, %s1825
    %s1827 = sand.u32 15, %s1826
    %v1828 = vld [vmem:[%s1818] sm:%s1827]
    %v1829 = vunpack.c.l.bf16 %v1828
    %v1830 = vunpack.c.h.bf16 %v1828
    %1831 = xla_tuple %v28, %v1829
    %1832 = xla_tuple %1831
    %v1833 = vmax.f32 %v28, %v1829
    %1834 = xla_tuple %v1833
    %1835 = xla_tuple %v1833, %v18
    %1836 = xla_tuple %1835
    %v1837 = vmax.f32 %v1833, %v18
    %1838 = xla_tuple %v1837
    %1839 = xla_tuple %v1837, %v13
    %1840 = xla_tuple %1839
    %v1841 = vmax.f32 %v1837, %v13
    %1842 = xla_tuple %v1841
    %s1843 = scalar_lea.vmem [#allocation22], 108
    %v1844 = vpack.c.bf16 0.0, %v1841
    %s1846 = ssub.s32 16, 1
    %1847 = vst [vmem:[%s1843] sm:%s1846] %v1844
    %s1848 = scalar_lea.vmem %s50, 112
    %s1850 = sand.u32 0, 85
    %s1851 = sshrl.u32 %s1850, 1
    %s1852 = sor.u32 %s1850, %s1851
    %s1853 = sand.u32 51, %s1852
    %s1854 = sshrl.u32 %s1853, 2
    %s1855 = sor.u32 %s1853, %s1854
    %s1856 = sand.u32 15, %s1855
    %v1857 = vld [vmem:[%s1848] sm:%s1856]
    %v1858 = vunpack.c.l.bf16 %v1857
    %v1859 = vunpack.c.h.bf16 %v1857
    %s1860 = scalar_lea.vmem %s51, 112
    %s1862 = sand.u32 0, 85
    %s1863 = sshrl.u32 %s1862, 1
    %s1864 = sor.u32 %s1862, %s1863
    %s1865 = sand.u32 51, %s1864
    %s1866 = sshrl.u32 %s1865, 2
    %s1867 = sor.u32 %s1865, %s1866
    %s1868 = sand.u32 15, %s1867
    %v1869 = vld [vmem:[%s1860] sm:%s1868]
    %v1870 = vunpack.c.l.bf16 %v1869
    %v1871 = vunpack.c.h.bf16 %v1869
    %s1872 = scalar_lea.vmem %s52, 112
    %s1874 = sor.u32 255, 127
    %s1875 = sand.u32 %s1874, 85
    %s1876 = sshrl.u32 %s1875, 1
    %s1877 = sor.u32 %s1875, %s1876
    %s1878 = sand.u32 51, %s1877
    %s1879 = sshrl.u32 %s1878, 2
    %s1880 = sor.u32 %s1878, %s1879
    %s1881 = sand.u32 15, %s1880
    %v1882 = vld [vmem:[%s1872] sm:%s1881]
    %v1883 = vunpack.c.l.bf16 %v1882
    %v1884 = vunpack.c.h.bf16 %v1882
    %1885 = xla_tuple %v28, %v1883
    %1886 = xla_tuple %1885
    %v1887 = vmax.f32 %v28, %v1883
    %1888 = xla_tuple %v1887
    %1889 = xla_tuple %v1887, %v18
    %1890 = xla_tuple %1889
    %v1891 = vmax.f32 %v1887, %v18
    %1892 = xla_tuple %v1891
    %1893 = xla_tuple %v1891, %v13
    %1894 = xla_tuple %1893
    %v1895 = vmax.f32 %v1891, %v13
    %1896 = xla_tuple %v1895
    %s1897 = scalar_lea.vmem [#allocation22], 112
    %v1898 = vpack.c.bf16 0.0, %v1895
    %s1900 = ssub.s32 16, 1
    %1901 = vst [vmem:[%s1897] sm:%s1900] %v1898
    %s1902 = scalar_lea.vmem %s50, 116
    %s1904 = sand.u32 0, 85
    %s1905 = sshrl.u32 %s1904, 1
    %s1906 = sor.u32 %s1904, %s1905
    %s1907 = sand.u32 51, %s1906
    %s1908 = sshrl.u32 %s1907, 2
    %s1909 = sor.u32 %s1907, %s1908
    %s1910 = sand.u32 15, %s1909
    %v1911 = vld [vmem:[%s1902] sm:%s1910]
    %v1912 = vunpack.c.l.bf16 %v1911
    %v1913 = vunpack.c.h.bf16 %v1911
    %s1914 = scalar_lea.vmem %s51, 116
    %s1916 = sand.u32 0, 85
    %s1917 = sshrl.u32 %s1916, 1
    %s1918 = sor.u32 %s1916, %s1917
    %s1919 = sand.u32 51, %s1918
    %s1920 = sshrl.u32 %s1919, 2
    %s1921 = sor.u32 %s1919, %s1920
    %s1922 = sand.u32 15, %s1921
    %v1923 = vld [vmem:[%s1914] sm:%s1922]
    %v1924 = vunpack.c.l.bf16 %v1923
    %v1925 = vunpack.c.h.bf16 %v1923
    %s1926 = scalar_lea.vmem %s52, 116
    %s1928 = sor.u32 255, 127
    %s1929 = sand.u32 %s1928, 85
    %s1930 = sshrl.u32 %s1929, 1
    %s1931 = sor.u32 %s1929, %s1930
    %s1932 = sand.u32 51, %s1931
    %s1933 = sshrl.u32 %s1932, 2
    %s1934 = sor.u32 %s1932, %s1933
    %s1935 = sand.u32 15, %s1934
    %v1936 = vld [vmem:[%s1926] sm:%s1935]
    %v1937 = vunpack.c.l.bf16 %v1936
    %v1938 = vunpack.c.h.bf16 %v1936
    %1939 = xla_tuple %v28, %v1937
    %1940 = xla_tuple %1939
    %v1941 = vmax.f32 %v28, %v1937
    %1942 = xla_tuple %v1941
    %1943 = xla_tuple %v1941, %v18
    %1944 = xla_tuple %1943
    %v1945 = vmax.f32 %v1941, %v18
    %1946 = xla_tuple %v1945
    %1947 = xla_tuple %v1945, %v13
    %1948 = xla_tuple %1947
    %v1949 = vmax.f32 %v1945, %v13
    %1950 = xla_tuple %v1949
    %s1951 = scalar_lea.vmem [#allocation22], 116
    %v1952 = vpack.c.bf16 0.0, %v1949
    %s1954 = ssub.s32 16, 1
    %1955 = vst [vmem:[%s1951] sm:%s1954] %v1952
    %s1956 = scalar_lea.vmem %s50, 120
    %s1958 = sand.u32 0, 85
    %s1959 = sshrl.u32 %s1958, 1
    %s1960 = sor.u32 %s1958, %s1959
    %s1961 = sand.u32 51, %s1960
    %s1962 = sshrl.u32 %s1961, 2
    %s1963 = sor.u32 %s1961, %s1962
    %s1964 = sand.u32 15, %s1963
    %v1965 = vld [vmem:[%s1956] sm:%s1964]
    %v1966 = vunpack.c.l.bf16 %v1965
    %v1967 = vunpack.c.h.bf16 %v1965
    %s1968 = scalar_lea.vmem %s51, 120
    %s1970 = sand.u32 0, 85
    %s1971 = sshrl.u32 %s1970, 1
    %s1972 = sor.u32 %s1970, %s1971
    %s1973 = sand.u32 51, %s1972
    %s1974 = sshrl.u32 %s1973, 2
    %s1975 = sor.u32 %s1973, %s1974
    %s1976 = sand.u32 15, %s1975
    %v1977 = vld [vmem:[%s1968] sm:%s1976]
    %v1978 = vunpack.c.l.bf16 %v1977
    %v1979 = vunpack.c.h.bf16 %v1977
    %s1980 = scalar_lea.vmem %s52, 120
    %s1982 = sor.u32 255, 127
    %s1983 = sand.u32 %s1982, 85
    %s1984 = sshrl.u32 %s1983, 1
    %s1985 = sor.u32 %s1983, %s1984
    %s1986 = sand.u32 51, %s1985
    %s1987 = sshrl.u32 %s1986, 2
    %s1988 = sor.u32 %s1986, %s1987
    %s1989 = sand.u32 15, %s1988
    %v1990 = vld [vmem:[%s1980] sm:%s1989]
    %v1991 = vunpack.c.l.bf16 %v1990
    %v1992 = vunpack.c.h.bf16 %v1990
    %1993 = xla_tuple %v28, %v1991
    %1994 = xla_tuple %1993
    %v1995 = vmax.f32 %v28, %v1991
    %1996 = xla_tuple %v1995
    %1997 = xla_tuple %v1995, %v18
    %1998 = xla_tuple %1997
    %v1999 = vmax.f32 %v1995, %v18
    %2000 = xla_tuple %v1999
    %2001 = xla_tuple %v1999, %v13
    %2002 = xla_tuple %2001
    %v2003 = vmax.f32 %v1999, %v13
    %2004 = xla_tuple %v2003
    %s2005 = scalar_lea.vmem [#allocation22], 120
    %v2006 = vpack.c.bf16 0.0, %v2003
    %s2008 = ssub.s32 16, 1
    %2009 = vst [vmem:[%s2005] sm:%s2008] %v2006
    %s2010 = scalar_lea.vmem %s50, 124
    %s2012 = sand.u32 0, 85
    %s2013 = sshrl.u32 %s2012, 1
    %s2014 = sor.u32 %s2012, %s2013
    %s2015 = sand.u32 51, %s2014
    %s2016 = sshrl.u32 %s2015, 2
    %s2017 = sor.u32 %s2015, %s2016
    %s2018 = sand.u32 15, %s2017
    %v2019 = vld [vmem:[%s2010] sm:%s2018]
    %v2020 = vunpack.c.l.bf16 %v2019
    %v2021 = vunpack.c.h.bf16 %v2019
    %s2022 = scalar_lea.vmem %s51, 124
    %s2024 = sand.u32 0, 85
    %s2025 = sshrl.u32 %s2024, 1
    %s2026 = sor.u32 %s2024, %s2025
    %s2027 = sand.u32 51, %s2026
    %s2028 = sshrl.u32 %s2027, 2
    %s2029 = sor.u32 %s2027, %s2028
    %s2030 = sand.u32 15, %s2029
    %v2031 = vld [vmem:[%s2022] sm:%s2030]
    %v2032 = vunpack.c.l.bf16 %v2031
    %v2033 = vunpack.c.h.bf16 %v2031
    %s2034 = scalar_lea.vmem %s52, 124
    %s2036 = sor.u32 255, 127
    %s2037 = sand.u32 %s2036, 85
    %s2038 = sshrl.u32 %s2037, 1
    %s2039 = sor.u32 %s2037, %s2038
    %s2040 = sand.u32 51, %s2039
    %s2041 = sshrl.u32 %s2040, 2
    %s2042 = sor.u32 %s2040, %s2041
    %s2043 = sand.u32 15, %s2042
    %v2044 = vld [vmem:[%s2034] sm:%s2043]
    %v2045 = vunpack.c.l.bf16 %v2044
    %v2046 = vunpack.c.h.bf16 %v2044
    %2047 = xla_tuple %v28, %v2045
    %2048 = xla_tuple %2047
    %v2049 = vmax.f32 %v28, %v2045
    %2050 = xla_tuple %v2049
    %2051 = xla_tuple %v2049, %v18
    %2052 = xla_tuple %2051
    %v2053 = vmax.f32 %v2049, %v18
    %2054 = xla_tuple %v2053
    %2055 = xla_tuple %v2053, %v13
    %2056 = xla_tuple %2055
    %v2057 = vmax.f32 %v2053, %v13
    %2058 = xla_tuple %v2057
    %s2059 = scalar_lea.vmem [#allocation22], 124
    %v2060 = vpack.c.bf16 0.0, %v2057
    %s2062 = ssub.s32 16, 1
    %2063 = vst [vmem:[%s2059] sm:%s2062] %v2060
    %s2064 = scalar_lea.vmem %s50, 128
    %s2066 = sand.u32 0, 85
    %s2067 = sshrl.u32 %s2066, 1
    %s2068 = sor.u32 %s2066, %s2067
    %s2069 = sand.u32 51, %s2068
    %s2070 = sshrl.u32 %s2069, 2
    %s2071 = sor.u32 %s2069, %s2070
    %s2072 = sand.u32 15, %s2071
    %v2073 = vld [vmem:[%s2064] sm:%s2072]
    %v2074 = vunpack.c.l.bf16 %v2073
    %v2075 = vunpack.c.h.bf16 %v2073
    %s2076 = scalar_lea.vmem %s51, 128
    %s2078 = sand.u32 0, 85
    %s2079 = sshrl.u32 %s2078, 1
    %s2080 = sor.u32 %s2078, %s2079
    %s2081 = sand.u32 51, %s2080
    %s2082 = sshrl.u32 %s2081, 2
    %s2083 = sor.u32 %s2081, %s2082
    %s2084 = sand.u32 15, %s2083
    %v2085 = vld [vmem:[%s2076] sm:%s2084]
    %v2086 = vunpack.c.l.bf16 %v2085
    %v2087 = vunpack.c.h.bf16 %v2085
    %s2088 = scalar_lea.vmem %s52, 128
    %s2090 = sor.u32 255, 127
    %s2091 = sand.u32 %s2090, 85
    %s2092 = sshrl.u32 %s2091, 1
    %s2093 = sor.u32 %s2091, %s2092
    %s2094 = sand.u32 51, %s2093
    %s2095 = sshrl.u32 %s2094, 2
    %s2096 = sor.u32 %s2094, %s2095
    %s2097 = sand.u32 15, %s2096
    %v2098 = vld [vmem:[%s2088] sm:%s2097]
    %v2099 = vunpack.c.l.bf16 %v2098
    %v2100 = vunpack.c.h.bf16 %v2098
    %2101 = xla_tuple %v28, %v2099
    %2102 = xla_tuple %2101
    %v2103 = vmax.f32 %v28, %v2099
    %2104 = xla_tuple %v2103
    %2105 = xla_tuple %v2103, %v18
    %2106 = xla_tuple %2105
    %v2107 = vmax.f32 %v2103, %v18
    %2108 = xla_tuple %v2107
    %2109 = xla_tuple %v2107, %v13
    %2110 = xla_tuple %2109
    %v2111 = vmax.f32 %v2107, %v13
    %2112 = xla_tuple %v2111
    %s2113 = scalar_lea.vmem [#allocation22], 128
    %v2114 = vpack.c.bf16 0.0, %v2111
    %s2116 = ssub.s32 16, 1
    %2117 = vst [vmem:[%s2113] sm:%s2116] %v2114
    %s2118 = scalar_lea.vmem %s50, 132
    %s2120 = sand.u32 0, 85
    %s2121 = sshrl.u32 %s2120, 1
    %s2122 = sor.u32 %s2120, %s2121
    %s2123 = sand.u32 51, %s2122
    %s2124 = sshrl.u32 %s2123, 2
    %s2125 = sor.u32 %s2123, %s2124
    %s2126 = sand.u32 15, %s2125
    %v2127 = vld [vmem:[%s2118] sm:%s2126]
    %v2128 = vunpack.c.l.bf16 %v2127
    %v2129 = vunpack.c.h.bf16 %v2127
    %s2130 = scalar_lea.vmem %s51, 132
    %s2132 = sand.u32 0, 85
    %s2133 = sshrl.u32 %s2132, 1
    %s2134 = sor.u32 %s2132, %s2133
    %s2135 = sand.u32 51, %s2134
    %s2136 = sshrl.u32 %s2135, 2
    %s2137 = sor.u32 %s2135, %s2136
    %s2138 = sand.u32 15, %s2137
    %v2139 = vld [vmem:[%s2130] sm:%s2138]
    %v2140 = vunpack.c.l.bf16 %v2139
    %v2141 = vunpack.c.h.bf16 %v2139
    %s2142 = scalar_lea.vmem %s52, 132
    %s2144 = sor.u32 255, 127
    %s2145 = sand.u32 %s2144, 85
    %s2146 = sshrl.u32 %s2145, 1
    %s2147 = sor.u32 %s2145, %s2146
    %s2148 = sand.u32 51, %s2147
    %s2149 = sshrl.u32 %s2148, 2
    %s2150 = sor.u32 %s2148, %s2149
    %s2151 = sand.u32 15, %s2150
    %v2152 = vld [vmem:[%s2142] sm:%s2151]
    %v2153 = vunpack.c.l.bf16 %v2152
    %v2154 = vunpack.c.h.bf16 %v2152
    %2155 = xla_tuple %v28, %v2153
    %2156 = xla_tuple %2155
    %v2157 = vmax.f32 %v28, %v2153
    %2158 = xla_tuple %v2157
    %2159 = xla_tuple %v2157, %v18
    %2160 = xla_tuple %2159
    %v2161 = vmax.f32 %v2157, %v18
    %2162 = xla_tuple %v2161
    %2163 = xla_tuple %v2161, %v13
    %2164 = xla_tuple %2163
    %v2165 = vmax.f32 %v2161, %v13
    %2166 = xla_tuple %v2165
    %s2167 = scalar_lea.vmem [#allocation22], 132
    %v2168 = vpack.c.bf16 0.0, %v2165
    %s2170 = ssub.s32 16, 1
    %2171 = vst [vmem:[%s2167] sm:%s2170] %v2168
    %s2172 = scalar_lea.vmem %s50, 136
    %s2174 = sand.u32 0, 85
    %s2175 = sshrl.u32 %s2174, 1
    %s2176 = sor.u32 %s2174, %s2175
    %s2177 = sand.u32 51, %s2176
    %s2178 = sshrl.u32 %s2177, 2
    %s2179 = sor.u32 %s2177, %s2178
    %s2180 = sand.u32 15, %s2179
    %v2181 = vld [vmem:[%s2172] sm:%s2180]
    %v2182 = vunpack.c.l.bf16 %v2181
    %v2183 = vunpack.c.h.bf16 %v2181
    %s2184 = scalar_lea.vmem %s51, 136
    %s2186 = sand.u32 0, 85
    %s2187 = sshrl.u32 %s2186, 1
    %s2188 = sor.u32 %s2186, %s2187
    %s2189 = sand.u32 51, %s2188
    %s2190 = sshrl.u32 %s2189, 2
    %s2191 = sor.u32 %s2189, %s2190
    %s2192 = sand.u32 15, %s2191
    %v2193 = vld [vmem:[%s2184] sm:%s2192]
    %v2194 = vunpack.c.l.bf16 %v2193
    %v2195 = vunpack.c.h.bf16 %v2193
    %s2196 = scalar_lea.vmem %s52, 136
    %s2198 = sor.u32 255, 127
    %s2199 = sand.u32 %s2198, 85
    %s2200 = sshrl.u32 %s2199, 1
    %s2201 = sor.u32 %s2199, %s2200
    %s2202 = sand.u32 51, %s2201
    %s2203 = sshrl.u32 %s2202, 2
    %s2204 = sor.u32 %s2202, %s2203
    %s2205 = sand.u32 15, %s2204
    %v2206 = vld [vmem:[%s2196] sm:%s2205]
    %v2207 = vunpack.c.l.bf16 %v2206
    %v2208 = vunpack.c.h.bf16 %v2206
    %2209 = xla_tuple %v28, %v2207
    %2210 = xla_tuple %2209
    %v2211 = vmax.f32 %v28, %v2207
    %2212 = xla_tuple %v2211
    %2213 = xla_tuple %v2211, %v18
    %2214 = xla_tuple %2213
    %v2215 = vmax.f32 %v2211, %v18
    %2216 = xla_tuple %v2215
    %2217 = xla_tuple %v2215, %v13
    %2218 = xla_tuple %2217
    %v2219 = vmax.f32 %v2215, %v13
    %2220 = xla_tuple %v2219
    %s2221 = scalar_lea.vmem [#allocation22], 136
    %v2222 = vpack.c.bf16 0.0, %v2219
    %s2224 = ssub.s32 16, 1
    %2225 = vst [vmem:[%s2221] sm:%s2224] %v2222
    %s2226 = scalar_lea.vmem %s50, 140
    %s2228 = sand.u32 0, 85
    %s2229 = sshrl.u32 %s2228, 1
    %s2230 = sor.u32 %s2228, %s2229
    %s2231 = sand.u32 51, %s2230
    %s2232 = sshrl.u32 %s2231, 2
    %s2233 = sor.u32 %s2231, %s2232
    %s2234 = sand.u32 15, %s2233
    %v2235 = vld [vmem:[%s2226] sm:%s2234]
    %v2236 = vunpack.c.l.bf16 %v2235
    %v2237 = vunpack.c.h.bf16 %v2235
    %s2238 = scalar_lea.vmem %s51, 140
    %s2240 = sand.u32 0, 85
    %s2241 = sshrl.u32 %s2240, 1
    %s2242 = sor.u32 %s2240, %s2241
    %s2243 = sand.u32 51, %s2242
    %s2244 = sshrl.u32 %s2243, 2
    %s2245 = sor.u32 %s2243, %s2244
    %s2246 = sand.u32 15, %s2245
    %v2247 = vld [vmem:[%s2238] sm:%s2246]
    %v2248 = vunpack.c.l.bf16 %v2247
    %v2249 = vunpack.c.h.bf16 %v2247
    %s2250 = scalar_lea.vmem %s52, 140
    %s2252 = sor.u32 255, 127
    %s2253 = sand.u32 %s2252, 85
    %s2254 = sshrl.u32 %s2253, 1
    %s2255 = sor.u32 %s2253, %s2254
    %s2256 = sand.u32 51, %s2255
    %s2257 = sshrl.u32 %s2256, 2
    %s2258 = sor.u32 %s2256, %s2257
    %s2259 = sand.u32 15, %s2258
    %v2260 = vld [vmem:[%s2250] sm:%s2259]
    %v2261 = vunpack.c.l.bf16 %v2260
    %v2262 = vunpack.c.h.bf16 %v2260
    %2263 = xla_tuple %v28, %v2261
    %2264 = xla_tuple %2263
    %v2265 = vmax.f32 %v28, %v2261
    %2266 = xla_tuple %v2265
    %2267 = xla_tuple %v2265, %v18
    %2268 = xla_tuple %2267
    %v2269 = vmax.f32 %v2265, %v18
    %2270 = xla_tuple %v2269
    %2271 = xla_tuple %v2269, %v13
    %2272 = xla_tuple %2271
    %v2273 = vmax.f32 %v2269, %v13
    %2274 = xla_tuple %v2273
    %s2275 = scalar_lea.vmem [#allocation22], 140
    %v2276 = vpack.c.bf16 0.0, %v2273
    %s2278 = ssub.s32 16, 1
    %2279 = vst [vmem:[%s2275] sm:%s2278] %v2276
    %s2280 = scalar_lea.vmem %s50, 144
    %s2282 = sand.u32 0, 85
    %s2283 = sshrl.u32 %s2282, 1
    %s2284 = sor.u32 %s2282, %s2283
    %s2285 = sand.u32 51, %s2284
    %s2286 = sshrl.u32 %s2285, 2
    %s2287 = sor.u32 %s2285, %s2286
    %s2288 = sand.u32 15, %s2287
    %v2289 = vld [vmem:[%s2280] sm:%s2288]
    %v2290 = vunpack.c.l.bf16 %v2289
    %v2291 = vunpack.c.h.bf16 %v2289
    %s2292 = scalar_lea.vmem %s51, 144
    %s2294 = sand.u32 0, 85
    %s2295 = sshrl.u32 %s2294, 1
    %s2296 = sor.u32 %s2294, %s2295
    %s2297 = sand.u32 51, %s2296
    %s2298 = sshrl.u32 %s2297, 2
    %s2299 = sor.u32 %s2297, %s2298
    %s2300 = sand.u32 15, %s2299
    %v2301 = vld [vmem:[%s2292] sm:%s2300]
    %v2302 = vunpack.c.l.bf16 %v2301
    %v2303 = vunpack.c.h.bf16 %v2301
    %s2304 = scalar_lea.vmem %s52, 144
    %s2306 = sor.u32 255, 127
    %s2307 = sand.u32 %s2306, 85
    %s2308 = sshrl.u32 %s2307, 1
    %s2309 = sor.u32 %s2307, %s2308
    %s2310 = sand.u32 51, %s2309
    %s2311 = sshrl.u32 %s2310, 2
    %s2312 = sor.u32 %s2310, %s2311
    %s2313 = sand.u32 15, %s2312
    %v2314 = vld [vmem:[%s2304] sm:%s2313]
    %v2315 = vunpack.c.l.bf16 %v2314
    %v2316 = vunpack.c.h.bf16 %v2314
    %2317 = xla_tuple %v28, %v2315
    %2318 = xla_tuple %2317
    %v2319 = vmax.f32 %v28, %v2315
    %2320 = xla_tuple %v2319
    %2321 = xla_tuple %v2319, %v18
    %2322 = xla_tuple %2321
    %v2323 = vmax.f32 %v2319, %v18
    %2324 = xla_tuple %v2323
    %2325 = xla_tuple %v2323, %v13
    %2326 = xla_tuple %2325
    %v2327 = vmax.f32 %v2323, %v13
    %2328 = xla_tuple %v2327
    %s2329 = scalar_lea.vmem [#allocation22], 144
    %v2330 = vpack.c.bf16 0.0, %v2327
    %s2332 = ssub.s32 16, 1
    %2333 = vst [vmem:[%s2329] sm:%s2332] %v2330
    %s2334 = scalar_lea.vmem %s50, 148
    %s2336 = sand.u32 0, 85
    %s2337 = sshrl.u32 %s2336, 1
    %s2338 = sor.u32 %s2336, %s2337
    %s2339 = sand.u32 51, %s2338
    %s2340 = sshrl.u32 %s2339, 2
    %s2341 = sor.u32 %s2339, %s2340
    %s2342 = sand.u32 15, %s2341
    %v2343 = vld [vmem:[%s2334] sm:%s2342]
    %v2344 = vunpack.c.l.bf16 %v2343
    %v2345 = vunpack.c.h.bf16 %v2343
    %s2346 = scalar_lea.vmem %s51, 148
    %s2348 = sand.u32 0, 85
    %s2349 = sshrl.u32 %s2348, 1
    %s2350 = sor.u32 %s2348, %s2349
    %s2351 = sand.u32 51, %s2350
    %s2352 = sshrl.u32 %s2351, 2
    %s2353 = sor.u32 %s2351, %s2352
    %s2354 = sand.u32 15, %s2353
    %v2355 = vld [vmem:[%s2346] sm:%s2354]
    %v2356 = vunpack.c.l.bf16 %v2355
    %v2357 = vunpack.c.h.bf16 %v2355
    %s2358 = scalar_lea.vmem %s52, 148
    %s2360 = sor.u32 255, 127
    %s2361 = sand.u32 %s2360, 85
    %s2362 = sshrl.u32 %s2361, 1
    %s2363 = sor.u32 %s2361, %s2362
    %s2364 = sand.u32 51, %s2363
    %s2365 = sshrl.u32 %s2364, 2
    %s2366 = sor.u32 %s2364, %s2365
    %s2367 = sand.u32 15, %s2366
    %v2368 = vld [vmem:[%s2358] sm:%s2367]
    %v2369 = vunpack.c.l.bf16 %v2368
    %v2370 = vunpack.c.h.bf16 %v2368
    %2371 = xla_tuple %v28, %v2369
    %2372 = xla_tuple %2371
    %v2373 = vmax.f32 %v28, %v2369
    %2374 = xla_tuple %v2373
    %2375 = xla_tuple %v2373, %v18
    %2376 = xla_tuple %2375
    %v2377 = vmax.f32 %v2373, %v18
    %2378 = xla_tuple %v2377
    %2379 = xla_tuple %v2377, %v13
    %2380 = xla_tuple %2379
    %v2381 = vmax.f32 %v2377, %v13
    %2382 = xla_tuple %v2381
    %s2383 = scalar_lea.vmem [#allocation22], 148
    %v2384 = vpack.c.bf16 0.0, %v2381
    %s2386 = ssub.s32 16, 1
    %2387 = vst [vmem:[%s2383] sm:%s2386] %v2384
    %s2388 = scalar_lea.vmem %s50, 152
    %s2390 = sand.u32 0, 85
    %s2391 = sshrl.u32 %s2390, 1
    %s2392 = sor.u32 %s2390, %s2391
    %s2393 = sand.u32 51, %s2392
    %s2394 = sshrl.u32 %s2393, 2
    %s2395 = sor.u32 %s2393, %s2394
    %s2396 = sand.u32 15, %s2395
    %v2397 = vld [vmem:[%s2388] sm:%s2396]
    %v2398 = vunpack.c.l.bf16 %v2397
    %v2399 = vunpack.c.h.bf16 %v2397
    %s2400 = scalar_lea.vmem %s51, 152
    %s2402 = sand.u32 0, 85
    %s2403 = sshrl.u32 %s2402, 1
    %s2404 = sor.u32 %s2402, %s2403
    %s2405 = sand.u32 51, %s2404
    %s2406 = sshrl.u32 %s2405, 2
    %s2407 = sor.u32 %s2405, %s2406
    %s2408 = sand.u32 15, %s2407
    %v2409 = vld [vmem:[%s2400] sm:%s2408]
    %v2410 = vunpack.c.l.bf16 %v2409
    %v2411 = vunpack.c.h.bf16 %v2409
    %s2412 = scalar_lea.vmem %s52, 152
    %s2414 = sor.u32 255, 127
    %s2415 = sand.u32 %s2414, 85
    %s2416 = sshrl.u32 %s2415, 1
    %s2417 = sor.u32 %s2415, %s2416
    %s2418 = sand.u32 51, %s2417
    %s2419 = sshrl.u32 %s2418, 2
    %s2420 = sor.u32 %s2418, %s2419
    %s2421 = sand.u32 15, %s2420
    %v2422 = vld [vmem:[%s2412] sm:%s2421]
    %v2423 = vunpack.c.l.bf16 %v2422
    %v2424 = vunpack.c.h.bf16 %v2422
    %2425 = xla_tuple %v28, %v2423
    %2426 = xla_tuple %2425
    %v2427 = vmax.f32 %v28, %v2423
    %2428 = xla_tuple %v2427
    %2429 = xla_tuple %v2427, %v18
    %2430 = xla_tuple %2429
    %v2431 = vmax.f32 %v2427, %v18
    %2432 = xla_tuple %v2431
    %2433 = xla_tuple %v2431, %v13
    %2434 = xla_tuple %2433
    %v2435 = vmax.f32 %v2431, %v13
    %2436 = xla_tuple %v2435
    %s2437 = scalar_lea.vmem [#allocation22], 152
    %v2438 = vpack.c.bf16 0.0, %v2435
    %s2440 = ssub.s32 16, 1
    %2441 = vst [vmem:[%s2437] sm:%s2440] %v2438
    %s2442 = scalar_lea.vmem %s50, 156
    %s2444 = sand.u32 0, 85
    %s2445 = sshrl.u32 %s2444, 1
    %s2446 = sor.u32 %s2444, %s2445
    %s2447 = sand.u32 51, %s2446
    %s2448 = sshrl.u32 %s2447, 2
    %s2449 = sor.u32 %s2447, %s2448
    %s2450 = sand.u32 15, %s2449
    %v2451 = vld [vmem:[%s2442] sm:%s2450]
    %v2452 = vunpack.c.l.bf16 %v2451
    %v2453 = vunpack.c.h.bf16 %v2451
    %s2454 = scalar_lea.vmem %s51, 156
    %s2456 = sand.u32 0, 85
    %s2457 = sshrl.u32 %s2456, 1
    %s2458 = sor.u32 %s2456, %s2457
    %s2459 = sand.u32 51, %s2458
    %s2460 = sshrl.u32 %s2459, 2
    %s2461 = sor.u32 %s2459, %s2460
    %s2462 = sand.u32 15, %s2461
    %v2463 = vld [vmem:[%s2454] sm:%s2462]
    %v2464 = vunpack.c.l.bf16 %v2463
    %v2465 = vunpack.c.h.bf16 %v2463
    %s2466 = scalar_lea.vmem %s52, 156
    %s2468 = sor.u32 255, 127
    %s2469 = sand.u32 %s2468, 85
    %s2470 = sshrl.u32 %s2469, 1
    %s2471 = sor.u32 %s2469, %s2470
    %s2472 = sand.u32 51, %s2471
    %s2473 = sshrl.u32 %s2472, 2
    %s2474 = sor.u32 %s2472, %s2473
    %s2475 = sand.u32 15, %s2474
    %v2476 = vld [vmem:[%s2466] sm:%s2475]
    %v2477 = vunpack.c.l.bf16 %v2476
    %v2478 = vunpack.c.h.bf16 %v2476
    %2479 = xla_tuple %v28, %v2477
    %2480 = xla_tuple %2479
    %v2481 = vmax.f32 %v28, %v2477
    %2482 = xla_tuple %v2481
    %2483 = xla_tuple %v2481, %v18
    %2484 = xla_tuple %2483
    %v2485 = vmax.f32 %v2481, %v18
    %2486 = xla_tuple %v2485
    %2487 = xla_tuple %v2485, %v13
    %2488 = xla_tuple %2487
    %v2489 = vmax.f32 %v2485, %v13
    %2490 = xla_tuple %v2489
    %s2491 = scalar_lea.vmem [#allocation22], 156
    %v2492 = vpack.c.bf16 0.0, %v2489
    %s2494 = ssub.s32 16, 1
    %2495 = vst [vmem:[%s2491] sm:%s2494] %v2492
    %s2496 = scalar_lea.vmem %s50, 160
    %s2498 = sand.u32 0, 85
    %s2499 = sshrl.u32 %s2498, 1
    %s2500 = sor.u32 %s2498, %s2499
    %s2501 = sand.u32 51, %s2500
    %s2502 = sshrl.u32 %s2501, 2
    %s2503 = sor.u32 %s2501, %s2502
    %s2504 = sand.u32 15, %s2503
    %v2505 = vld [vmem:[%s2496] sm:%s2504]
    %v2506 = vunpack.c.l.bf16 %v2505
    %v2507 = vunpack.c.h.bf16 %v2505
    %s2508 = scalar_lea.vmem %s51, 160
    %s2510 = sand.u32 0, 85
    %s2511 = sshrl.u32 %s2510, 1
    %s2512 = sor.u32 %s2510, %s2511
    %s2513 = sand.u32 51, %s2512
    %s2514 = sshrl.u32 %s2513, 2
    %s2515 = sor.u32 %s2513, %s2514
    %s2516 = sand.u32 15, %s2515
    %v2517 = vld [vmem:[%s2508] sm:%s2516]
    %v2518 = vunpack.c.l.bf16 %v2517
    %v2519 = vunpack.c.h.bf16 %v2517
    %s2520 = scalar_lea.vmem %s52, 160
    %s2522 = sor.u32 255, 127
    %s2523 = sand.u32 %s2522, 85
    %s2524 = sshrl.u32 %s2523, 1
    %s2525 = sor.u32 %s2523, %s2524
    %s2526 = sand.u32 51, %s2525
    %s2527 = sshrl.u32 %s2526, 2
    %s2528 = sor.u32 %s2526, %s2527
    %s2529 = sand.u32 15, %s2528
    %v2530 = vld [vmem:[%s2520] sm:%s2529]
    %v2531 = vunpack.c.l.bf16 %v2530
    %v2532 = vunpack.c.h.bf16 %v2530
    %2533 = xla_tuple %v28, %v2531
    %2534 = xla_tuple %2533
    %v2535 = vmax.f32 %v28, %v2531
    %2536 = xla_tuple %v2535
    %2537 = xla_tuple %v2535, %v18
    %2538 = xla_tuple %2537
    %v2539 = vmax.f32 %v2535, %v18
    %2540 = xla_tuple %v2539
    %2541 = xla_tuple %v2539, %v13
    %2542 = xla_tuple %2541
    %v2543 = vmax.f32 %v2539, %v13
    %2544 = xla_tuple %v2543
    %s2545 = scalar_lea.vmem [#allocation22], 160
    %v2546 = vpack.c.bf16 0.0, %v2543
    %s2548 = ssub.s32 16, 1
    %2549 = vst [vmem:[%s2545] sm:%s2548] %v2546
    %s2550 = scalar_lea.vmem %s50, 164
    %s2552 = sand.u32 0, 85
    %s2553 = sshrl.u32 %s2552, 1
    %s2554 = sor.u32 %s2552, %s2553
    %s2555 = sand.u32 51, %s2554
    %s2556 = sshrl.u32 %s2555, 2
    %s2557 = sor.u32 %s2555, %s2556
    %s2558 = sand.u32 15, %s2557
    %v2559 = vld [vmem:[%s2550] sm:%s2558]
    %v2560 = vunpack.c.l.bf16 %v2559
    %v2561 = vunpack.c.h.bf16 %v2559
    %s2562 = scalar_lea.vmem %s51, 164
    %s2564 = sand.u32 0, 85
    %s2565 = sshrl.u32 %s2564, 1
    %s2566 = sor.u32 %s2564, %s2565
    %s2567 = sand.u32 51, %s2566
    %s2568 = sshrl.u32 %s2567, 2
    %s2569 = sor.u32 %s2567, %s2568
    %s2570 = sand.u32 15, %s2569
    %v2571 = vld [vmem:[%s2562] sm:%s2570]
    %v2572 = vunpack.c.l.bf16 %v2571
    %v2573 = vunpack.c.h.bf16 %v2571
    %s2574 = scalar_lea.vmem %s52, 164
    %s2576 = sor.u32 255, 127
    %s2577 = sand.u32 %s2576, 85
    %s2578 = sshrl.u32 %s2577, 1
    %s2579 = sor.u32 %s2577, %s2578
    %s2580 = sand.u32 51, %s2579
    %s2581 = sshrl.u32 %s2580, 2
    %s2582 = sor.u32 %s2580, %s2581
    %s2583 = sand.u32 15, %s2582
    %v2584 = vld [vmem:[%s2574] sm:%s2583]
    %v2585 = vunpack.c.l.bf16 %v2584
    %v2586 = vunpack.c.h.bf16 %v2584
    %2587 = xla_tuple %v28, %v2585
    %2588 = xla_tuple %2587
    %v2589 = vmax.f32 %v28, %v2585
    %2590 = xla_tuple %v2589
    %2591 = xla_tuple %v2589, %v18
    %2592 = xla_tuple %2591
    %v2593 = vmax.f32 %v2589, %v18
    %2594 = xla_tuple %v2593
    %2595 = xla_tuple %v2593, %v13
    %2596 = xla_tuple %2595
    %v2597 = vmax.f32 %v2593, %v13
    %2598 = xla_tuple %v2597
    %s2599 = scalar_lea.vmem [#allocation22], 164
    %v2600 = vpack.c.bf16 0.0, %v2597
    %s2602 = ssub.s32 16, 1
    %2603 = vst [vmem:[%s2599] sm:%s2602] %v2600
    %s2604 = scalar_lea.vmem %s50, 168
    %s2606 = sand.u32 0, 85
    %s2607 = sshrl.u32 %s2606, 1
    %s2608 = sor.u32 %s2606, %s2607
    %s2609 = sand.u32 51, %s2608
    %s2610 = sshrl.u32 %s2609, 2
    %s2611 = sor.u32 %s2609, %s2610
    %s2612 = sand.u32 15, %s2611
    %v2613 = vld [vmem:[%s2604] sm:%s2612]
    %v2614 = vunpack.c.l.bf16 %v2613
    %v2615 = vunpack.c.h.bf16 %v2613
    %s2616 = scalar_lea.vmem %s51, 168
    %s2618 = sand.u32 0, 85
    %s2619 = sshrl.u32 %s2618, 1
    %s2620 = sor.u32 %s2618, %s2619
    %s2621 = sand.u32 51, %s2620
    %s2622 = sshrl.u32 %s2621, 2
    %s2623 = sor.u32 %s2621, %s2622
    %s2624 = sand.u32 15, %s2623
    %v2625 = vld [vmem:[%s2616] sm:%s2624]
    %v2626 = vunpack.c.l.bf16 %v2625
    %v2627 = vunpack.c.h.bf16 %v2625
    %s2628 = scalar_lea.vmem %s52, 168
    %s2630 = sor.u32 255, 127
    %s2631 = sand.u32 %s2630, 85
    %s2632 = sshrl.u32 %s2631, 1
    %s2633 = sor.u32 %s2631, %s2632
    %s2634 = sand.u32 51, %s2633
    %s2635 = sshrl.u32 %s2634, 2
    %s2636 = sor.u32 %s2634, %s2635
    %s2637 = sand.u32 15, %s2636
    %v2638 = vld [vmem:[%s2628] sm:%s2637]
    %v2639 = vunpack.c.l.bf16 %v2638
    %v2640 = vunpack.c.h.bf16 %v2638
    %2641 = xla_tuple %v28, %v2639
    %2642 = xla_tuple %2641
    %v2643 = vmax.f32 %v28, %v2639
    %2644 = xla_tuple %v2643
    %2645 = xla_tuple %v2643, %v18
    %2646 = xla_tuple %2645
    %v2647 = vmax.f32 %v2643, %v18
    %2648 = xla_tuple %v2647
    %2649 = xla_tuple %v2647, %v13
    %2650 = xla_tuple %2649
    %v2651 = vmax.f32 %v2647, %v13
    %2652 = xla_tuple %v2651
    %s2653 = scalar_lea.vmem [#allocation22], 168
    %v2654 = vpack.c.bf16 0.0, %v2651
    %s2656 = ssub.s32 16, 1
    %2657 = vst [vmem:[%s2653] sm:%s2656] %v2654
    %s2658 = scalar_lea.vmem %s50, 172
    %s2660 = sand.u32 0, 85
    %s2661 = sshrl.u32 %s2660, 1
    %s2662 = sor.u32 %s2660, %s2661
    %s2663 = sand.u32 51, %s2662
    %s2664 = sshrl.u32 %s2663, 2
    %s2665 = sor.u32 %s2663, %s2664
    %s2666 = sand.u32 15, %s2665
    %v2667 = vld [vmem:[%s2658] sm:%s2666]
    %v2668 = vunpack.c.l.bf16 %v2667
    %v2669 = vunpack.c.h.bf16 %v2667
    %s2670 = scalar_lea.vmem %s51, 172
    %s2672 = sand.u32 0, 85
    %s2673 = sshrl.u32 %s2672, 1
    %s2674 = sor.u32 %s2672, %s2673
    %s2675 = sand.u32 51, %s2674
    %s2676 = sshrl.u32 %s2675, 2
    %s2677 = sor.u32 %s2675, %s2676
    %s2678 = sand.u32 15, %s2677
    %v2679 = vld [vmem:[%s2670] sm:%s2678]
    %v2680 = vunpack.c.l.bf16 %v2679
    %v2681 = vunpack.c.h.bf16 %v2679
    %s2682 = scalar_lea.vmem %s52, 172
    %s2684 = sor.u32 255, 127
    %s2685 = sand.u32 %s2684, 85
    %s2686 = sshrl.u32 %s2685, 1
    %s2687 = sor.u32 %s2685, %s2686
    %s2688 = sand.u32 51, %s2687
    %s2689 = sshrl.u32 %s2688, 2
    %s2690 = sor.u32 %s2688, %s2689
    %s2691 = sand.u32 15, %s2690
    %v2692 = vld [vmem:[%s2682] sm:%s2691]
    %v2693 = vunpack.c.l.bf16 %v2692
    %v2694 = vunpack.c.h.bf16 %v2692
    %2695 = xla_tuple %v28, %v2693
    %2696 = xla_tuple %2695
    %v2697 = vmax.f32 %v28, %v2693
    %2698 = xla_tuple %v2697
    %2699 = xla_tuple %v2697, %v18
    %2700 = xla_tuple %2699
    %v2701 = vmax.f32 %v2697, %v18
    %2702 = xla_tuple %v2701
    %2703 = xla_tuple %v2701, %v13
    %2704 = xla_tuple %2703
    %v2705 = vmax.f32 %v2701, %v13
    %2706 = xla_tuple %v2705
    %s2707 = scalar_lea.vmem [#allocation22], 172
    %v2708 = vpack.c.bf16 0.0, %v2705
    %s2710 = ssub.s32 16, 1
    %2711 = vst [vmem:[%s2707] sm:%s2710] %v2708
    %s2712 = scalar_lea.vmem %s50, 176
    %s2714 = sand.u32 0, 85
    %s2715 = sshrl.u32 %s2714, 1
    %s2716 = sor.u32 %s2714, %s2715
    %s2717 = sand.u32 51, %s2716
    %s2718 = sshrl.u32 %s2717, 2
    %s2719 = sor.u32 %s2717, %s2718
    %s2720 = sand.u32 15, %s2719
    %v2721 = vld [vmem:[%s2712] sm:%s2720]
    %v2722 = vunpack.c.l.bf16 %v2721
    %v2723 = vunpack.c.h.bf16 %v2721
    %s2724 = scalar_lea.vmem %s51, 176
    %s2726 = sand.u32 0, 85
    %s2727 = sshrl.u32 %s2726, 1
    %s2728 = sor.u32 %s2726, %s2727
    %s2729 = sand.u32 51, %s2728
    %s2730 = sshrl.u32 %s2729, 2
    %s2731 = sor.u32 %s2729, %s2730
    %s2732 = sand.u32 15, %s2731
    %v2733 = vld [vmem:[%s2724] sm:%s2732]
    %v2734 = vunpack.c.l.bf16 %v2733
    %v2735 = vunpack.c.h.bf16 %v2733
    %s2736 = scalar_lea.vmem %s52, 176
    %s2738 = sor.u32 255, 127
    %s2739 = sand.u32 %s2738, 85
    %s2740 = sshrl.u32 %s2739, 1
    %s2741 = sor.u32 %s2739, %s2740
    %s2742 = sand.u32 51, %s2741
    %s2743 = sshrl.u32 %s2742, 2
    %s2744 = sor.u32 %s2742, %s2743
    %s2745 = sand.u32 15, %s2744
    %v2746 = vld [vmem:[%s2736] sm:%s2745]
    %v2747 = vunpack.c.l.bf16 %v2746
    %v2748 = vunpack.c.h.bf16 %v2746
    %2749 = xla_tuple %v28, %v2747
    %2750 = xla_tuple %2749
    %v2751 = vmax.f32 %v28, %v2747
    %2752 = xla_tuple %v2751
    %2753 = xla_tuple %v2751, %v18
    %2754 = xla_tuple %2753
    %v2755 = vmax.f32 %v2751, %v18
    %2756 = xla_tuple %v2755
    %2757 = xla_tuple %v2755, %v13
    %2758 = xla_tuple %2757
    %v2759 = vmax.f32 %v2755, %v13
    %2760 = xla_tuple %v2759
    %s2761 = scalar_lea.vmem [#allocation22], 176
    %v2762 = vpack.c.bf16 0.0, %v2759
    %s2764 = ssub.s32 16, 1
    %2765 = vst [vmem:[%s2761] sm:%s2764] %v2762
    %s2766 = scalar_lea.vmem %s50, 180
    %s2768 = sand.u32 0, 85
    %s2769 = sshrl.u32 %s2768, 1
    %s2770 = sor.u32 %s2768, %s2769
    %s2771 = sand.u32 51, %s2770
    %s2772 = sshrl.u32 %s2771, 2
    %s2773 = sor.u32 %s2771, %s2772
    %s2774 = sand.u32 15, %s2773
    %v2775 = vld [vmem:[%s2766] sm:%s2774]
    %v2776 = vunpack.c.l.bf16 %v2775
    %v2777 = vunpack.c.h.bf16 %v2775
    %s2778 = scalar_lea.vmem %s51, 180
    %s2780 = sand.u32 0, 85
    %s2781 = sshrl.u32 %s2780, 1
    %s2782 = sor.u32 %s2780, %s2781
    %s2783 = sand.u32 51, %s2782
    %s2784 = sshrl.u32 %s2783, 2
    %s2785 = sor.u32 %s2783, %s2784
    %s2786 = sand.u32 15, %s2785
    %v2787 = vld [vmem:[%s2778] sm:%s2786]
    %v2788 = vunpack.c.l.bf16 %v2787
    %v2789 = vunpack.c.h.bf16 %v2787
    %s2790 = scalar_lea.vmem %s52, 180
    %s2792 = sor.u32 255, 127
    %s2793 = sand.u32 %s2792, 85
    %s2794 = sshrl.u32 %s2793, 1
    %s2795 = sor.u32 %s2793, %s2794
    %s2796 = sand.u32 51, %s2795
    %s2797 = sshrl.u32 %s2796, 2
    %s2798 = sor.u32 %s2796, %s2797
    %s2799 = sand.u32 15, %s2798
    %v2800 = vld [vmem:[%s2790] sm:%s2799]
    %v2801 = vunpack.c.l.bf16 %v2800
    %v2802 = vunpack.c.h.bf16 %v2800
    %2803 = xla_tuple %v28, %v2801
    %2804 = xla_tuple %2803
    %v2805 = vmax.f32 %v28, %v2801
    %2806 = xla_tuple %v2805
    %2807 = xla_tuple %v2805, %v18
    %2808 = xla_tuple %2807
    %v2809 = vmax.f32 %v2805, %v18
    %2810 = xla_tuple %v2809
    %2811 = xla_tuple %v2809, %v13
    %2812 = xla_tuple %2811
    %v2813 = vmax.f32 %v2809, %v13
    %2814 = xla_tuple %v2813
    %s2815 = scalar_lea.vmem [#allocation22], 180
    %v2816 = vpack.c.bf16 0.0, %v2813
    %s2818 = ssub.s32 16, 1
    %2819 = vst [vmem:[%s2815] sm:%s2818] %v2816
    %s2820 = scalar_lea.vmem %s50, 184
    %s2822 = sand.u32 0, 85
    %s2823 = sshrl.u32 %s2822, 1
    %s2824 = sor.u32 %s2822, %s2823
    %s2825 = sand.u32 51, %s2824
    %s2826 = sshrl.u32 %s2825, 2
    %s2827 = sor.u32 %s2825, %s2826
    %s2828 = sand.u32 15, %s2827
    %v2829 = vld [vmem:[%s2820] sm:%s2828]
    %v2830 = vunpack.c.l.bf16 %v2829
    %v2831 = vunpack.c.h.bf16 %v2829
    %s2832 = scalar_lea.vmem %s51, 184
    %s2834 = sand.u32 0, 85
    %s2835 = sshrl.u32 %s2834, 1
    %s2836 = sor.u32 %s2834, %s2835
    %s2837 = sand.u32 51, %s2836
    %s2838 = sshrl.u32 %s2837, 2
    %s2839 = sor.u32 %s2837, %s2838
    %s2840 = sand.u32 15, %s2839
    %v2841 = vld [vmem:[%s2832] sm:%s2840]
    %v2842 = vunpack.c.l.bf16 %v2841
    %v2843 = vunpack.c.h.bf16 %v2841
    %s2844 = scalar_lea.vmem %s52, 184
    %s2846 = sor.u32 255, 127
    %s2847 = sand.u32 %s2846, 85
    %s2848 = sshrl.u32 %s2847, 1
    %s2849 = sor.u32 %s2847, %s2848
    %s2850 = sand.u32 51, %s2849
    %s2851 = sshrl.u32 %s2850, 2
    %s2852 = sor.u32 %s2850, %s2851
    %s2853 = sand.u32 15, %s2852
    %v2854 = vld [vmem:[%s2844] sm:%s2853]
    %v2855 = vunpack.c.l.bf16 %v2854
    %v2856 = vunpack.c.h.bf16 %v2854
    %2857 = xla_tuple %v28, %v2855
    %2858 = xla_tuple %2857
    %v2859 = vmax.f32 %v28, %v2855
    %2860 = xla_tuple %v2859
    %2861 = xla_tuple %v2859, %v18
    %2862 = xla_tuple %2861
    %v2863 = vmax.f32 %v2859, %v18
    %2864 = xla_tuple %v2863
    %2865 = xla_tuple %v2863, %v13
    %2866 = xla_tuple %2865
    %v2867 = vmax.f32 %v2863, %v13
    %2868 = xla_tuple %v2867
    %s2869 = scalar_lea.vmem [#allocation22], 184
    %v2870 = vpack.c.bf16 0.0, %v2867
    %s2872 = ssub.s32 16, 1
    %2873 = vst [vmem:[%s2869] sm:%s2872] %v2870
    %s2874 = scalar_lea.vmem %s50, 188
    %s2876 = sand.u32 0, 85
    %s2877 = sshrl.u32 %s2876, 1
    %s2878 = sor.u32 %s2876, %s2877
    %s2879 = sand.u32 51, %s2878
    %s2880 = sshrl.u32 %s2879, 2
    %s2881 = sor.u32 %s2879, %s2880
    %s2882 = sand.u32 15, %s2881
    %v2883 = vld [vmem:[%s2874] sm:%s2882]
    %v2884 = vunpack.c.l.bf16 %v2883
    %v2885 = vunpack.c.h.bf16 %v2883
    %s2886 = scalar_lea.vmem %s51, 188
    %s2888 = sand.u32 0, 85
    %s2889 = sshrl.u32 %s2888, 1
    %s2890 = sor.u32 %s2888, %s2889
    %s2891 = sand.u32 51, %s2890
    %s2892 = sshrl.u32 %s2891, 2
    %s2893 = sor.u32 %s2891, %s2892
    %s2894 = sand.u32 15, %s2893
    %v2895 = vld [vmem:[%s2886] sm:%s2894]
    %v2896 = vunpack.c.l.bf16 %v2895
    %v2897 = vunpack.c.h.bf16 %v2895
    %s2898 = scalar_lea.vmem %s52, 188
    %s2900 = sor.u32 255, 127
    %s2901 = sand.u32 %s2900, 85
    %s2902 = sshrl.u32 %s2901, 1
    %s2903 = sor.u32 %s2901, %s2902
    %s2904 = sand.u32 51, %s2903
    %s2905 = sshrl.u32 %s2904, 2
    %s2906 = sor.u32 %s2904, %s2905
    %s2907 = sand.u32 15, %s2906
    %v2908 = vld [vmem:[%s2898] sm:%s2907]
    %v2909 = vunpack.c.l.bf16 %v2908
    %v2910 = vunpack.c.h.bf16 %v2908
    %2911 = xla_tuple %v28, %v2909
    %2912 = xla_tuple %2911
    %v2913 = vmax.f32 %v28, %v2909
    %2914 = xla_tuple %v2913
    %2915 = xla_tuple %v2913, %v18
    %2916 = xla_tuple %2915
    %v2917 = vmax.f32 %v2913, %v18
    %2918 = xla_tuple %v2917
    %2919 = xla_tuple %v2917, %v13
    %2920 = xla_tuple %2919
    %v2921 = vmax.f32 %v2917, %v13
    %2922 = xla_tuple %v2921
    %s2923 = scalar_lea.vmem [#allocation22], 188
    %v2924 = vpack.c.bf16 0.0, %v2921
    %s2926 = ssub.s32 16, 1
    %2927 = vst [vmem:[%s2923] sm:%s2926] %v2924
    %s2928 = scalar_lea.vmem %s50, 192
    %s2930 = sand.u32 0, 85
    %s2931 = sshrl.u32 %s2930, 1
    %s2932 = sor.u32 %s2930, %s2931
    %s2933 = sand.u32 51, %s2932
    %s2934 = sshrl.u32 %s2933, 2
    %s2935 = sor.u32 %s2933, %s2934
    %s2936 = sand.u32 15, %s2935
    %v2937 = vld [vmem:[%s2928] sm:%s2936]
    %v2938 = vunpack.c.l.bf16 %v2937
    %v2939 = vunpack.c.h.bf16 %v2937
    %s2940 = scalar_lea.vmem %s51, 192
    %s2942 = sor.u32 255, 127
    %s2943 = sand.u32 %s2942, 85
    %s2944 = sshrl.u32 %s2943, 1
    %s2945 = sor.u32 %s2943, %s2944
    %s2946 = sand.u32 51, %s2945
    %s2947 = sshrl.u32 %s2946, 2
    %s2948 = sor.u32 %s2946, %s2947
    %s2949 = sand.u32 15, %s2948
    %v2950 = vld [vmem:[%s2940] sm:%s2949]
    %v2951 = vunpack.c.l.bf16 %v2950
    %v2952 = vunpack.c.h.bf16 %v2950
    %2953 = xla_tuple %v28, %v23
    %2954 = xla_tuple %2953
    %v2955 = vmax.f32 %v28, %v23
    %2956 = xla_tuple %v2955
    %2957 = xla_tuple %v2955, %v2951
    %2958 = xla_tuple %2957
    %v2959 = vmax.f32 %v2955, %v2951
    %2960 = xla_tuple %v2959
    %2961 = xla_tuple %v2959, %v13
    %2962 = xla_tuple %2961
    %v2963 = vmax.f32 %v2959, %v13
    %2964 = xla_tuple %v2963
    %s2965 = scalar_lea.vmem [#allocation22], 192
    %v2966 = vpack.c.bf16 0.0, %v2963
    %s2968 = ssub.s32 16, 1
    %2969 = vst [vmem:[%s2965] sm:%s2968] %v2966
    %s2970 = scalar_lea.vmem %s50, 196
    %s2972 = sand.u32 0, 85
    %s2973 = sshrl.u32 %s2972, 1
    %s2974 = sor.u32 %s2972, %s2973
    %s2975 = sand.u32 51, %s2974
    %s2976 = sshrl.u32 %s2975, 2
    %s2977 = sor.u32 %s2975, %s2976
    %s2978 = sand.u32 15, %s2977
    %v2979 = vld [vmem:[%s2970] sm:%s2978]
    %v2980 = vunpack.c.l.bf16 %v2979
    %v2981 = vunpack.c.h.bf16 %v2979
    %s2982 = scalar_lea.vmem %s51, 196
    %s2984 = sor.u32 255, 127
    %s2985 = sand.u32 %s2984, 85
    %s2986 = sshrl.u32 %s2985, 1
    %s2987 = sor.u32 %s2985, %s2986
    %s2988 = sand.u32 51, %s2987
    %s2989 = sshrl.u32 %s2988, 2
    %s2990 = sor.u32 %s2988, %s2989
    %s2991 = sand.u32 15, %s2990
    %v2992 = vld [vmem:[%s2982] sm:%s2991]
    %v2993 = vunpack.c.l.bf16 %v2992
    %v2994 = vunpack.c.h.bf16 %v2992
    %2995 = xla_tuple %v28, %v23
    %2996 = xla_tuple %2995
    %v2997 = vmax.f32 %v28, %v23
    %2998 = xla_tuple %v2997
    %2999 = xla_tuple %v2997, %v2993
    %3000 = xla_tuple %2999
    %v3001 = vmax.f32 %v2997, %v2993
    %3002 = xla_tuple %v3001
    %3003 = xla_tuple %v3001, %v13
    %3004 = xla_tuple %3003
    %v3005 = vmax.f32 %v3001, %v13
    %3006 = xla_tuple %v3005
    %s3007 = scalar_lea.vmem [#allocation22], 196
    %v3008 = vpack.c.bf16 0.0, %v3005
    %s3010 = ssub.s32 16, 1
    %3011 = vst [vmem:[%s3007] sm:%s3010] %v3008
    %s3012 = scalar_lea.vmem %s50, 200
    %s3014 = sand.u32 0, 85
    %s3015 = sshrl.u32 %s3014, 1
    %s3016 = sor.u32 %s3014, %s3015
    %s3017 = sand.u32 51, %s3016
    %s3018 = sshrl.u32 %s3017, 2
    %s3019 = sor.u32 %s3017, %s3018
    %s3020 = sand.u32 15, %s3019
    %v3021 = vld [vmem:[%s3012] sm:%s3020]
    %v3022 = vunpack.c.l.bf16 %v3021
    %v3023 = vunpack.c.h.bf16 %v3021
    %s3024 = scalar_lea.vmem %s51, 200
    %s3026 = sor.u32 255, 127
    %s3027 = sand.u32 %s3026, 85
    %s3028 = sshrl.u32 %s3027, 1
    %s3029 = sor.u32 %s3027, %s3028
    %s3030 = sand.u32 51, %s3029
    %s3031 = sshrl.u32 %s3030, 2
    %s3032 = sor.u32 %s3030, %s3031
    %s3033 = sand.u32 15, %s3032
    %v3034 = vld [vmem:[%s3024] sm:%s3033]
    %v3035 = vunpack.c.l.bf16 %v3034
    %v3036 = vunpack.c.h.bf16 %v3034
    %3037 = xla_tuple %v28, %v23
    %3038 = xla_tuple %3037
    %v3039 = vmax.f32 %v28, %v23
    %3040 = xla_tuple %v3039
    %3041 = xla_tuple %v3039, %v3035
    %3042 = xla_tuple %3041
    %v3043 = vmax.f32 %v3039, %v3035
    %3044 = xla_tuple %v3043
    %3045 = xla_tuple %v3043, %v13
    %3046 = xla_tuple %3045
    %v3047 = vmax.f32 %v3043, %v13
    %3048 = xla_tuple %v3047
    %s3049 = scalar_lea.vmem [#allocation22], 200
    %v3050 = vpack.c.bf16 0.0, %v3047
    %s3052 = ssub.s32 16, 1
    %3053 = vst [vmem:[%s3049] sm:%s3052] %v3050
    %s3054 = scalar_lea.vmem %s50, 204
    %s3056 = sand.u32 0, 85
    %s3057 = sshrl.u32 %s3056, 1
    %s3058 = sor.u32 %s3056, %s3057
    %s3059 = sand.u32 51, %s3058
    %s3060 = sshrl.u32 %s3059, 2
    %s3061 = sor.u32 %s3059, %s3060
    %s3062 = sand.u32 15, %s3061
    %v3063 = vld [vmem:[%s3054] sm:%s3062]
    %v3064 = vunpack.c.l.bf16 %v3063
    %v3065 = vunpack.c.h.bf16 %v3063
    %s3066 = scalar_lea.vmem %s51, 204
    %s3068 = sor.u32 255, 127
    %s3069 = sand.u32 %s3068, 85
    %s3070 = sshrl.u32 %s3069, 1
    %s3071 = sor.u32 %s3069, %s3070
    %s3072 = sand.u32 51, %s3071
    %s3073 = sshrl.u32 %s3072, 2
    %s3074 = sor.u32 %s3072, %s3073
    %s3075 = sand.u32 15, %s3074
    %v3076 = vld [vmem:[%s3066] sm:%s3075]
    %v3077 = vunpack.c.l.bf16 %v3076
    %v3078 = vunpack.c.h.bf16 %v3076
    %3079 = xla_tuple %v28, %v23
    %3080 = xla_tuple %3079
    %v3081 = vmax.f32 %v28, %v23
    %3082 = xla_tuple %v3081
    %3083 = xla_tuple %v3081, %v3077
    %3084 = xla_tuple %3083
    %v3085 = vmax.f32 %v3081, %v3077
    %3086 = xla_tuple %v3085
    %3087 = xla_tuple %v3085, %v13
    %3088 = xla_tuple %3087
    %v3089 = vmax.f32 %v3085, %v13
    %3090 = xla_tuple %v3089
    %s3091 = scalar_lea.vmem [#allocation22], 204
    %v3092 = vpack.c.bf16 0.0, %v3089
    %s3094 = ssub.s32 16, 1
    %3095 = vst [vmem:[%s3091] sm:%s3094] %v3092
    %s3096 = scalar_lea.vmem %s50, 208
    %s3098 = sand.u32 0, 85
    %s3099 = sshrl.u32 %s3098, 1
    %s3100 = sor.u32 %s3098, %s3099
    %s3101 = sand.u32 51, %s3100
    %s3102 = sshrl.u32 %s3101, 2
    %s3103 = sor.u32 %s3101, %s3102
    %s3104 = sand.u32 15, %s3103
    %v3105 = vld [vmem:[%s3096] sm:%s3104]
    %v3106 = vunpack.c.l.bf16 %v3105
    %v3107 = vunpack.c.h.bf16 %v3105
    %s3108 = scalar_lea.vmem %s51, 208
    %s3110 = sor.u32 255, 127
    %s3111 = sand.u32 %s3110, 85
    %s3112 = sshrl.u32 %s3111, 1
    %s3113 = sor.u32 %s3111, %s3112
    %s3114 = sand.u32 51, %s3113
    %s3115 = sshrl.u32 %s3114, 2
    %s3116 = sor.u32 %s3114, %s3115
    %s3117 = sand.u32 15, %s3116
    %v3118 = vld [vmem:[%s3108] sm:%s3117]
    %v3119 = vunpack.c.l.bf16 %v3118
    %v3120 = vunpack.c.h.bf16 %v3118
    %3121 = xla_tuple %v28, %v23
    %3122 = xla_tuple %3121
    %v3123 = vmax.f32 %v28, %v23
    %3124 = xla_tuple %v3123
    %3125 = xla_tuple %v3123, %v3119
    %3126 = xla_tuple %3125
    %v3127 = vmax.f32 %v3123, %v3119
    %3128 = xla_tuple %v3127
    %3129 = xla_tuple %v3127, %v13
    %3130 = xla_tuple %3129
    %v3131 = vmax.f32 %v3127, %v13
    %3132 = xla_tuple %v3131
    %s3133 = scalar_lea.vmem [#allocation22], 208
    %v3134 = vpack.c.bf16 0.0, %v3131
    %s3136 = ssub.s32 16, 1
    %3137 = vst [vmem:[%s3133] sm:%s3136] %v3134
    %s3138 = scalar_lea.vmem %s50, 212
    %s3140 = sand.u32 0, 85
    %s3141 = sshrl.u32 %s3140, 1
    %s3142 = sor.u32 %s3140, %s3141
    %s3143 = sand.u32 51, %s3142
    %s3144 = sshrl.u32 %s3143, 2
    %s3145 = sor.u32 %s3143, %s3144
    %s3146 = sand.u32 15, %s3145
    %v3147 = vld [vmem:[%s3138] sm:%s3146]
    %v3148 = vunpack.c.l.bf16 %v3147
    %v3149 = vunpack.c.h.bf16 %v3147
    %s3150 = scalar_lea.vmem %s51, 212
    %s3152 = sor.u32 255, 127
    %s3153 = sand.u32 %s3152, 85
    %s3154 = sshrl.u32 %s3153, 1
    %s3155 = sor.u32 %s3153, %s3154
    %s3156 = sand.u32 51, %s3155
    %s3157 = sshrl.u32 %s3156, 2
    %s3158 = sor.u32 %s3156, %s3157
    %s3159 = sand.u32 15, %s3158
    %v3160 = vld [vmem:[%s3150] sm:%s3159]
    %v3161 = vunpack.c.l.bf16 %v3160
    %v3162 = vunpack.c.h.bf16 %v3160
    %3163 = xla_tuple %v28, %v23
    %3164 = xla_tuple %3163
    %v3165 = vmax.f32 %v28, %v23
    %3166 = xla_tuple %v3165
    %3167 = xla_tuple %v3165, %v3161
    %3168 = xla_tuple %3167
    %v3169 = vmax.f32 %v3165, %v3161
    %3170 = xla_tuple %v3169
    %3171 = xla_tuple %v3169, %v13
    %3172 = xla_tuple %3171
    %v3173 = vmax.f32 %v3169, %v13
    %3174 = xla_tuple %v3173
    %s3175 = scalar_lea.vmem [#allocation22], 212
    %v3176 = vpack.c.bf16 0.0, %v3173
    %s3178 = ssub.s32 16, 1
    %3179 = vst [vmem:[%s3175] sm:%s3178] %v3176
    %s3180 = scalar_lea.vmem %s50, 216
    %s3182 = sand.u32 0, 85
    %s3183 = sshrl.u32 %s3182, 1
    %s3184 = sor.u32 %s3182, %s3183
    %s3185 = sand.u32 51, %s3184
    %s3186 = sshrl.u32 %s3185, 2
    %s3187 = sor.u32 %s3185, %s3186
    %s3188 = sand.u32 15, %s3187
    %v3189 = vld [vmem:[%s3180] sm:%s3188]
    %v3190 = vunpack.c.l.bf16 %v3189
    %v3191 = vunpack.c.h.bf16 %v3189
    %s3192 = scalar_lea.vmem %s51, 216
    %s3194 = sor.u32 255, 127
    %s3195 = sand.u32 %s3194, 85
    %s3196 = sshrl.u32 %s3195, 1
    %s3197 = sor.u32 %s3195, %s3196
    %s3198 = sand.u32 51, %s3197
    %s3199 = sshrl.u32 %s3198, 2
    %s3200 = sor.u32 %s3198, %s3199
    %s3201 = sand.u32 15, %s3200
    %v3202 = vld [vmem:[%s3192] sm:%s3201]
    %v3203 = vunpack.c.l.bf16 %v3202
    %v3204 = vunpack.c.h.bf16 %v3202
    %3205 = xla_tuple %v28, %v23
    %3206 = xla_tuple %3205
    %v3207 = vmax.f32 %v28, %v23
    %3208 = xla_tuple %v3207
    %3209 = xla_tuple %v3207, %v3203
    %3210 = xla_tuple %3209
    %v3211 = vmax.f32 %v3207, %v3203
    %3212 = xla_tuple %v3211
    %3213 = xla_tuple %v3211, %v13
    %3214 = xla_tuple %3213
    %v3215 = vmax.f32 %v3211, %v13
    %3216 = xla_tuple %v3215
    %s3217 = scalar_lea.vmem [#allocation22], 216
    %v3218 = vpack.c.bf16 0.0, %v3215
    %s3220 = ssub.s32 16, 1
    %3221 = vst [vmem:[%s3217] sm:%s3220] %v3218
    %s3222 = scalar_lea.vmem %s50, 220
    %s3224 = sand.u32 0, 85
    %s3225 = sshrl.u32 %s3224, 1
    %s3226 = sor.u32 %s3224, %s3225
    %s3227 = sand.u32 51, %s3226
    %s3228 = sshrl.u32 %s3227, 2
    %s3229 = sor.u32 %s3227, %s3228
    %s3230 = sand.u32 15, %s3229
    %v3231 = vld [vmem:[%s3222] sm:%s3230]
    %v3232 = vunpack.c.l.bf16 %v3231
    %v3233 = vunpack.c.h.bf16 %v3231
    %s3234 = scalar_lea.vmem %s51, 220
    %s3236 = sor.u32 255, 127
    %s3237 = sand.u32 %s3236, 85
    %s3238 = sshrl.u32 %s3237, 1
    %s3239 = sor.u32 %s3237, %s3238
    %s3240 = sand.u32 51, %s3239
    %s3241 = sshrl.u32 %s3240, 2
    %s3242 = sor.u32 %s3240, %s3241
    %s3243 = sand.u32 15, %s3242
    %v3244 = vld [vmem:[%s3234] sm:%s3243]
    %v3245 = vunpack.c.l.bf16 %v3244
    %v3246 = vunpack.c.h.bf16 %v3244
    %3247 = xla_tuple %v28, %v23
    %3248 = xla_tuple %3247
    %v3249 = vmax.f32 %v28, %v23
    %3250 = xla_tuple %v3249
    %3251 = xla_tuple %v3249, %v3245
    %3252 = xla_tuple %3251
    %v3253 = vmax.f32 %v3249, %v3245
    %3254 = xla_tuple %v3253
    %3255 = xla_tuple %v3253, %v13
    %3256 = xla_tuple %3255
    %v3257 = vmax.f32 %v3253, %v13
    %3258 = xla_tuple %v3257
    %s3259 = scalar_lea.vmem [#allocation22], 220
    %v3260 = vpack.c.bf16 0.0, %v3257
    %s3262 = ssub.s32 16, 1
    %3263 = vst [vmem:[%s3259] sm:%s3262] %v3260
    %s3264 = scalar_lea.vmem %s50, 224
    %s3266 = sand.u32 0, 85
    %s3267 = sshrl.u32 %s3266, 1
    %s3268 = sor.u32 %s3266, %s3267
    %s3269 = sand.u32 51, %s3268
    %s3270 = sshrl.u32 %s3269, 2
    %s3271 = sor.u32 %s3269, %s3270
    %s3272 = sand.u32 15, %s3271
    %v3273 = vld [vmem:[%s3264] sm:%s3272]
    %v3274 = vunpack.c.l.bf16 %v3273
    %v3275 = vunpack.c.h.bf16 %v3273
    %s3276 = scalar_lea.vmem %s51, 224
    %s3278 = sor.u32 255, 127
    %s3279 = sand.u32 %s3278, 85
    %s3280 = sshrl.u32 %s3279, 1
    %s3281 = sor.u32 %s3279, %s3280
    %s3282 = sand.u32 51, %s3281
    %s3283 = sshrl.u32 %s3282, 2
    %s3284 = sor.u32 %s3282, %s3283
    %s3285 = sand.u32 15, %s3284
    %v3286 = vld [vmem:[%s3276] sm:%s3285]
    %v3287 = vunpack.c.l.bf16 %v3286
    %v3288 = vunpack.c.h.bf16 %v3286
    %3289 = xla_tuple %v28, %v23
    %3290 = xla_tuple %3289
    %v3291 = vmax.f32 %v28, %v23
    %3292 = xla_tuple %v3291
    %3293 = xla_tuple %v3291, %v3287
    %3294 = xla_tuple %3293
    %v3295 = vmax.f32 %v3291, %v3287
    %3296 = xla_tuple %v3295
    %3297 = xla_tuple %v3295, %v13
    %3298 = xla_tuple %3297
    %v3299 = vmax.f32 %v3295, %v13
    %3300 = xla_tuple %v3299
    %s3301 = scalar_lea.vmem [#allocation22], 224
    %v3302 = vpack.c.bf16 0.0, %v3299
    %s3304 = ssub.s32 16, 1
    %3305 = vst [vmem:[%s3301] sm:%s3304] %v3302
    %s3306 = scalar_lea.vmem %s50, 228
    %s3308 = sand.u32 0, 85
    %s3309 = sshrl.u32 %s3308, 1
    %s3310 = sor.u32 %s3308, %s3309
    %s3311 = sand.u32 51, %s3310
    %s3312 = sshrl.u32 %s3311, 2
    %s3313 = sor.u32 %s3311, %s3312
    %s3314 = sand.u32 15, %s3313
    %v3315 = vld [vmem:[%s3306] sm:%s3314]
    %v3316 = vunpack.c.l.bf16 %v3315
    %v3317 = vunpack.c.h.bf16 %v3315
    %s3318 = scalar_lea.vmem %s51, 228
    %s3320 = sor.u32 255, 127
    %s3321 = sand.u32 %s3320, 85
    %s3322 = sshrl.u32 %s3321, 1
    %s3323 = sor.u32 %s3321, %s3322
    %s3324 = sand.u32 51, %s3323
    %s3325 = sshrl.u32 %s3324, 2
    %s3326 = sor.u32 %s3324, %s3325
    %s3327 = sand.u32 15, %s3326
    %v3328 = vld [vmem:[%s3318] sm:%s3327]
    %v3329 = vunpack.c.l.bf16 %v3328
    %v3330 = vunpack.c.h.bf16 %v3328
    %3331 = xla_tuple %v28, %v23
    %3332 = xla_tuple %3331
    %v3333 = vmax.f32 %v28, %v23
    %3334 = xla_tuple %v3333
    %3335 = xla_tuple %v3333, %v3329
    %3336 = xla_tuple %3335
    %v3337 = vmax.f32 %v3333, %v3329
    %3338 = xla_tuple %v3337
    %3339 = xla_tuple %v3337, %v13
    %3340 = xla_tuple %3339
    %v3341 = vmax.f32 %v3337, %v13
    %3342 = xla_tuple %v3341
    %s3343 = scalar_lea.vmem [#allocation22], 228
    %v3344 = vpack.c.bf16 0.0, %v3341
    %s3346 = ssub.s32 16, 1
    %3347 = vst [vmem:[%s3343] sm:%s3346] %v3344
    %s3348 = scalar_lea.vmem %s50, 232
    %s3350 = sand.u32 0, 85
    %s3351 = sshrl.u32 %s3350, 1
    %s3352 = sor.u32 %s3350, %s3351
    %s3353 = sand.u32 51, %s3352
    %s3354 = sshrl.u32 %s3353, 2
    %s3355 = sor.u32 %s3353, %s3354
    %s3356 = sand.u32 15, %s3355
    %v3357 = vld [vmem:[%s3348] sm:%s3356]
    %v3358 = vunpack.c.l.bf16 %v3357
    %v3359 = vunpack.c.h.bf16 %v3357
    %s3360 = scalar_lea.vmem %s51, 232
    %s3362 = sor.u32 255, 127
    %s3363 = sand.u32 %s3362, 85
    %s3364 = sshrl.u32 %s3363, 1
    %s3365 = sor.u32 %s3363, %s3364
    %s3366 = sand.u32 51, %s3365
    %s3367 = sshrl.u32 %s3366, 2
    %s3368 = sor.u32 %s3366, %s3367
    %s3369 = sand.u32 15, %s3368
    %v3370 = vld [vmem:[%s3360] sm:%s3369]
    %v3371 = vunpack.c.l.bf16 %v3370
    %v3372 = vunpack.c.h.bf16 %v3370
    %3373 = xla_tuple %v28, %v23
    %3374 = xla_tuple %3373
    %v3375 = vmax.f32 %v28, %v23
    %3376 = xla_tuple %v3375
    %3377 = xla_tuple %v3375, %v3371
    %3378 = xla_tuple %3377
    %v3379 = vmax.f32 %v3375, %v3371
    %3380 = xla_tuple %v3379
    %3381 = xla_tuple %v3379, %v13
    %3382 = xla_tuple %3381
    %v3383 = vmax.f32 %v3379, %v13
    %3384 = xla_tuple %v3383
    %s3385 = scalar_lea.vmem [#allocation22], 232
    %v3386 = vpack.c.bf16 0.0, %v3383
    %s3388 = ssub.s32 16, 1
    %3389 = vst [vmem:[%s3385] sm:%s3388] %v3386
    %s3390 = scalar_lea.vmem %s50, 236
    %s3392 = sand.u32 0, 85
    %s3393 = sshrl.u32 %s3392, 1
    %s3394 = sor.u32 %s3392, %s3393
    %s3395 = sand.u32 51, %s3394
    %s3396 = sshrl.u32 %s3395, 2
    %s3397 = sor.u32 %s3395, %s3396
    %s3398 = sand.u32 15, %s3397
    %v3399 = vld [vmem:[%s3390] sm:%s3398]
    %v3400 = vunpack.c.l.bf16 %v3399
    %v3401 = vunpack.c.h.bf16 %v3399
    %s3402 = scalar_lea.vmem %s51, 236
    %s3404 = sor.u32 255, 127
    %s3405 = sand.u32 %s3404, 85
    %s3406 = sshrl.u32 %s3405, 1
    %s3407 = sor.u32 %s3405, %s3406
    %s3408 = sand.u32 51, %s3407
    %s3409 = sshrl.u32 %s3408, 2
    %s3410 = sor.u32 %s3408, %s3409
    %s3411 = sand.u32 15, %s3410
    %v3412 = vld [vmem:[%s3402] sm:%s3411]
    %v3413 = vunpack.c.l.bf16 %v3412
    %v3414 = vunpack.c.h.bf16 %v3412
    %3415 = xla_tuple %v28, %v23
    %3416 = xla_tuple %3415
    %v3417 = vmax.f32 %v28, %v23
    %3418 = xla_tuple %v3417
    %3419 = xla_tuple %v3417, %v3413
    %3420 = xla_tuple %3419
    %v3421 = vmax.f32 %v3417, %v3413
    %3422 = xla_tuple %v3421
    %3423 = xla_tuple %v3421, %v13
    %3424 = xla_tuple %3423
    %v3425 = vmax.f32 %v3421, %v13
    %3426 = xla_tuple %v3425
    %s3427 = scalar_lea.vmem [#allocation22], 236
    %v3428 = vpack.c.bf16 0.0, %v3425
    %s3430 = ssub.s32 16, 1
    %3431 = vst [vmem:[%s3427] sm:%s3430] %v3428
    %s3432 = scalar_lea.vmem %s50, 240
    %s3434 = sand.u32 0, 85
    %s3435 = sshrl.u32 %s3434, 1
    %s3436 = sor.u32 %s3434, %s3435
    %s3437 = sand.u32 51, %s3436
    %s3438 = sshrl.u32 %s3437, 2
    %s3439 = sor.u32 %s3437, %s3438
    %s3440 = sand.u32 15, %s3439
    %v3441 = vld [vmem:[%s3432] sm:%s3440]
    %v3442 = vunpack.c.l.bf16 %v3441
    %v3443 = vunpack.c.h.bf16 %v3441
    %s3444 = scalar_lea.vmem %s51, 240
    %s3446 = sor.u32 255, 127
    %s3447 = sand.u32 %s3446, 85
    %s3448 = sshrl.u32 %s3447, 1
    %s3449 = sor.u32 %s3447, %s3448
    %s3450 = sand.u32 51, %s3449
    %s3451 = sshrl.u32 %s3450, 2
    %s3452 = sor.u32 %s3450, %s3451
    %s3453 = sand.u32 15, %s3452
    %v3454 = vld [vmem:[%s3444] sm:%s3453]
    %v3455 = vunpack.c.l.bf16 %v3454
    %v3456 = vunpack.c.h.bf16 %v3454
    %3457 = xla_tuple %v28, %v23
    %3458 = xla_tuple %3457
    %v3459 = vmax.f32 %v28, %v23
    %3460 = xla_tuple %v3459
    %3461 = xla_tuple %v3459, %v3455
    %3462 = xla_tuple %3461
    %v3463 = vmax.f32 %v3459, %v3455
    %3464 = xla_tuple %v3463
    %3465 = xla_tuple %v3463, %v13
    %3466 = xla_tuple %3465
    %v3467 = vmax.f32 %v3463, %v13
    %3468 = xla_tuple %v3467
    %s3469 = scalar_lea.vmem [#allocation22], 240
    %v3470 = vpack.c.bf16 0.0, %v3467
    %s3472 = ssub.s32 16, 1
    %3473 = vst [vmem:[%s3469] sm:%s3472] %v3470
    %s3474 = scalar_lea.vmem %s50, 244
    %s3476 = sand.u32 0, 85
    %s3477 = sshrl.u32 %s3476, 1
    %s3478 = sor.u32 %s3476, %s3477
    %s3479 = sand.u32 51, %s3478
    %s3480 = sshrl.u32 %s3479, 2
    %s3481 = sor.u32 %s3479, %s3480
    %s3482 = sand.u32 15, %s3481
    %v3483 = vld [vmem:[%s3474] sm:%s3482]
    %v3484 = vunpack.c.l.bf16 %v3483
    %v3485 = vunpack.c.h.bf16 %v3483
    %s3486 = scalar_lea.vmem %s51, 244
    %s3488 = sor.u32 255, 127
    %s3489 = sand.u32 %s3488, 85
    %s3490 = sshrl.u32 %s3489, 1
    %s3491 = sor.u32 %s3489, %s3490
    %s3492 = sand.u32 51, %s3491
    %s3493 = sshrl.u32 %s3492, 2
    %s3494 = sor.u32 %s3492, %s3493
    %s3495 = sand.u32 15, %s3494
    %v3496 = vld [vmem:[%s3486] sm:%s3495]
    %v3497 = vunpack.c.l.bf16 %v3496
    %v3498 = vunpack.c.h.bf16 %v3496
    %3499 = xla_tuple %v28, %v23
    %3500 = xla_tuple %3499
    %v3501 = vmax.f32 %v28, %v23
    %3502 = xla_tuple %v3501
    %3503 = xla_tuple %v3501, %v3497
    %3504 = xla_tuple %3503
    %v3505 = vmax.f32 %v3501, %v3497
    %3506 = xla_tuple %v3505
    %3507 = xla_tuple %v3505, %v13
    %3508 = xla_tuple %3507
    %v3509 = vmax.f32 %v3505, %v13
    %3510 = xla_tuple %v3509
    %s3511 = scalar_lea.vmem [#allocation22], 244
    %v3512 = vpack.c.bf16 0.0, %v3509
    %s3514 = ssub.s32 16, 1
    %3515 = vst [vmem:[%s3511] sm:%s3514] %v3512
    %s3516 = scalar_lea.vmem %s50, 248
    %s3518 = sand.u32 0, 85
    %s3519 = sshrl.u32 %s3518, 1
    %s3520 = sor.u32 %s3518, %s3519
    %s3521 = sand.u32 51, %s3520
    %s3522 = sshrl.u32 %s3521, 2
    %s3523 = sor.u32 %s3521, %s3522
    %s3524 = sand.u32 15, %s3523
    %v3525 = vld [vmem:[%s3516] sm:%s3524]
    %v3526 = vunpack.c.l.bf16 %v3525
    %v3527 = vunpack.c.h.bf16 %v3525
    %s3528 = scalar_lea.vmem %s51, 248
    %s3530 = sor.u32 255, 127
    %s3531 = sand.u32 %s3530, 85
    %s3532 = sshrl.u32 %s3531, 1
    %s3533 = sor.u32 %s3531, %s3532
    %s3534 = sand.u32 51, %s3533
    %s3535 = sshrl.u32 %s3534, 2
    %s3536 = sor.u32 %s3534, %s3535
    %s3537 = sand.u32 15, %s3536
    %v3538 = vld [vmem:[%s3528] sm:%s3537]
    %v3539 = vunpack.c.l.bf16 %v3538
    %v3540 = vunpack.c.h.bf16 %v3538
    %3541 = xla_tuple %v28, %v23
    %3542 = xla_tuple %3541
    %v3543 = vmax.f32 %v28, %v23
    %3544 = xla_tuple %v3543
    %3545 = xla_tuple %v3543, %v3539
    %3546 = xla_tuple %3545
    %v3547 = vmax.f32 %v3543, %v3539
    %3548 = xla_tuple %v3547
    %3549 = xla_tuple %v3547, %v13
    %3550 = xla_tuple %3549
    %v3551 = vmax.f32 %v3547, %v13
    %3552 = xla_tuple %v3551
    %s3553 = scalar_lea.vmem [#allocation22], 248
    %v3554 = vpack.c.bf16 0.0, %v3551
    %s3556 = ssub.s32 16, 1
    %3557 = vst [vmem:[%s3553] sm:%s3556] %v3554
    %s3558 = scalar_lea.vmem %s50, 252
    %s3560 = sand.u32 0, 85
    %s3561 = sshrl.u32 %s3560, 1
    %s3562 = sor.u32 %s3560, %s3561
    %s3563 = sand.u32 51, %s3562
    %s3564 = sshrl.u32 %s3563, 2
    %s3565 = sor.u32 %s3563, %s3564
    %s3566 = sand.u32 15, %s3565
    %v3567 = vld [vmem:[%s3558] sm:%s3566]
    %v3568 = vunpack.c.l.bf16 %v3567
    %v3569 = vunpack.c.h.bf16 %v3567
    %s3570 = scalar_lea.vmem %s51, 252
    %s3572 = sor.u32 255, 127
    %s3573 = sand.u32 %s3572, 85
    %s3574 = sshrl.u32 %s3573, 1
    %s3575 = sor.u32 %s3573, %s3574
    %s3576 = sand.u32 51, %s3575
    %s3577 = sshrl.u32 %s3576, 2
    %s3578 = sor.u32 %s3576, %s3577
    %s3579 = sand.u32 15, %s3578
    %v3580 = vld [vmem:[%s3570] sm:%s3579]
    %v3581 = vunpack.c.l.bf16 %v3580
    %v3582 = vunpack.c.h.bf16 %v3580
    %3583 = xla_tuple %v28, %v23
    %3584 = xla_tuple %3583
    %v3585 = vmax.f32 %v28, %v23
    %3586 = xla_tuple %v3585
    %3587 = xla_tuple %v3585, %v3581
    %3588 = xla_tuple %3587
    %v3589 = vmax.f32 %v3585, %v3581
    %3590 = xla_tuple %v3589
    %3591 = xla_tuple %v3589, %v13
    %3592 = xla_tuple %3591
    %v3593 = vmax.f32 %v3589, %v13
    %3594 = xla_tuple %v3593
    %s3595 = scalar_lea.vmem [#allocation22], 252
    %v3596 = vpack.c.bf16 0.0, %v3593
    %s3598 = ssub.s32 16, 1
    %3599 = vst [vmem:[%s3595] sm:%s3598] %v3596
    %s3600 = scalar_lea.vmem %s50, 256
    %s3602 = sand.u32 0, 85
    %s3603 = sshrl.u32 %s3602, 1
    %s3604 = sor.u32 %s3602, %s3603
    %s3605 = sand.u32 51, %s3604
    %s3606 = sshrl.u32 %s3605, 2
    %s3607 = sor.u32 %s3605, %s3606
    %s3608 = sand.u32 15, %s3607
    %v3609 = vld [vmem:[%s3600] sm:%s3608]
    %v3610 = vunpack.c.l.bf16 %v3609
    %v3611 = vunpack.c.h.bf16 %v3609
    %s3612 = scalar_lea.vmem %s51, 256
    %s3614 = sor.u32 255, 127
    %s3615 = sand.u32 %s3614, 85
    %s3616 = sshrl.u32 %s3615, 1
    %s3617 = sor.u32 %s3615, %s3616
    %s3618 = sand.u32 51, %s3617
    %s3619 = sshrl.u32 %s3618, 2
    %s3620 = sor.u32 %s3618, %s3619
    %s3621 = sand.u32 15, %s3620
    %v3622 = vld [vmem:[%s3612] sm:%s3621]
    %v3623 = vunpack.c.l.bf16 %v3622
    %v3624 = vunpack.c.h.bf16 %v3622
    %3625 = xla_tuple %v28, %v23
    %3626 = xla_tuple %3625
    %v3627 = vmax.f32 %v28, %v23
    %3628 = xla_tuple %v3627
    %3629 = xla_tuple %v3627, %v3623
    %3630 = xla_tuple %3629
    %v3631 = vmax.f32 %v3627, %v3623
    %3632 = xla_tuple %v3631
    %3633 = xla_tuple %v3631, %v13
    %3634 = xla_tuple %3633
    %v3635 = vmax.f32 %v3631, %v13
    %3636 = xla_tuple %v3635
    %s3637 = scalar_lea.vmem [#allocation22], 256
    %v3638 = vpack.c.bf16 0.0, %v3635
    %s3640 = ssub.s32 16, 1
    %3641 = vst [vmem:[%s3637] sm:%s3640] %v3638
    %s3642 = scalar_lea.vmem %s50, 260
    %s3644 = sand.u32 0, 85
    %s3645 = sshrl.u32 %s3644, 1
    %s3646 = sor.u32 %s3644, %s3645
    %s3647 = sand.u32 51, %s3646
    %s3648 = sshrl.u32 %s3647, 2
    %s3649 = sor.u32 %s3647, %s3648
    %s3650 = sand.u32 15, %s3649
    %v3651 = vld [vmem:[%s3642] sm:%s3650]
    %v3652 = vunpack.c.l.bf16 %v3651
    %v3653 = vunpack.c.h.bf16 %v3651
    %s3654 = scalar_lea.vmem %s51, 260
    %s3656 = sor.u32 255, 127
    %s3657 = sand.u32 %s3656, 85
    %s3658 = sshrl.u32 %s3657, 1
    %s3659 = sor.u32 %s3657, %s3658
    %s3660 = sand.u32 51, %s3659
    %s3661 = sshrl.u32 %s3660, 2
    %s3662 = sor.u32 %s3660, %s3661
    %s3663 = sand.u32 15, %s3662
    %v3664 = vld [vmem:[%s3654] sm:%s3663]
    %v3665 = vunpack.c.l.bf16 %v3664
    %v3666 = vunpack.c.h.bf16 %v3664
    %3667 = xla_tuple %v28, %v23
    %3668 = xla_tuple %3667
    %v3669 = vmax.f32 %v28, %v23
    %3670 = xla_tuple %v3669
    %3671 = xla_tuple %v3669, %v3665
    %3672 = xla_tuple %3671
    %v3673 = vmax.f32 %v3669, %v3665
    %3674 = xla_tuple %v3673
    %3675 = xla_tuple %v3673, %v13
    %3676 = xla_tuple %3675
    %v3677 = vmax.f32 %v3673, %v13
    %3678 = xla_tuple %v3677
    %s3679 = scalar_lea.vmem [#allocation22], 260
    %v3680 = vpack.c.bf16 0.0, %v3677
    %s3682 = ssub.s32 16, 1
    %3683 = vst [vmem:[%s3679] sm:%s3682] %v3680
    %s3684 = scalar_lea.vmem %s50, 264
    %s3686 = sand.u32 0, 85
    %s3687 = sshrl.u32 %s3686, 1
    %s3688 = sor.u32 %s3686, %s3687
    %s3689 = sand.u32 51, %s3688
    %s3690 = sshrl.u32 %s3689, 2
    %s3691 = sor.u32 %s3689, %s3690
    %s3692 = sand.u32 15, %s3691
    %v3693 = vld [vmem:[%s3684] sm:%s3692]
    %v3694 = vunpack.c.l.bf16 %v3693
    %v3695 = vunpack.c.h.bf16 %v3693
    %s3696 = scalar_lea.vmem %s51, 264
    %s3698 = sor.u32 255, 127
    %s3699 = sand.u32 %s3698, 85
    %s3700 = sshrl.u32 %s3699, 1
    %s3701 = sor.u32 %s3699, %s3700
    %s3702 = sand.u32 51, %s3701
    %s3703 = sshrl.u32 %s3702, 2
    %s3704 = sor.u32 %s3702, %s3703
    %s3705 = sand.u32 15, %s3704
    %v3706 = vld [vmem:[%s3696] sm:%s3705]
    %v3707 = vunpack.c.l.bf16 %v3706
    %v3708 = vunpack.c.h.bf16 %v3706
    %3709 = xla_tuple %v28, %v23
    %3710 = xla_tuple %3709
    %v3711 = vmax.f32 %v28, %v23
    %3712 = xla_tuple %v3711
    %3713 = xla_tuple %v3711, %v3707
    %3714 = xla_tuple %3713
    %v3715 = vmax.f32 %v3711, %v3707
    %3716 = xla_tuple %v3715
    %3717 = xla_tuple %v3715, %v13
    %3718 = xla_tuple %3717
    %v3719 = vmax.f32 %v3715, %v13
    %3720 = xla_tuple %v3719
    %s3721 = scalar_lea.vmem [#allocation22], 264
    %v3722 = vpack.c.bf16 0.0, %v3719
    %s3724 = ssub.s32 16, 1
    %3725 = vst [vmem:[%s3721] sm:%s3724] %v3722
    %s3726 = scalar_lea.vmem %s50, 268
    %s3728 = sand.u32 0, 85
    %s3729 = sshrl.u32 %s3728, 1
    %s3730 = sor.u32 %s3728, %s3729
    %s3731 = sand.u32 51, %s3730
    %s3732 = sshrl.u32 %s3731, 2
    %s3733 = sor.u32 %s3731, %s3732
    %s3734 = sand.u32 15, %s3733
    %v3735 = vld [vmem:[%s3726] sm:%s3734]
    %v3736 = vunpack.c.l.bf16 %v3735
    %v3737 = vunpack.c.h.bf16 %v3735
    %s3738 = scalar_lea.vmem %s51, 268
    %s3740 = sor.u32 255, 127
    %s3741 = sand.u32 %s3740, 85
    %s3742 = sshrl.u32 %s3741, 1
    %s3743 = sor.u32 %s3741, %s3742
    %s3744 = sand.u32 51, %s3743
    %s3745 = sshrl.u32 %s3744, 2
    %s3746 = sor.u32 %s3744, %s3745
    %s3747 = sand.u32 15, %s3746
    %v3748 = vld [vmem:[%s3738] sm:%s3747]
    %v3749 = vunpack.c.l.bf16 %v3748
    %v3750 = vunpack.c.h.bf16 %v3748
    %3751 = xla_tuple %v28, %v23
    %3752 = xla_tuple %3751
    %v3753 = vmax.f32 %v28, %v23
    %3754 = xla_tuple %v3753
    %3755 = xla_tuple %v3753, %v3749
    %3756 = xla_tuple %3755
    %v3757 = vmax.f32 %v3753, %v3749
    %3758 = xla_tuple %v3757
    %3759 = xla_tuple %v3757, %v13
    %3760 = xla_tuple %3759
    %v3761 = vmax.f32 %v3757, %v13
    %3762 = xla_tuple %v3761
    %s3763 = scalar_lea.vmem [#allocation22], 268
    %v3764 = vpack.c.bf16 0.0, %v3761
    %s3766 = ssub.s32 16, 1
    %3767 = vst [vmem:[%s3763] sm:%s3766] %v3764
    %s3768 = scalar_lea.vmem %s50, 272
    %s3770 = sand.u32 0, 85
    %s3771 = sshrl.u32 %s3770, 1
    %s3772 = sor.u32 %s3770, %s3771
    %s3773 = sand.u32 51, %s3772
    %s3774 = sshrl.u32 %s3773, 2
    %s3775 = sor.u32 %s3773, %s3774
    %s3776 = sand.u32 15, %s3775
    %v3777 = vld [vmem:[%s3768] sm:%s3776]
    %v3778 = vunpack.c.l.bf16 %v3777
    %v3779 = vunpack.c.h.bf16 %v3777
    %s3780 = scalar_lea.vmem %s51, 272
    %s3782 = sor.u32 255, 127
    %s3783 = sand.u32 %s3782, 85
    %s3784 = sshrl.u32 %s3783, 1
    %s3785 = sor.u32 %s3783, %s3784
    %s3786 = sand.u32 51, %s3785
    %s3787 = sshrl.u32 %s3786, 2
    %s3788 = sor.u32 %s3786, %s3787
    %s3789 = sand.u32 15, %s3788
    %v3790 = vld [vmem:[%s3780] sm:%s3789]
    %v3791 = vunpack.c.l.bf16 %v3790
    %v3792 = vunpack.c.h.bf16 %v3790
    %3793 = xla_tuple %v28, %v23
    %3794 = xla_tuple %3793
    %v3795 = vmax.f32 %v28, %v23
    %3796 = xla_tuple %v3795
    %3797 = xla_tuple %v3795, %v3791
    %3798 = xla_tuple %3797
    %v3799 = vmax.f32 %v3795, %v3791
    %3800 = xla_tuple %v3799
    %3801 = xla_tuple %v3799, %v13
    %3802 = xla_tuple %3801
    %v3803 = vmax.f32 %v3799, %v13
    %3804 = xla_tuple %v3803
    %s3805 = scalar_lea.vmem [#allocation22], 272
    %v3806 = vpack.c.bf16 0.0, %v3803
    %s3808 = ssub.s32 16, 1
    %3809 = vst [vmem:[%s3805] sm:%s3808] %v3806
    %s3810 = scalar_lea.vmem %s50, 276
    %s3812 = sand.u32 0, 85
    %s3813 = sshrl.u32 %s3812, 1
    %s3814 = sor.u32 %s3812, %s3813
    %s3815 = sand.u32 51, %s3814
    %s3816 = sshrl.u32 %s3815, 2
    %s3817 = sor.u32 %s3815, %s3816
    %s3818 = sand.u32 15, %s3817
    %v3819 = vld [vmem:[%s3810] sm:%s3818]
    %v3820 = vunpack.c.l.bf16 %v3819
    %v3821 = vunpack.c.h.bf16 %v3819
    %s3822 = scalar_lea.vmem %s51, 276
    %s3824 = sor.u32 255, 127
    %s3825 = sand.u32 %s3824, 85
    %s3826 = sshrl.u32 %s3825, 1
    %s3827 = sor.u32 %s3825, %s3826
    %s3828 = sand.u32 51, %s3827
    %s3829 = sshrl.u32 %s3828, 2
    %s3830 = sor.u32 %s3828, %s3829
    %s3831 = sand.u32 15, %s3830
    %v3832 = vld [vmem:[%s3822] sm:%s3831]
    %v3833 = vunpack.c.l.bf16 %v3832
    %v3834 = vunpack.c.h.bf16 %v3832
    %3835 = xla_tuple %v28, %v23
    %3836 = xla_tuple %3835
    %v3837 = vmax.f32 %v28, %v23
    %3838 = xla_tuple %v3837
    %3839 = xla_tuple %v3837, %v3833
    %3840 = xla_tuple %3839
    %v3841 = vmax.f32 %v3837, %v3833
    %3842 = xla_tuple %v3841
    %3843 = xla_tuple %v3841, %v13
    %3844 = xla_tuple %3843
    %v3845 = vmax.f32 %v3841, %v13
    %3846 = xla_tuple %v3845
    %s3847 = scalar_lea.vmem [#allocation22], 276
    %v3848 = vpack.c.bf16 0.0, %v3845
    %s3850 = ssub.s32 16, 1
    %3851 = vst [vmem:[%s3847] sm:%s3850] %v3848
    %s3852 = scalar_lea.vmem %s50, 280
    %s3854 = sand.u32 0, 85
    %s3855 = sshrl.u32 %s3854, 1
    %s3856 = sor.u32 %s3854, %s3855
    %s3857 = sand.u32 51, %s3856
    %s3858 = sshrl.u32 %s3857, 2
    %s3859 = sor.u32 %s3857, %s3858
    %s3860 = sand.u32 15, %s3859
    %v3861 = vld [vmem:[%s3852] sm:%s3860]
    %v3862 = vunpack.c.l.bf16 %v3861
    %v3863 = vunpack.c.h.bf16 %v3861
    %s3864 = scalar_lea.vmem %s51, 280
    %s3866 = sor.u32 255, 127
    %s3867 = sand.u32 %s3866, 85
    %s3868 = sshrl.u32 %s3867, 1
    %s3869 = sor.u32 %s3867, %s3868
    %s3870 = sand.u32 51, %s3869
    %s3871 = sshrl.u32 %s3870, 2
    %s3872 = sor.u32 %s3870, %s3871
    %s3873 = sand.u32 15, %s3872
    %v3874 = vld [vmem:[%s3864] sm:%s3873]
    %v3875 = vunpack.c.l.bf16 %v3874
    %v3876 = vunpack.c.h.bf16 %v3874
    %3877 = xla_tuple %v28, %v23
    %3878 = xla_tuple %3877
    %v3879 = vmax.f32 %v28, %v23
    %3880 = xla_tuple %v3879
    %3881 = xla_tuple %v3879, %v3875
    %3882 = xla_tuple %3881
    %v3883 = vmax.f32 %v3879, %v3875
    %3884 = xla_tuple %v3883
    %3885 = xla_tuple %v3883, %v13
    %3886 = xla_tuple %3885
    %v3887 = vmax.f32 %v3883, %v13
    %3888 = xla_tuple %v3887
    %s3889 = scalar_lea.vmem [#allocation22], 280
    %v3890 = vpack.c.bf16 0.0, %v3887
    %s3892 = ssub.s32 16, 1
    %3893 = vst [vmem:[%s3889] sm:%s3892] %v3890
    %s3894 = scalar_lea.vmem %s50, 284
    %s3896 = sand.u32 0, 85
    %s3897 = sshrl.u32 %s3896, 1
    %s3898 = sor.u32 %s3896, %s3897
    %s3899 = sand.u32 51, %s3898
    %s3900 = sshrl.u32 %s3899, 2
    %s3901 = sor.u32 %s3899, %s3900
    %s3902 = sand.u32 15, %s3901
    %v3903 = vld [vmem:[%s3894] sm:%s3902]
    %v3904 = vunpack.c.l.bf16 %v3903
    %v3905 = vunpack.c.h.bf16 %v3903
    %s3906 = scalar_lea.vmem %s51, 284
    %s3908 = sor.u32 255, 127
    %s3909 = sand.u32 %s3908, 85
    %s3910 = sshrl.u32 %s3909, 1
    %s3911 = sor.u32 %s3909, %s3910
    %s3912 = sand.u32 51, %s3911
    %s3913 = sshrl.u32 %s3912, 2
    %s3914 = sor.u32 %s3912, %s3913
    %s3915 = sand.u32 15, %s3914
    %v3916 = vld [vmem:[%s3906] sm:%s3915]
    %v3917 = vunpack.c.l.bf16 %v3916
    %v3918 = vunpack.c.h.bf16 %v3916
    %3919 = xla_tuple %v28, %v23
    %3920 = xla_tuple %3919
    %v3921 = vmax.f32 %v28, %v23
    %3922 = xla_tuple %v3921
    %3923 = xla_tuple %v3921, %v3917
    %3924 = xla_tuple %3923
    %v3925 = vmax.f32 %v3921, %v3917
    %3926 = xla_tuple %v3925
    %3927 = xla_tuple %v3925, %v13
    %3928 = xla_tuple %3927
    %v3929 = vmax.f32 %v3925, %v13
    %3930 = xla_tuple %v3929
    %s3931 = scalar_lea.vmem [#allocation22], 284
    %v3932 = vpack.c.bf16 0.0, %v3929
    %s3934 = ssub.s32 16, 1
    %3935 = vst [vmem:[%s3931] sm:%s3934] %v3932
    %s3936 = scalar_lea.vmem %s50, 288
    %v3937 = vld [vmem:[%s3936] sm:$0xf]
    %v3938 = vunpack.c.l.bf16 %v3937
    %v3939 = vunpack.c.h.bf16 %v3937
    %3940 = xla_tuple %v28, %v23
    %3941 = xla_tuple %3940
    %v3942 = vmax.f32 %v28, %v23
    %3943 = xla_tuple %v3942
    %3944 = xla_tuple %v3942, %v18
    %3945 = xla_tuple %3944
    %v3946 = vmax.f32 %v3942, %v18
    %3947 = xla_tuple %v3946
    %3948 = xla_tuple %v3946, %v3938
    %3949 = xla_tuple %3948
    %v3950 = vmax.f32 %v3946, %v3938
    %3951 = xla_tuple %v3950
    %s3952 = scalar_lea.vmem [#allocation22], 288
    %v3953 = vpack.c.bf16 0.0, %v3950
    %s3955 = ssub.s32 16, 1
    %3956 = vst [vmem:[%s3952] sm:%s3955] %v3953
    %s3957 = scalar_lea.vmem %s50, 292
    %v3958 = vld [vmem:[%s3957] sm:$0xf]
    %v3959 = vunpack.c.l.bf16 %v3958
    %v3960 = vunpack.c.h.bf16 %v3958
    %3961 = xla_tuple %v28, %v23
    %3962 = xla_tuple %3961
    %v3963 = vmax.f32 %v28, %v23
    %3964 = xla_tuple %v3963
    %3965 = xla_tuple %v3963, %v18
    %3966 = xla_tuple %3965
    %v3967 = vmax.f32 %v3963, %v18
    %3968 = xla_tuple %v3967
    %3969 = xla_tuple %v3967, %v3959
    %3970 = xla_tuple %3969
    %v3971 = vmax.f32 %v3967, %v3959
    %3972 = xla_tuple %v3971
    %s3973 = scalar_lea.vmem [#allocation22], 292
    %v3974 = vpack.c.bf16 0.0, %v3971
    %s3976 = ssub.s32 16, 1
    %3977 = vst [vmem:[%s3973] sm:%s3976] %v3974
    %s3978 = scalar_lea.vmem %s50, 296
    %v3979 = vld [vmem:[%s3978] sm:$0xf]
    %v3980 = vunpack.c.l.bf16 %v3979
    %v3981 = vunpack.c.h.bf16 %v3979
    %3982 = xla_tuple %v28, %v23
    %3983 = xla_tuple %3982
    %v3984 = vmax.f32 %v28, %v23
    %3985 = xla_tuple %v3984
    %3986 = xla_tuple %v3984, %v18
    %3987 = xla_tuple %3986
    %v3988 = vmax.f32 %v3984, %v18
    %3989 = xla_tuple %v3988
    %3990 = xla_tuple %v3988, %v3980
    %3991 = xla_tuple %3990
    %v3992 = vmax.f32 %v3988, %v3980
    %3993 = xla_tuple %v3992
    %s3994 = scalar_lea.vmem [#allocation22], 296
    %v3995 = vpack.c.bf16 0.0, %v3992
    %s3997 = ssub.s32 16, 1
    %3998 = vst [vmem:[%s3994] sm:%s3997] %v3995
    %s3999 = scalar_lea.vmem %s50, 300
    %v4000 = vld [vmem:[%s3999] sm:$0xf]
    %v4001 = vunpack.c.l.bf16 %v4000
    %v4002 = vunpack.c.h.bf16 %v4000
    %4003 = xla_tuple %v28, %v23
    %4004 = xla_tuple %4003
    %v4005 = vmax.f32 %v28, %v23
    %4006 = xla_tuple %v4005
    %4007 = xla_tuple %v4005, %v18
    %4008 = xla_tuple %4007
    %v4009 = vmax.f32 %v4005, %v18
    %4010 = xla_tuple %v4009
    %4011 = xla_tuple %v4009, %v4001
    %4012 = xla_tuple %4011
    %v4013 = vmax.f32 %v4009, %v4001
    %4014 = xla_tuple %v4013
    %s4015 = scalar_lea.vmem [#allocation22], 300
    %v4016 = vpack.c.bf16 0.0, %v4013
    %s4018 = ssub.s32 16, 1
    %4019 = vst [vmem:[%s4015] sm:%s4018] %v4016
    %s4020 = scalar_lea.vmem %s50, 304
    %v4021 = vld [vmem:[%s4020] sm:$0xf]
    %v4022 = vunpack.c.l.bf16 %v4021
    %v4023 = vunpack.c.h.bf16 %v4021
    %4024 = xla_tuple %v28, %v23
    %4025 = xla_tuple %4024
    %v4026 = vmax.f32 %v28, %v23
    %4027 = xla_tuple %v4026
    %4028 = xla_tuple %v4026, %v18
    %4029 = xla_tuple %4028
    %v4030 = vmax.f32 %v4026, %v18
    %4031 = xla_tuple %v4030
    %4032 = xla_tuple %v4030, %v4022
    %4033 = xla_tuple %4032
    %v4034 = vmax.f32 %v4030, %v4022
    %4035 = xla_tuple %v4034
    %s4036 = scalar_lea.vmem [#allocation22], 304
    %v4037 = vpack.c.bf16 0.0, %v4034
    %s4039 = ssub.s32 16, 1
    %4040 = vst [vmem:[%s4036] sm:%s4039] %v4037
    %s4041 = scalar_lea.vmem %s50, 308
    %v4042 = vld [vmem:[%s4041] sm:$0xf]
    %v4043 = vunpack.c.l.bf16 %v4042
    %v4044 = vunpack.c.h.bf16 %v4042
    %4045 = xla_tuple %v28, %v23
    %4046 = xla_tuple %4045
    %v4047 = vmax.f32 %v28, %v23
    %4048 = xla_tuple %v4047
    %4049 = xla_tuple %v4047, %v18
    %4050 = xla_tuple %4049
    %v4051 = vmax.f32 %v4047, %v18
    %4052 = xla_tuple %v4051
    %4053 = xla_tuple %v4051, %v4043
    %4054 = xla_tuple %4053
    %v4055 = vmax.f32 %v4051, %v4043
    %4056 = xla_tuple %v4055
    %s4057 = scalar_lea.vmem [#allocation22], 308
    %v4058 = vpack.c.bf16 0.0, %v4055
    %s4060 = ssub.s32 16, 1
    %4061 = vst [vmem:[%s4057] sm:%s4060] %v4058
    %s4062 = scalar_lea.vmem %s50, 312
    %v4063 = vld [vmem:[%s4062] sm:$0xf]
    %v4064 = vunpack.c.l.bf16 %v4063
    %v4065 = vunpack.c.h.bf16 %v4063
    %4066 = xla_tuple %v28, %v23
    %4067 = xla_tuple %4066
    %v4068 = vmax.f32 %v28, %v23
    %4069 = xla_tuple %v4068
    %4070 = xla_tuple %v4068, %v18
    %4071 = xla_tuple %4070
    %v4072 = vmax.f32 %v4068, %v18
    %4073 = xla_tuple %v4072
    %4074 = xla_tuple %v4072, %v4064
    %4075 = xla_tuple %4074
    %v4076 = vmax.f32 %v4072, %v4064
    %4077 = xla_tuple %v4076
    %s4078 = scalar_lea.vmem [#allocation22], 312
    %v4079 = vpack.c.bf16 0.0, %v4076
    %s4081 = ssub.s32 16, 1
    %4082 = vst [vmem:[%s4078] sm:%s4081] %v4079
    %s4083 = scalar_lea.vmem %s50, 316
    %v4084 = vld [vmem:[%s4083] sm:$0xf]
    %v4085 = vunpack.c.l.bf16 %v4084
    %v4086 = vunpack.c.h.bf16 %v4084
    %4087 = xla_tuple %v28, %v23
    %4088 = xla_tuple %4087
    %v4089 = vmax.f32 %v28, %v23
    %4090 = xla_tuple %v4089
    %4091 = xla_tuple %v4089, %v18
    %4092 = xla_tuple %4091
    %v4093 = vmax.f32 %v4089, %v18
    %4094 = xla_tuple %v4093
    %4095 = xla_tuple %v4093, %v4085
    %4096 = xla_tuple %4095
    %v4097 = vmax.f32 %v4093, %v4085
    %4098 = xla_tuple %v4097
    %s4099 = scalar_lea.vmem [#allocation22], 316
    %v4100 = vpack.c.bf16 0.0, %v4097
    %s4102 = ssub.s32 16, 1
    %4103 = vst [vmem:[%s4099] sm:%s4102] %v4100
    %s4104 = scalar_lea.vmem %s50, 320
    %v4105 = vld [vmem:[%s4104] sm:$0xf]
    %v4106 = vunpack.c.l.bf16 %v4105
    %v4107 = vunpack.c.h.bf16 %v4105
    %4108 = xla_tuple %v28, %v23
    %4109 = xla_tuple %4108
    %v4110 = vmax.f32 %v28, %v23
    %4111 = xla_tuple %v4110
    %4112 = xla_tuple %v4110, %v18
    %4113 = xla_tuple %4112
    %v4114 = vmax.f32 %v4110, %v18
    %4115 = xla_tuple %v4114
    %4116 = xla_tuple %v4114, %v4106
    %4117 = xla_tuple %4116
    %v4118 = vmax.f32 %v4114, %v4106
    %4119 = xla_tuple %v4118
    %s4120 = scalar_lea.vmem [#allocation22], 320
    %v4121 = vpack.c.bf16 0.0, %v4118
    %s4123 = ssub.s32 16, 1
    %4124 = vst [vmem:[%s4120] sm:%s4123] %v4121
    %s4125 = scalar_lea.vmem %s50, 324
    %v4126 = vld [vmem:[%s4125] sm:$0xf]
    %v4127 = vunpack.c.l.bf16 %v4126
    %v4128 = vunpack.c.h.bf16 %v4126
    %4129 = xla_tuple %v28, %v23
    %4130 = xla_tuple %4129
    %v4131 = vmax.f32 %v28, %v23
    %4132 = xla_tuple %v4131
    %4133 = xla_tuple %v4131, %v18
    %4134 = xla_tuple %4133
    %v4135 = vmax.f32 %v4131, %v18
    %4136 = xla_tuple %v4135
    %4137 = xla_tuple %v4135, %v4127
    %4138 = xla_tuple %4137
    %v4139 = vmax.f32 %v4135, %v4127
    %4140 = xla_tuple %v4139
    %s4141 = scalar_lea.vmem [#allocation22], 324
    %v4142 = vpack.c.bf16 0.0, %v4139
    %s4144 = ssub.s32 16, 1
    %4145 = vst [vmem:[%s4141] sm:%s4144] %v4142
    %s4146 = scalar_lea.vmem %s50, 328
    %v4147 = vld [vmem:[%s4146] sm:$0xf]
    %v4148 = vunpack.c.l.bf16 %v4147
    %v4149 = vunpack.c.h.bf16 %v4147
    %4150 = xla_tuple %v28, %v23
    %4151 = xla_tuple %4150
    %v4152 = vmax.f32 %v28, %v23
    %4153 = xla_tuple %v4152
    %4154 = xla_tuple %v4152, %v18
    %4155 = xla_tuple %4154
    %v4156 = vmax.f32 %v4152, %v18
    %4157 = xla_tuple %v4156
    %4158 = xla_tuple %v4156, %v4148
    %4159 = xla_tuple %4158
    %v4160 = vmax.f32 %v4156, %v4148
    %4161 = xla_tuple %v4160
    %s4162 = scalar_lea.vmem [#allocation22], 328
    %v4163 = vpack.c.bf16 0.0, %v4160
    %s4165 = ssub.s32 16, 1
    %4166 = vst [vmem:[%s4162] sm:%s4165] %v4163
    %s4167 = scalar_lea.vmem %s50, 332
    %v4168 = vld [vmem:[%s4167] sm:$0xf]
    %v4169 = vunpack.c.l.bf16 %v4168
    %v4170 = vunpack.c.h.bf16 %v4168
    %4171 = xla_tuple %v28, %v23
    %4172 = xla_tuple %4171
    %v4173 = vmax.f32 %v28, %v23
    %4174 = xla_tuple %v4173
    %4175 = xla_tuple %v4173, %v18
    %4176 = xla_tuple %4175
    %v4177 = vmax.f32 %v4173, %v18
    %4178 = xla_tuple %v4177
    %4179 = xla_tuple %v4177, %v4169
    %4180 = xla_tuple %4179
    %v4181 = vmax.f32 %v4177, %v4169
    %4182 = xla_tuple %v4181
    %s4183 = scalar_lea.vmem [#allocation22], 332
    %v4184 = vpack.c.bf16 0.0, %v4181
    %s4186 = ssub.s32 16, 1
    %4187 = vst [vmem:[%s4183] sm:%s4186] %v4184
    %s4188 = scalar_lea.vmem %s50, 336
    %v4189 = vld [vmem:[%s4188] sm:$0xf]
    %v4190 = vunpack.c.l.bf16 %v4189
    %v4191 = vunpack.c.h.bf16 %v4189
    %4192 = xla_tuple %v28, %v23
    %4193 = xla_tuple %4192
    %v4194 = vmax.f32 %v28, %v23
    %4195 = xla_tuple %v4194
    %4196 = xla_tuple %v4194, %v18
    %4197 = xla_tuple %4196
    %v4198 = vmax.f32 %v4194, %v18
    %4199 = xla_tuple %v4198
    %4200 = xla_tuple %v4198, %v4190
    %4201 = xla_tuple %4200
    %v4202 = vmax.f32 %v4198, %v4190
    %4203 = xla_tuple %v4202
    %s4204 = scalar_lea.vmem [#allocation22], 336
    %v4205 = vpack.c.bf16 0.0, %v4202
    %s4207 = ssub.s32 16, 1
    %4208 = vst [vmem:[%s4204] sm:%s4207] %v4205
    %s4209 = scalar_lea.vmem %s50, 340
    %v4210 = vld [vmem:[%s4209] sm:$0xf]
    %v4211 = vunpack.c.l.bf16 %v4210
    %v4212 = vunpack.c.h.bf16 %v4210
    %4213 = xla_tuple %v28, %v23
    %4214 = xla_tuple %4213
    %v4215 = vmax.f32 %v28, %v23
    %4216 = xla_tuple %v4215
    %4217 = xla_tuple %v4215, %v18
    %4218 = xla_tuple %4217
    %v4219 = vmax.f32 %v4215, %v18
    %4220 = xla_tuple %v4219
    %4221 = xla_tuple %v4219, %v4211
    %4222 = xla_tuple %4221
    %v4223 = vmax.f32 %v4219, %v4211
    %4224 = xla_tuple %v4223
    %s4225 = scalar_lea.vmem [#allocation22], 340
    %v4226 = vpack.c.bf16 0.0, %v4223
    %s4228 = ssub.s32 16, 1
    %4229 = vst [vmem:[%s4225] sm:%s4228] %v4226
    %s4230 = scalar_lea.vmem %s50, 344
    %v4231 = vld [vmem:[%s4230] sm:$0xf]
    %v4232 = vunpack.c.l.bf16 %v4231
    %v4233 = vunpack.c.h.bf16 %v4231
    %4234 = xla_tuple %v28, %v23
    %4235 = xla_tuple %4234
    %v4236 = vmax.f32 %v28, %v23
    %4237 = xla_tuple %v4236
    %4238 = xla_tuple %v4236, %v18
    %4239 = xla_tuple %4238
    %v4240 = vmax.f32 %v4236, %v18
    %4241 = xla_tuple %v4240
    %4242 = xla_tuple %v4240, %v4232
    %4243 = xla_tuple %4242
    %v4244 = vmax.f32 %v4240, %v4232
    %4245 = xla_tuple %v4244
    %s4246 = scalar_lea.vmem [#allocation22], 344
    %v4247 = vpack.c.bf16 0.0, %v4244
    %s4249 = ssub.s32 16, 1
    %4250 = vst [vmem:[%s4246] sm:%s4249] %v4247
    %s4251 = scalar_lea.vmem %s50, 348
    %v4252 = vld [vmem:[%s4251] sm:$0xf]
    %v4253 = vunpack.c.l.bf16 %v4252
    %v4254 = vunpack.c.h.bf16 %v4252
    %4255 = xla_tuple %v28, %v23
    %4256 = xla_tuple %4255
    %v4257 = vmax.f32 %v28, %v23
    %4258 = xla_tuple %v4257
    %4259 = xla_tuple %v4257, %v18
    %4260 = xla_tuple %4259
    %v4261 = vmax.f32 %v4257, %v18
    %4262 = xla_tuple %v4261
    %4263 = xla_tuple %v4261, %v4253
    %4264 = xla_tuple %4263
    %v4265 = vmax.f32 %v4261, %v4253
    %4266 = xla_tuple %v4265
    %s4267 = scalar_lea.vmem [#allocation22], 348
    %v4268 = vpack.c.bf16 0.0, %v4265
    %s4270 = ssub.s32 16, 1
    %4271 = vst [vmem:[%s4267] sm:%s4270] %v4268
    %s4272 = scalar_lea.vmem %s50, 352
    %v4273 = vld [vmem:[%s4272] sm:$0xf]
    %v4274 = vunpack.c.l.bf16 %v4273
    %v4275 = vunpack.c.h.bf16 %v4273
    %4276 = xla_tuple %v28, %v23
    %4277 = xla_tuple %4276
    %v4278 = vmax.f32 %v28, %v23
    %4279 = xla_tuple %v4278
    %4280 = xla_tuple %v4278, %v18
    %4281 = xla_tuple %4280
    %v4282 = vmax.f32 %v4278, %v18
    %4283 = xla_tuple %v4282
    %4284 = xla_tuple %v4282, %v4274
    %4285 = xla_tuple %4284
    %v4286 = vmax.f32 %v4282, %v4274
    %4287 = xla_tuple %v4286
    %s4288 = scalar_lea.vmem [#allocation22], 352
    %v4289 = vpack.c.bf16 0.0, %v4286
    %s4291 = ssub.s32 16, 1
    %4292 = vst [vmem:[%s4288] sm:%s4291] %v4289
    %s4293 = scalar_lea.vmem %s50, 356
    %v4294 = vld [vmem:[%s4293] sm:$0xf]
    %v4295 = vunpack.c.l.bf16 %v4294
    %v4296 = vunpack.c.h.bf16 %v4294
    %4297 = xla_tuple %v28, %v23
    %4298 = xla_tuple %4297
    %v4299 = vmax.f32 %v28, %v23
    %4300 = xla_tuple %v4299
    %4301 = xla_tuple %v4299, %v18
    %4302 = xla_tuple %4301
    %v4303 = vmax.f32 %v4299, %v18
    %4304 = xla_tuple %v4303
    %4305 = xla_tuple %v4303, %v4295
    %4306 = xla_tuple %4305
    %v4307 = vmax.f32 %v4303, %v4295
    %4308 = xla_tuple %v4307
    %s4309 = scalar_lea.vmem [#allocation22], 356
    %v4310 = vpack.c.bf16 0.0, %v4307
    %s4312 = ssub.s32 16, 1
    %4313 = vst [vmem:[%s4309] sm:%s4312] %v4310
    %s4314 = scalar_lea.vmem %s50, 360
    %v4315 = vld [vmem:[%s4314] sm:$0xf]
    %v4316 = vunpack.c.l.bf16 %v4315
    %v4317 = vunpack.c.h.bf16 %v4315
    %4318 = xla_tuple %v28, %v23
    %4319 = xla_tuple %4318
    %v4320 = vmax.f32 %v28, %v23
    %4321 = xla_tuple %v4320
    %4322 = xla_tuple %v4320, %v18
    %4323 = xla_tuple %4322
    %v4324 = vmax.f32 %v4320, %v18
    %4325 = xla_tuple %v4324
    %4326 = xla_tuple %v4324, %v4316
    %4327 = xla_tuple %4326
    %v4328 = vmax.f32 %v4324, %v4316
    %4329 = xla_tuple %v4328
    %s4330 = scalar_lea.vmem [#allocation22], 360
    %v4331 = vpack.c.bf16 0.0, %v4328
    %s4333 = ssub.s32 16, 1
    %4334 = vst [vmem:[%s4330] sm:%s4333] %v4331
    %s4335 = scalar_lea.vmem %s50, 364
    %v4336 = vld [vmem:[%s4335] sm:$0xf]
    %v4337 = vunpack.c.l.bf16 %v4336
    %v4338 = vunpack.c.h.bf16 %v4336
    %4339 = xla_tuple %v28, %v23
    %4340 = xla_tuple %4339
    %v4341 = vmax.f32 %v28, %v23
    %4342 = xla_tuple %v4341
    %4343 = xla_tuple %v4341, %v18
    %4344 = xla_tuple %4343
    %v4345 = vmax.f32 %v4341, %v18
    %4346 = xla_tuple %v4345
    %4347 = xla_tuple %v4345, %v4337
    %4348 = xla_tuple %4347
    %v4349 = vmax.f32 %v4345, %v4337
    %4350 = xla_tuple %v4349
    %s4351 = scalar_lea.vmem [#allocation22], 364
    %v4352 = vpack.c.bf16 0.0, %v4349
    %s4354 = ssub.s32 16, 1
    %4355 = vst [vmem:[%s4351] sm:%s4354] %v4352
    %s4356 = scalar_lea.vmem %s50, 368
    %v4357 = vld [vmem:[%s4356] sm:$0xf]
    %v4358 = vunpack.c.l.bf16 %v4357
    %v4359 = vunpack.c.h.bf16 %v4357
    %4360 = xla_tuple %v28, %v23
    %4361 = xla_tuple %4360
    %v4362 = vmax.f32 %v28, %v23
    %4363 = xla_tuple %v4362
    %4364 = xla_tuple %v4362, %v18
    %4365 = xla_tuple %4364
    %v4366 = vmax.f32 %v4362, %v18
    %4367 = xla_tuple %v4366
    %4368 = xla_tuple %v4366, %v4358
    %4369 = xla_tuple %4368
    %v4370 = vmax.f32 %v4366, %v4358
    %4371 = xla_tuple %v4370
    %s4372 = scalar_lea.vmem [#allocation22], 368
    %v4373 = vpack.c.bf16 0.0, %v4370
    %s4375 = ssub.s32 16, 1
    %4376 = vst [vmem:[%s4372] sm:%s4375] %v4373
    %s4377 = scalar_lea.vmem %s50, 372
    %v4378 = vld [vmem:[%s4377] sm:$0xf]
    %v4379 = vunpack.c.l.bf16 %v4378
    %v4380 = vunpack.c.h.bf16 %v4378
    %4381 = xla_tuple %v28, %v23
    %4382 = xla_tuple %4381
    %v4383 = vmax.f32 %v28, %v23
    %4384 = xla_tuple %v4383
    %4385 = xla_tuple %v4383, %v18
    %4386 = xla_tuple %4385
    %v4387 = vmax.f32 %v4383, %v18
    %4388 = xla_tuple %v4387
    %4389 = xla_tuple %v4387, %v4379
    %4390 = xla_tuple %4389
    %v4391 = vmax.f32 %v4387, %v4379
    %4392 = xla_tuple %v4391
    %s4393 = scalar_lea.vmem [#allocation22], 372
    %v4394 = vpack.c.bf16 0.0, %v4391
    %s4396 = ssub.s32 16, 1
    %4397 = vst [vmem:[%s4393] sm:%s4396] %v4394
    %s4398 = scalar_lea.vmem %s50, 376
    %v4399 = vld [vmem:[%s4398] sm:$0xf]
    %v4400 = vunpack.c.l.bf16 %v4399
    %v4401 = vunpack.c.h.bf16 %v4399
    %4402 = xla_tuple %v28, %v23
    %4403 = xla_tuple %4402
    %v4404 = vmax.f32 %v28, %v23
    %4405 = xla_tuple %v4404
    %4406 = xla_tuple %v4404, %v18
    %4407 = xla_tuple %4406
    %v4408 = vmax.f32 %v4404, %v18
    %4409 = xla_tuple %v4408
    %4410 = xla_tuple %v4408, %v4400
    %4411 = xla_tuple %4410
    %v4412 = vmax.f32 %v4408, %v4400
    %4413 = xla_tuple %v4412
    %s4414 = scalar_lea.vmem [#allocation22], 376
    %v4415 = vpack.c.bf16 0.0, %v4412
    %s4417 = ssub.s32 16, 1
    %4418 = vst [vmem:[%s4414] sm:%s4417] %v4415
    %s4419 = scalar_lea.vmem %s50, 380
    %v4420 = vld [vmem:[%s4419] sm:$0xf]
    %v4421 = vunpack.c.l.bf16 %v4420
    %v4422 = vunpack.c.h.bf16 %v4420
    %4423 = xla_tuple %v28, %v23
    %4424 = xla_tuple %4423
    %v4425 = vmax.f32 %v28, %v23
    %4426 = xla_tuple %v4425
    %4427 = xla_tuple %v4425, %v18
    %4428 = xla_tuple %4427
    %v4429 = vmax.f32 %v4425, %v18
    %4430 = xla_tuple %v4429
    %4431 = xla_tuple %v4429, %v4421
    %4432 = xla_tuple %4431
    %v4433 = vmax.f32 %v4429, %v4421
    %4434 = xla_tuple %v4433
    %s4435 = scalar_lea.vmem [#allocation22], 380
    %v4436 = vpack.c.bf16 0.0, %v4433
    %s4438 = ssub.s32 16, 1
    %4439 = vst [vmem:[%s4435] sm:%s4438] %v4436
    %v4441 = vld [vmem:[%s0] sm:$0xff]
    %v4442 = vld [vmem:[%s0 + $0x8] sm:$0xff]
    %v4443 = vld [vmem:[%s0 + $0x10] sm:$0xff]
    %v4444 = vld [vmem:[%s0 + $0x18] sm:$0xff]
    %v4445 = vld [vmem:[%s0 + $0x20] sm:$0xff]
    %v4446 = vld [vmem:[#allocation22] sm:$0xff]
    %v4447 = vld [vmem:[#allocation22 + $0x8] sm:$0xff]
    %v4448 = vld [vmem:[#allocation22 + $0x10] sm:$0xff]
    %v4449 = vld [vmem:[#allocation22 + $0x18] sm:$0xff]
    %v4450 = vld [vmem:[#allocation22 + $0x20] sm:$0xff]
    %v4451 = vld [vmem:[#allocation22 + $0x28] sm:$0xff]
    %v4452 = vld [vmem:[#allocation22 + $0x30] sm:$0xff]
    %v4453 = vld [vmem:[#allocation22 + $0x38] sm:$0xff]
    %v4454 = vld [vmem:[#allocation22 + $0x40] sm:$0xff]
    %v4455 = vld [vmem:[#allocation22 + $0x48] sm:$0xff]
    %v4456 = vld [vmem:[#allocation22 + $0x50] sm:$0xff]
    %v4457 = vld [vmem:[#allocation22 + $0x58] sm:$0xff]
    %v4458 = vld [vmem:[#allocation22 + $0x60] sm:$0xff]
    %v4459 = vld [vmem:[#allocation22 + $0x68] sm:$0xff]
    %v4460 = vld [vmem:[#allocation22 + $0x70] sm:$0xff]
    %v4461 = vld [vmem:[#allocation22 + $0x78] sm:$0xff]
    %v4462 = vld [vmem:[#allocation22 + $0x80] sm:$0xff]
    %v4463 = vld [vmem:[#allocation22 + $0x88] sm:$0xff]
    %v4464 = vld [vmem:[#allocation22 + $0x90] sm:$0xff]
    %v4465 = vld [vmem:[#allocation22 + $0x98] sm:$0xff]
    %v4466 = vld [vmem:[#allocation22 + $0xa0] sm:$0xff]
    %v4467 = vld [vmem:[#allocation22 + $0xa8] sm:$0xff]
    %v4468 = vld [vmem:[#allocation22 + $0xb0] sm:$0xff]
    %v4469 = vld [vmem:[#allocation22 + $0xb8] sm:$0xff]
    %v4470 = vld [vmem:[#allocation22 + $0xc0] sm:$0xff]
    %v4471 = vld [vmem:[#allocation22 + $0xc8] sm:$0xff]
    %v4472 = vld [vmem:[#allocation22 + $0xd0] sm:$0xff]
    %v4473 = vld [vmem:[#allocation22 + $0xd8] sm:$0xff]
    %v4474 = vld [vmem:[#allocation22 + $0xe0] sm:$0xff]
    %v4475 = vld [vmem:[#allocation22 + $0xe8] sm:$0xff]
    %v4476 = vld [vmem:[#allocation22 + $0xf0] sm:$0xff]
    %v4477 = vld [vmem:[#allocation22 + $0xf8] sm:$0xff]
    %v4478 = vld [vmem:[#allocation22 + $0x100] sm:$0xff]
    %v4479 = vld [vmem:[#allocation22 + $0x108] sm:$0xff]
    %v4480 = vld [vmem:[#allocation22 + $0x110] sm:$0xff]
    %v4481 = vld [vmem:[#allocation22 + $0x118] sm:$0xff]
    %v4482 = vld [vmem:[#allocation22 + $0x120] sm:$0xff]
    %v4483 = vld [vmem:[#allocation22 + $0x128] sm:$0xff]
    %v4484 = vld [vmem:[#allocation22 + $0x130] sm:$0xff]
    %v4485 = vld [vmem:[#allocation22 + $0x138] sm:$0xff]
    %v4486 = vld [vmem:[#allocation22 + $0x140] sm:$0xff]
    %v4487 = vld [vmem:[#allocation22 + $0x148] sm:$0xff]
    %v4488 = vld [vmem:[#allocation22 + $0x150] sm:$0xff]
    %v4489 = vld [vmem:[#allocation22 + $0x158] sm:$0xff]
    %v4490 = vld [vmem:[#allocation22 + $0x160] sm:$0xff]
    %v4491 = vld [vmem:[#allocation22 + $0x168] sm:$0xff]
    %v4492 = vld [vmem:[#allocation22 + $0x170] sm:$0xff]
    %v4493 = vld [vmem:[#allocation22 + $0x178] sm:$0xff]
    %v4494 = vld [vmem:[%s1] sm:$0xff]
    %v4495 = vld [vmem:[%s1 + $0x8] sm:$0xff]
    %v4496 = vld [vmem:[%s1 + $0x10] sm:$0xff]
    %v4497 = vld [vmem:[%s1 + $0x18] sm:$0xff]
    %v4498 = vld [vmem:[%s1 + $0x20] sm:$0xff]
    %4500 = vset.pattern.permute.xlu0 0
    %4501 = vperm.xlu0 %4500, %v4494
    %v4502 = vpop.permute.xlu0 %4501
    %4505 = vset.pattern.permute.xlu0 0
    %4506 = vperm.xlu0 %4505, %v4495
    %v4507 = vpop.permute.xlu0 %4506
    %4510 = vset.pattern.permute.xlu0 0
    %4511 = vperm.xlu0 %4510, %v4496
    %v4512 = vpop.permute.xlu0 %4511
    %4515 = vset.pattern.permute.xlu0 0
    %4516 = vperm.xlu0 %4515, %v4497
    %v4517 = vpop.permute.xlu0 %4516
    %4520 = vset.pattern.permute.xlu0 0
    %4521 = vperm.xlu0 %4520, %v4498
    %v4522 = vpop.permute.xlu0 %4521
    %v4529 = vunpack.c.l.b16 %v4441
    %v4530 = vunpack.c.h.b16 %v4441
    %v4531 = vunpack.c.l.b16 %v4442
    %v4532 = vunpack.c.h.b16 %v4442
    %v4533 = vunpack.c.l.b16 %v4443
    %v4534 = vunpack.c.h.b16 %v4443
    %v4535 = vunpack.c.l.b16 %v4444
    %v4536 = vunpack.c.h.b16 %v4444
    %v4537 = vunpack.c.l.b16 %v4445
    %v4538 = vunpack.c.h.b16 %v4445
    %v4539 = vpack.c.b16 %v4531, %v4529
    %v4540 = vpack.c.b16 %v4532, %v4530
    %v4541 = vpack.c.b16 %v4535, %v4533
    %v4542 = vpack.c.b16 %v4536, %v4534
    %v4543 = vpack.c.b16 %v4537, %v4537
    %v4544 = vpack.c.b16 %v4538, %v4538
    %v4596 = vunpack.c.l.b16 %v4446
    %v4597 = vunpack.c.h.b16 %v4446
    %v4598 = vunpack.c.l.b16 %v4447
    %v4599 = vunpack.c.h.b16 %v4447
    %v4600 = vunpack.c.l.b16 %v4448
    %v4601 = vunpack.c.h.b16 %v4448
    %v4602 = vunpack.c.l.b16 %v4449
    %v4603 = vunpack.c.h.b16 %v4449
    %v4604 = vunpack.c.l.b16 %v4450
    %v4605 = vunpack.c.h.b16 %v4450
    %v4606 = vunpack.c.l.b16 %v4451
    %v4607 = vunpack.c.h.b16 %v4451
    %v4608 = vunpack.c.l.b16 %v4452
    %v4609 = vunpack.c.h.b16 %v4452
    %v4610 = vunpack.c.l.b16 %v4453
    %v4611 = vunpack.c.h.b16 %v4453
    %v4612 = vunpack.c.l.b16 %v4454
    %v4613 = vunpack.c.h.b16 %v4454
    %v4614 = vunpack.c.l.b16 %v4455
    %v4615 = vunpack.c.h.b16 %v4455
    %v4616 = vunpack.c.l.b16 %v4456
    %v4617 = vunpack.c.h.b16 %v4456
    %v4618 = vunpack.c.l.b16 %v4457
    %v4619 = vunpack.c.h.b16 %v4457
    %v4620 = vunpack.c.l.b16 %v4458
    %v4621 = vunpack.c.h.b16 %v4458
    %v4622 = vunpack.c.l.b16 %v4459
    %v4623 = vunpack.c.h.b16 %v4459
    %v4624 = vunpack.c.l.b16 %v4460
    %v4625 = vunpack.c.h.b16 %v4460
    %v4626 = vunpack.c.l.b16 %v4461
    %v4627 = vunpack.c.h.b16 %v4461
    %v4628 = vunpack.c.l.b16 %v4462
    %v4629 = vunpack.c.h.b16 %v4462
    %v4630 = vunpack.c.l.b16 %v4463
    %v4631 = vunpack.c.h.b16 %v4463
    %v4632 = vunpack.c.l.b16 %v4464
    %v4633 = vunpack.c.h.b16 %v4464
    %v4634 = vunpack.c.l.b16 %v4465
    %v4635 = vunpack.c.h.b16 %v4465
    %v4636 = vunpack.c.l.b16 %v4466
    %v4637 = vunpack.c.h.b16 %v4466
    %v4638 = vunpack.c.l.b16 %v4467
    %v4639 = vunpack.c.h.b16 %v4467
    %v4640 = vunpack.c.l.b16 %v4468
    %v4641 = vunpack.c.h.b16 %v4468
    %v4642 = vunpack.c.l.b16 %v4469
    %v4643 = vunpack.c.h.b16 %v4469
    %v4644 = vunpack.c.l.b16 %v4470
    %v4645 = vunpack.c.h.b16 %v4470
    %v4646 = vunpack.c.l.b16 %v4471
    %v4647 = vunpack.c.h.b16 %v4471
    %v4648 = vunpack.c.l.b16 %v4472
    %v4649 = vunpack.c.h.b16 %v4472
    %v4650 = vunpack.c.l.b16 %v4473
    %v4651 = vunpack.c.h.b16 %v4473
    %v4652 = vunpack.c.l.b16 %v4474
    %v4653 = vunpack.c.h.b16 %v4474
    %v4654 = vunpack.c.l.b16 %v4475
    %v4655 = vunpack.c.h.b16 %v4475
    %v4656 = vunpack.c.l.b16 %v4476
    %v4657 = vunpack.c.h.b16 %v4476
    %v4658 = vunpack.c.l.b16 %v4477
    %v4659 = vunpack.c.h.b16 %v4477
    %v4660 = vunpack.c.l.b16 %v4478
    %v4661 = vunpack.c.h.b16 %v4478
    %v4662 = vunpack.c.l.b16 %v4479
    %v4663 = vunpack.c.h.b16 %v4479
    %v4664 = vunpack.c.l.b16 %v4480
    %v4665 = vunpack.c.h.b16 %v4480
    %v4666 = vunpack.c.l.b16 %v4481
    %v4667 = vunpack.c.h.b16 %v4481
    %v4668 = vunpack.c.l.b16 %v4482
    %v4669 = vunpack.c.h.b16 %v4482
    %v4670 = vunpack.c.l.b16 %v4483
    %v4671 = vunpack.c.h.b16 %v4483
    %v4672 = vunpack.c.l.b16 %v4484
    %v4673 = vunpack.c.h.b16 %v4484
    %v4674 = vunpack.c.l.b16 %v4485
    %v4675 = vunpack.c.h.b16 %v4485
    %v4676 = vunpack.c.l.b16 %v4486
    %v4677 = vunpack.c.h.b16 %v4486
    %v4678 = vunpack.c.l.b16 %v4487
    %v4679 = vunpack.c.h.b16 %v4487
    %v4680 = vunpack.c.l.b16 %v4488
    %v4681 = vunpack.c.h.b16 %v4488
    %v4682 = vunpack.c.l.b16 %v4489
    %v4683 = vunpack.c.h.b16 %v4489
    %v4684 = vunpack.c.l.b16 %v4490
    %v4685 = vunpack.c.h.b16 %v4490
    %v4686 = vunpack.c.l.b16 %v4491
    %v4687 = vunpack.c.h.b16 %v4491
    %v4688 = vunpack.c.l.b16 %v4492
    %v4689 = vunpack.c.h.b16 %v4492
    %v4690 = vunpack.c.l.b16 %v4493
    %v4691 = vunpack.c.h.b16 %v4493
    %v4692 = vpack.c.b16 %v4600, %v4596
    %v4693 = vpack.c.b16 %v4601, %v4597
    %v4694 = vpack.c.b16 %v4602, %v4598
    %v4695 = vpack.c.b16 %v4603, %v4599
    %v4696 = vpack.c.b16 %v4608, %v4604
    %v4697 = vpack.c.b16 %v4609, %v4605
    %v4698 = vpack.c.b16 %v4610, %v4606
    %v4699 = vpack.c.b16 %v4611, %v4607
    %v4700 = vpack.c.b16 %v4616, %v4612
    %v4701 = vpack.c.b16 %v4617, %v4613
    %v4702 = vpack.c.b16 %v4618, %v4614
    %v4703 = vpack.c.b16 %v4619, %v4615
    %v4704 = vpack.c.b16 %v4624, %v4620
    %v4705 = vpack.c.b16 %v4625, %v4621
    %v4706 = vpack.c.b16 %v4626, %v4622
    %v4707 = vpack.c.b16 %v4627, %v4623
    %v4708 = vpack.c.b16 %v4632, %v4628
    %v4709 = vpack.c.b16 %v4633, %v4629
    %v4710 = vpack.c.b16 %v4634, %v4630
    %v4711 = vpack.c.b16 %v4635, %v4631
    %v4712 = vpack.c.b16 %v4640, %v4636
    %v4713 = vpack.c.b16 %v4641, %v4637
    %v4714 = vpack.c.b16 %v4642, %v4638
    %v4715 = vpack.c.b16 %v4643, %v4639
    %v4716 = vpack.c.b16 %v4648, %v4644
    %v4717 = vpack.c.b16 %v4649, %v4645
    %v4718 = vpack.c.b16 %v4650, %v4646
    %v4719 = vpack.c.b16 %v4651, %v4647
    %v4720 = vpack.c.b16 %v4656, %v4652
    %v4721 = vpack.c.b16 %v4657, %v4653
    %v4722 = vpack.c.b16 %v4658, %v4654
    %v4723 = vpack.c.b16 %v4659, %v4655
    %v4724 = vpack.c.b16 %v4664, %v4660
    %v4725 = vpack.c.b16 %v4665, %v4661
    %v4726 = vpack.c.b16 %v4666, %v4662
    %v4727 = vpack.c.b16 %v4667, %v4663
    %v4728 = vpack.c.b16 %v4672, %v4668
    %v4729 = vpack.c.b16 %v4673, %v4669
    %v4730 = vpack.c.b16 %v4674, %v4670
    %v4731 = vpack.c.b16 %v4675, %v4671
    %v4732 = vpack.c.b16 %v4680, %v4676
    %v4733 = vpack.c.b16 %v4681, %v4677
    %v4734 = vpack.c.b16 %v4682, %v4678
    %v4735 = vpack.c.b16 %v4683, %v4679
    %v4736 = vpack.c.b16 %v4688, %v4684
    %v4737 = vpack.c.b16 %v4689, %v4685
    %v4738 = vpack.c.b16 %v4690, %v4686
    %v4739 = vpack.c.b16 %v4691, %v4687
    %vm4788 = vcmask 523264
    %v4790 = vsel %vm4788, %v4540, 0
    %v4793 = vsel %vm4788, %v4542, 0
    %v4796 = vsel %vm4788, %v4544, 0
    %4798 = vmatprep.subr.bf16.mxu0 %v4721
    %4799 = vmatpush1.bf16.msra.mxu0 %v4720
    %4800 = vmatprep.subr.bf16.mxu0 %v4717
    %4801 = vmatpush1.bf16.msra.mxu0 %v4716
    %4802 = vmatprep.subr.bf16.mxu0 %v4713
    %4803 = vmatpush1.bf16.msra.mxu0 %v4712
    %4804 = vmatprep.subr.bf16.mxu0 %v4709
    %4805 = vmatpush1.bf16.msra.mxu0 %v4708
    %4806 = vmatprep.subr.bf16.mxu0 %v4705
    %4807 = vmatpush1.bf16.msra.mxu0 %v4704
    %4808 = vmatprep.subr.bf16.mxu0 %v4701
    %4809 = vmatpush1.bf16.msra.mxu0 %v4700
    %4810 = vmatprep.subr.bf16.mxu0 %v4697
    %4811 = vmatpush1.bf16.msra.mxu0 %v4696
    %4812 = vmatprep.subr.bf16.mxu0 %v4693
    %4813 = vmatpush1.bf16.msra.mxu0 %v4692
    %4814 = vmatprep.subr.bf16.mxu0 0
    %4815 = vmatpush2.bf16.msra.mxu0 0
    %4816 = vmatprep.subr.bf16.mxu0 0
    %4817 = vmatpush2.bf16.msra.mxu0 0
    %4818 = vmatprep.subr.bf16.mxu0 0
    %4819 = vmatpush2.bf16.msra.mxu0 0
    %4820 = vmatprep.subr.bf16.mxu0 0
    %4821 = vmatpush2.bf16.msra.mxu0 0
    %4822 = vmatprep.subr.bf16.mxu0 %v4737
    %4823 = vmatpush2.bf16.msra.mxu0 %v4736
    %4824 = vmatprep.subr.bf16.mxu0 %v4733
    %4825 = vmatpush2.bf16.msra.mxu0 %v4732
    %4826 = vmatprep.subr.bf16.mxu0 %v4729
    %4827 = vmatpush2.bf16.msra.mxu0 %v4728
    %4828 = vmatprep.subr.bf16.mxu0 %v4725
    %4829 = vmatpush2.bf16.msra.mxu0 %v4724
    %4830 = vmatprep.mubr.bf16.mxu0 %v4790
    %4831 = vmatmul.mubr.bf16.gmra.mxu0 %v4539
    %v4832 = vpop.f32.mrf.mxu0
    %v4833 = vadd.f32 %v4502, %v4832
    %v4834 = vpop.f32.mrf.mxu0
    %v4835 = vadd.f32 %v4502, %v4834
    %v4836 = vpop.f32.mrf.mxu0
    %v4837 = vadd.f32 %v4507, %v4836
    %v4838 = vpop.f32.mrf.mxu0
    %v4839 = vadd.f32 %v4507, %v4838
    %4840 = vmatprep.mubr.bf16.mxu0 %v4793
    %4841 = vmatmul.mubr.bf16.gmra.mxu0 %v4541
    %v4842 = vpop.f32.mrf.mxu0
    %v4843 = vadd.f32 %v4512, %v4842
    %v4844 = vpop.f32.mrf.mxu0
    %v4845 = vadd.f32 %v4512, %v4844
    %v4846 = vpop.f32.mrf.mxu0
    %v4847 = vadd.f32 %v4517, %v4846
    %v4848 = vpop.f32.mrf.mxu0
    %v4849 = vadd.f32 %v4517, %v4848
    %4850 = vmatprep.mubr.bf16.mxu0 %v4796
    %4851 = vmatmul.mubr.bf16.gmra.mxu0 %v4543
    %v4852 = vpop.f32.mrf.mxu0
    %v4853 = vadd.f32 %v4522, %v4852
    %v4854 = vpop.f32.mrf.mxu0
    %v4855 = vadd.f32 %v4522, %v4854
    %v4856 = vpop.f32.mrf.mxu0
    %v4857 = vpop.f32.mrf.mxu0
    %4858 = vdwg.mxu0
    %4859 = vmatprep.subr.bf16.mxu0 %v4723
    %4860 = vmatpush1.bf16.msra.mxu0 %v4722
    %4861 = vmatprep.subr.bf16.mxu0 %v4719
    %4862 = vmatpush1.bf16.msra.mxu0 %v4718
    %4863 = vmatprep.subr.bf16.mxu0 %v4715
    %4864 = vmatpush1.bf16.msra.mxu0 %v4714
    %4865 = vmatprep.subr.bf16.mxu0 %v4711
    %4866 = vmatpush1.bf16.msra.mxu0 %v4710
    %4867 = vmatprep.subr.bf16.mxu0 %v4707
    %4868 = vmatpush1.bf16.msra.mxu0 %v4706
    %4869 = vmatprep.subr.bf16.mxu0 %v4703
    %4870 = vmatpush1.bf16.msra.mxu0 %v4702
    %4871 = vmatprep.subr.bf16.mxu0 %v4699
    %4872 = vmatpush1.bf16.msra.mxu0 %v4698
    %4873 = vmatprep.subr.bf16.mxu0 %v4695
    %4874 = vmatpush1.bf16.msra.mxu0 %v4694
    %4875 = vmatprep.subr.bf16.mxu0 0
    %4876 = vmatpush2.bf16.msra.mxu0 0
    %4877 = vmatprep.subr.bf16.mxu0 0
    %4878 = vmatpush2.bf16.msra.mxu0 0
    %4879 = vmatprep.subr.bf16.mxu0 0
    %4880 = vmatpush2.bf16.msra.mxu0 0
    %4881 = vmatprep.subr.bf16.mxu0 0
    %4882 = vmatpush2.bf16.msra.mxu0 0
    %4883 = vmatprep.subr.bf16.mxu0 %v4739
    %4884 = vmatpush2.bf16.msra.mxu0 %v4738
    %4885 = vmatprep.subr.bf16.mxu0 %v4735
    %4886 = vmatpush2.bf16.msra.mxu0 %v4734
    %4887 = vmatprep.subr.bf16.mxu0 %v4731
    %4888 = vmatpush2.bf16.msra.mxu0 %v4730
    %4889 = vmatprep.subr.bf16.mxu0 %v4727
    %4890 = vmatpush2.bf16.msra.mxu0 %v4726
    %4891 = vmatprep.mubr.bf16.mxu0 %v4790
    %4892 = vmatmul.mubr.bf16.gmra.mxu0 %v4539
    %v4893 = vpop.f32.mrf.mxu0
    %v4894 = vadd.f32 %v4502, %v4893
    %v4895 = vpop.f32.mrf.mxu0
    %v4896 = vadd.f32 %v4502, %v4895
    %v4897 = vpop.f32.mrf.mxu0
    %v4898 = vadd.f32 %v4507, %v4897
    %v4899 = vpop.f32.mrf.mxu0
    %v4900 = vadd.f32 %v4507, %v4899
    %4901 = vmatprep.mubr.bf16.mxu0 %v4793
    %4902 = vmatmul.mubr.bf16.gmra.mxu0 %v4541
    %v4903 = vpop.f32.mrf.mxu0
    %v4904 = vadd.f32 %v4512, %v4903
    %v4905 = vpop.f32.mrf.mxu0
    %v4906 = vadd.f32 %v4512, %v4905
    %v4907 = vpop.f32.mrf.mxu0
    %v4908 = vadd.f32 %v4517, %v4907
    %v4909 = vpop.f32.mrf.mxu0
    %v4910 = vadd.f32 %v4517, %v4909
    %4911 = vmatprep.mubr.bf16.mxu0 %v4796
    %4912 = vmatmul.mubr.bf16.gmra.mxu0 %v4543
    %v4913 = vpop.f32.mrf.mxu0
    %v4914 = vadd.f32 %v4522, %v4913
    %v4915 = vpop.f32.mrf.mxu0
    %v4916 = vadd.f32 %v4522, %v4915
    %v4917 = vpop.f32.mrf.mxu0
    %v4918 = vpop.f32.mrf.mxu0
    %4919 = vdwg.mxu0
    %4920 = vst [vmem:[%s7] sm:$0xff] %v4833
    %4921 = vst [vmem:[%s7 + $0x8] sm:$0xff] %v4835
    %4922 = vst [vmem:[%s7 + $0x10] sm:$0xff] %v4894
    %4923 = vst [vmem:[%s7 + $0x18] sm:$0xff] %v4896
    %4924 = vst [vmem:[%s7 + $0x20] sm:$0xff] %v4837
    %4925 = vst [vmem:[%s7 + $0x28] sm:$0xff] %v4839
    %4926 = vst [vmem:[%s7 + $0x30] sm:$0xff] %v4898
    %4927 = vst [vmem:[%s7 + $0x38] sm:$0xff] %v4900
    %4928 = vst [vmem:[%s7 + $0x40] sm:$0xff] %v4843
    %4929 = vst [vmem:[%s7 + $0x48] sm:$0xff] %v4845
    %4930 = vst [vmem:[%s7 + $0x50] sm:$0xff] %v4904
    %4931 = vst [vmem:[%s7 + $0x58] sm:$0xff] %v4906
    %4932 = vst [vmem:[%s7 + $0x60] sm:$0xff] %v4847
    %4933 = vst [vmem:[%s7 + $0x68] sm:$0xff] %v4849
    %4934 = vst [vmem:[%s7 + $0x70] sm:$0xff] %v4908
    %4935 = vst [vmem:[%s7 + $0x78] sm:$0xff] %v4910
    %4936 = vst [vmem:[%s7 + $0x80] sm:$0xff] %v4853
    %4937 = vst [vmem:[%s7 + $0x88] sm:$0xff] %v4855
    %4938 = vst [vmem:[%s7 + $0x90] sm:$0xff] %v4914
    %4939 = vst [vmem:[%s7 + $0x98] sm:$0xff] %v4916
    // Predicated region
    $region26: #{conv_transpose2d_forward.2} parent=1 // pred_check
      _
    $region27: #{conv_transpose2d_forward.2} parent=1 // pred_check_branch
      %4941 = sbr.rel (0) target = $region29
    $region28: #{conv_transpose2d_forward.2} parent=1 // pred_region
      _
    $region29: #{conv_transpose2d_forward.2} parent=1 // pred_fallthru
      _
    // Predicated region
    $region30: #{conv_transpose2d_forward.2} parent=1 // pred_check
      _
    $region31: #{conv_transpose2d_forward.2} parent=1 // pred_check_branch
      %4943 = sbr.rel (0) target = $region33
    $region32: #{conv_transpose2d_forward.2} parent=1 // pred_region
      _
    $region33: #{conv_transpose2d_forward.2} parent=1 // pred_fallthru
      _

</llo_original>
